<compile_context>
chip_gen: v5e
topology: v5e:2x2
jax: 0.10.0
libtpu: 0.0.40
codegen_flags: <defaults>
</compile_context>

<pallas_src>
import functools

import jax
import jax.numpy as jnp
from jax import lax
from jax.experimental import pallas as pl
from jax.experimental.pallas import tpu as pltpu


_VMEM_LIMIT = 32 * 1024 * 1024   # sized so double-buffered tiles fit v7x (64 MiB phys)


def _row_tile(m, target=512):
    """Largest multiple of 8 that divides m and is <= target (else m itself)."""
    if m <= target:
        return m
    t = (target // 8) * 8
    for cand in range(t, 0, -8):
        if m % cand == 0:
            return cand
    return m


# ----------------------------- Pallas kernels -----------------------------

def _pw_bn_act_kernel(x_ref, w_ref, scale_ref, bias_ref, o_ref, *, act):
    # x: (TM, Cin) bf16, w: (Cin, Cout) bf16, scale/bias: (1, Cout) f32
    y = jnp.dot(x_ref[...], w_ref[...], preferred_element_type=jnp.float32)
    y = y * scale_ref[...] + bias_ref[...]
    if act == "swish":
        y = y * jax.nn.sigmoid(y)
    elif act == "relu":
        y = jnp.maximum(y, 0.0)
    o_ref[...] = y


def _dw_bn_swish_pool_kernel(xp_ref, w_ref, scale_ref, bias_ref,
                             o_ref, pool_ref, *, kmax, stride, th, wo):
    # xp: (1, Hp, Wp, C) padded activation (resident per batch across H tiles)
    # w : (kmax*kmax, 1, C) depthwise taps (zero-padded per MixConv chunk)
    # o : (1, th, Wo, C) output tile, pool: (1, 1, 1, C) partial pool sums
    h = pl.program_id(1)
    row0 = h * (th * stride)
    if (th * stride) % 8 == 0:
        row0 = pl.multiple_of(row0, 8)
    c = o_ref.shape[-1]
    acc = jnp.zeros((th, wo, c), jnp.float32)
    # TODO(synk): the dx offsets shift the sublane (W) axis; pltpu.roll-based
    # shifting would move this work to the XLU slot.
    for dy in range(kmax):
        for dx in range(kmax):
            if stride == 1:
                patch = xp_ref[0, pl.ds(row0 + dy, th), pl.ds(dx, wo), :]
            else:
                patch = xp_ref[0, pl.ds(row0 + dy, th, stride=stride),
                               pl.ds(dx, wo, stride=stride), :]
            acc = acc + patch * w_ref[dy * kmax + dx]
    y = acc * scale_ref[...] + bias_ref[...]
    y = y * jax.nn.sigmoid(y)                         # Swish
    o_ref[0] = y
    # fused SE global-average-pool: per-(batch, h-tile) partial sums
    psum = jnp.sum(y, axis=(0, 1), keepdims=True)     # (1, 1, C)
    pool_ref[...] = psum[None]


def _pw_gate_bn_kernel(x_ref, g_ref, w_ref, scale_ref, bias_ref, o_ref):
    # x: (1, TP, C) bf16, g: (1, 1, C) bf16, w: (C, Cout) bf16
    xg = x_ref[0] * g_ref[0]
    y = jnp.dot(xg, w_ref[...], preferred_element_type=jnp.float32)
    o_ref[0] = y * scale_ref[...] + bias_ref[...]


def _pw_gate_bn_res_kernel(x_ref, g_ref, w_ref, scale_ref, bias_ref,
                           res_ref, o_ref):
    xg = x_ref[0] * g_ref[0]
    y = jnp.dot(xg, w_ref[...], preferred_element_type=jnp.float32)
    y = y * scale_ref[...] + bias_ref[...]
    o_ref[0] = y + res_ref[0]


# ----------------------------- kernel wrappers -----------------------------

def _pw_bn_act(x2d, w, scale, bias, act):
    M, Cin = x2d.shape
    Cout = w.shape[1]
    tm = _row_tile(M)
    kern = functools.partial(_pw_bn_act_kernel, act=act)
    return pl.pallas_call(
        kern,
        out_shape=jax.ShapeDtypeStruct((M, Cout), jnp.float32),
        grid=(M // tm,),
        in_specs=[pl.BlockSpec((tm, Cin), lambda i: (i, 0)),
                  pl.BlockSpec((Cin, Cout), lambda i: (0, 0)),
                  pl.BlockSpec((1, Cout), lambda i: (0, 0)),
                  pl.BlockSpec((1, Cout), lambda i: (0, 0))],
        out_specs=pl.BlockSpec((tm, Cout), lambda i: (i, 0)),
        compiler_params=pltpu.CompilerParams(
            dimension_semantics=("parallel",),
            vmem_limit_bytes=_VMEM_LIMIT),
    )(x2d.astype(jnp.bfloat16), w.astype(jnp.bfloat16), scale, bias)


def _dw_bn_swish_pool(x_nhwc, w_kkc, scale, bias, kmax, stride):
    # Fused MixConv (all chunks at once) + BN + Swish + SE-pool partial sums.
    N, H, W, C = x_nhwc.shape
    p = kmax // 2
    Ho = (H + 2 * p - kmax) // stride + 1
    Wo = (W + 2 * p - kmax) // stride + 1
    if Ho <= 8:
        th = Ho
    else:
        th = max(d for d in range(1, 9) if Ho % d == 0)
    nh = Ho // th
    # TODO(synk): halo handling via in-kernel masking would avoid this extra
    # wrapper-level pad pass; it is done once for all chunks here.
    xp = jnp.pad(x_nhwc, ((0, 0), (p, p), (p, p), (0, 0)))
    Hp, Wp = H + 2 * p, W + 2 * p
    w_r = w_kkc.reshape(kmax * kmax, 1, C)
    kern = functools.partial(_dw_bn_swish_pool_kernel,
                             kmax=kmax, stride=stride, th=th, wo=Wo)
    y2, pool = pl.pallas_call(
        kern,
        out_shape=(jax.ShapeDtypeStruct((N, Ho, Wo, C), jnp.float32),
                   jax.ShapeDtypeStruct((N, nh, 1, C), jnp.float32)),
        grid=(N, nh),
        in_specs=[pl.BlockSpec((1, Hp, Wp, C), lambda n, h: (n, 0, 0, 0)),
                  pl.BlockSpec((kmax * kmax, 1, C), lambda n, h: (0, 0, 0)),
                  pl.BlockSpec((1, C), lambda n, h: (0, 0)),
                  pl.BlockSpec((1, C), lambda n, h: (0, 0))],
        out_specs=[pl.BlockSpec((1, th, Wo, C), lambda n, h: (n, h, 0, 0)),
                   pl.BlockSpec((1, 1, 1, C), lambda n, h: (n, h, 0, 0))],
        compiler_params=pltpu.CompilerParams(
            dimension_semantics=("parallel", "parallel"),
            vmem_limit_bytes=_VMEM_LIMIT),
    )(xp, w_r, scale, bias)
    pooled_mean = jnp.sum(pool[:, :, 0, :], axis=1) / float(Ho * Wo)   # (N, C)
    return y2, pooled_mean


def _se_gate(pooled_mean, w1, b1, w2, b2):
    # Tiny (N, width) 2-layer MLP: cheaper in plain JAX than a kernel launch.
    z = pooled_mean @ w1 + b1
    z = z * jax.nn.sigmoid(z)          # Swish
    z = z @ w2 + b2
    return jax.nn.sigmoid(z)           # (N, width) gate


def _pw_gate_bn(y2_3d, gate, w, scale, bias, res=None):
    # y2: (N, P, C) f32, gate: (N, C), w: (C, Cout), res: (N, P, Cout) or None
    N, P, C = y2_3d.shape
    Cout = w.shape[1]
    tp = _row_tile(P)
    x_bf = y2_3d.astype(jnp.bfloat16)
    g_bf = gate.reshape(N, 1, C).astype(jnp.bfloat16)
    w_bf = w.astype(jnp.bfloat16)

    in_specs = [pl.BlockSpec((1, tp, C), lambda n, m: (n, m, 0)),
                pl.BlockSpec((1, 1, C), lambda n, m: (n, 0, 0)),
                pl.BlockSpec((C, Cout), lambda n, m: (0, 0)),
                pl.BlockSpec((1, Cout), lambda n, m: (0, 0)),
                pl.BlockSpec((1, Cout), lambda n, m: (0, 0))]
    args = [x_bf, g_bf, w_bf, scale, bias]
    if res is not None:
        in_specs.append(pl.BlockSpec((1, tp, Cout), lambda n, m: (n, m, 0)))
        args.append(res)
        kern = _pw_gate_bn_res_kernel
    else:
        kern = _pw_gate_bn_kernel

    return pl.pallas_call(
        kern,
        out_shape=jax.ShapeDtypeStruct((N, P, Cout), jnp.float32),
        grid=(N, P // tp),
        in_specs=in_specs,
        out_specs=pl.BlockSpec((1, tp, Cout), lambda n, m: (n, m, 0)),
        compiler_params=pltpu.CompilerParams(
            dimension_semantics=("parallel", "parallel"),
            vmem_limit_bytes=_VMEM_LIMIT),
    )(*args)


# ----------------------------- forward pass -----------------------------

def inverted_residual_forward(x_nchw, params, cfg):
    # TODO(synk): grouped 1x1 convs (groups != (1,1)) and training-mode
    # BatchNorm batch statistics are not implemented (BN runs in eval mode).
    in_c, out_c = cfg["in_channels"], cfg["out_channels"]
    ks = cfg["kernel_sizes"]
    stride = cfg["stride"]
    expansion = cfg["expansion"]
    use_se = cfg["use_se"]

    N, C, H, W = x_nchw.shape
    assert C == in_c
    x = jnp.transpose(x_nchw, (0, 2, 3, 1)).astype(jnp.float32)   # NHWC
    width = in_c * expansion

    # conv1: 1x1 + BN + Swish (Identity when expansion == 1)
    if expansion != 1:
        y1 = _pw_bn_act(x.reshape(N * H * W, in_c), params["w1"],
                        params["bn1_scale"], params["bn1_bias"],
                        "swish").reshape(N, H, W, width)
    else:
        y1 = x

    # conv2: MixConv depthwise + BN + Swish, all chunks fused into one
    # lane-dense kernel (taps zero-padded to the max kernel size); fused SE pool.
    ks_list = list(ks) if isinstance(ks, (list, tuple)) else [ks]
    assert all(k % 2 == 1 for k in ks_list), "only odd kernel sizes supported"
    n_chunks = len(ks_list)
    assert width % n_chunks == 0
    kmax = max(ks_list)
    cc = width // n_chunks
    w_dw = jnp.zeros((kmax, kmax, width), jnp.float32)
    for i, k in enumerate(ks_list):
        off = (kmax - k) // 2
        w_dw = w_dw.at[off:off + k, off:off + k,
                       i * cc:(i + 1) * cc].set(params["w_dw"][i])
    y2, pooled = _dw_bn_swish_pool(y1, w_dw, params["bn2_scale"],
                                   params["bn2_bias"], kmax, stride)
    Ho, Wo = y2.shape[1], y2.shape[2]

    # SE gate (tiny per-batch MLP); applied fused inside conv3.
    if use_se:
        gate = _se_gate(pooled, params["se_w1"], params["se_b1"],
                        params["se_w2"], params["se_b2"])
    else:
        gate = jnp.ones((N, width), jnp.float32)

    # conv3: (SE gate) * 1x1 + BN, plus residual when shapes match
    residual = (out_c == in_c and stride == 1 and Ho == H and Wo == W)
    res = x.reshape(N, H * W, in_c) if residual else None
    y3 = _pw_gate_bn(y2.reshape(N, Ho * Wo, width), gate, params["w3"],
                     params["bn3_scale"], params["bn3_bias"], res)
    return jnp.transpose(y3.reshape(N, Ho, Wo, out_c), (0, 3, 1, 2))   # NCHW


# ----------------------------- pure-JAX reference -----------------------------

def reference_forward(x_nchw, params, cfg):
    in_c, out_c = cfg["in_channels"], cfg["out_channels"]
    ks_list = list(cfg["kernel_sizes"])
    stride, expansion = cfg["stride"], cfg["expansion"]
    x = jnp.transpose(x_nchw, (0, 2, 3, 1)).astype(jnp.float32)
    width = in_c * expansion

    def swish(v):
        return v * jax.nn.sigmoid(v)

    if expansion != 1:
        y = jnp.einsum('nhwc,co->nhwo', x, params["w1"])
        y = swish(y * params["bn1_scale"][0] + params["bn1_bias"][0])
    else:
        y = x

    cc = width // len(ks_list)
    chunks = []
    for i, k in enumerate(ks_list):
        p = k // 2
        xi = y[..., i * cc:(i + 1) * cc]
        w = params["w_dw"][i].reshape(k, k, 1, cc)
        ci = lax.conv_general_dilated(
            xi, w, (stride, stride), [(p, p), (p, p)],
            dimension_numbers=('NHWC', 'HWIO', 'NHWC'), feature_group_count=cc)
        chunks.append(ci)
    y2 = jnp.concatenate(chunks, axis=-1)
    y2 = swish(y2 * params["bn2_scale"][0] + params["bn2_bias"][0])

    if cfg["use_se"]:
        pooled = jnp.mean(y2, axis=(1, 2))                       # (N, width)
        z = swish(pooled @ params["se_w1"] + params["se_b1"][0])
        z = z @ params["se_w2"] + params["se_b2"][0]
        y2 = y2 * jax.nn.sigmoid(z)[:, None, None, :]

    y3 = jnp.einsum('nhwc,co->nhwo', y2, params["w3"])
    y3 = y3 * params["bn3_scale"][0] + params["bn3_bias"][0]
    out = jnp.transpose(y3, (0, 3, 1, 2))
    if out.shape == x_nchw.shape:
        out = out + x_nchw
    return out


# ----------------------------- parameter init -----------------------------

def init_params(key, cfg):
    in_c, out_c = cfg["in_channels"], cfg["out_channels"]
    ks_list = list(cfg["kernel_sizes"])
    width = in_c * cfg["expansion"]
    mid = int(in_c / cfg["se_reduction"])
    cc = width // len(ks_list)

    keys = iter(jax.random.split(key, 32))

    def rnd(shape, s=0.25):
        return (s * jax.random.normal(next(keys), shape)).astype(jnp.float32)

    def bn(c, eps=1e-5):
        gamma = 1.0 + 0.1 * jax.random.normal(next(keys), (c,))
        beta = 0.1 * jax.random.normal(next(keys), (c,))
        mean = 0.1 * jax.random.normal(next(keys), (c,))
        var = jnp.abs(jax.random.normal(next(keys), (c,))) + 0.5
        scale = (gamma / jnp.sqrt(var + eps)).astype(jnp.float32)
        bias = (beta - mean * scale).astype(jnp.float32)
        return scale.reshape(1, c), bias.reshape(1, c)

    p = {}
    p["w1"] = rnd((in_c, width))                       # conv1 1x1 (bias folded into BN)
    p["bn1_scale"], p["bn1_bias"] = bn(width)
    p["w_dw"] = [rnd((k, k, cc)) for k in ks_list]     # depthwise taps per chunk
    p["bn2_scale"], p["bn2_bias"] = bn(width)
    p["se_w1"], p["se_b1"] = rnd((width, mid)), rnd((1, mid))
    p["se_w2"], p["se_b2"] = rnd((mid, width)), rnd((1, width))
    p["w3"] = rnd((width, out_c))                      # conv3 1x1
    p["bn3_scale"], p["bn3_bias"] = bn(out_c)
    return p


# ----------------------------- main -----------------------------

if __name__ == "__main__":
    cfg = dict(in_channels=8, out_channels=8, kernel_sizes=[3, 5], stride=1,
               expansion=2, use_se=True, se_reduction=4)

    key = jax.random.PRNGKey(0)
    k_x, k_p = jax.random.split(key)
    x = jax.random.normal(k_x, (2, cfg["in_channels"], 16, 16), jnp.float32)  # NCHW
    params = init_params(k_p, cfg)

    fwd = jax.jit(lambda xx, pp: inverted_residual_forward(xx, pp, cfg))
    out = jax.block_until_ready(fwd(x, params))

    ref = jax.block_until_ready(reference_forward(x, params, cfg))
    assert out.shape == ref.shape == x.shape
    # bf16 MXU operands (per v6e/v7x perf guidance) -> mixed abs/rel tolerance
    max_err = float(jnp.max(jnp.abs(out - ref)))
    tol = float(5e-2 + 1e-2 * jnp.max(jnp.abs(ref)))
    assert max_err < tol, f"mismatch vs reference: {max_err} (tol {tol})"

    print("KERNEL_OK")
</pallas_src>

<mosaic_0001>
module attributes {stable_mosaic.version = 11 : i64} {
  func.func @_pw_bn_act_kernel(%arg0: i32, %arg1: memref<512x8xbf16, #tpu.memory_space<vmem>>, %arg2: memref<8x16xbf16, #tpu.memory_space<vmem>>, %arg3: memref<1x16xf32, #tpu.memory_space<vmem>>, %arg4: memref<1x16xf32, #tpu.memory_space<vmem>>, %arg5: memref<512x16xf32, #tpu.memory_space<vmem>>) attributes {dimension_semantics = [#tpu.dimension_semantics<parallel>], iteration_bounds = array<i64: 1>, scalar_prefetch = 0 : i64, scratch_operands = 0 : i64, tpu.core_type = #tpu.core_type<tc>, window_params = [{transform_indices = @transform_0, window_bounds = array<i64: 512, 8>}, {pipeline_mode = #tpu.pipeline_mode<synchronous>, transform_indices = @transform_1, window_bounds = array<i64: 8, 16>}, {pipeline_mode = #tpu.pipeline_mode<synchronous>, transform_indices = @transform_2, window_bounds = array<i64: 1, 16>}, {pipeline_mode = #tpu.pipeline_mode<synchronous>, transform_indices = @transform_3, window_bounds = array<i64: 1, 16>}, {transform_indices = @transform_4, window_bounds = array<i64: 512, 16>}]} {
    %c0 = arith.constant 0 : index
    %c0_0 = arith.constant 0 : index
    %0 = vector.load %arg1[%c0, %c0_0] : memref<512x8xbf16, #tpu.memory_space<vmem>>, vector<512x8xbf16>
    %c0_1 = arith.constant 0 : index
    %c0_2 = arith.constant 0 : index
    %1 = vector.load %arg2[%c0_1, %c0_2] : memref<8x16xbf16, #tpu.memory_space<vmem>>, vector<8x16xbf16>
    %cst = arith.constant dense<0.000000e+00> : vector<512x16xf32>
    %2 = tpu.matmul %0, %1, %cst {dimension_numbers = #tpu.dot_dimension_numbers<[1], [0], [0], [1], [0, 0, 1, 1], [], []>} : vector<512x8xbf16>, vector<8x16xbf16>, vector<512x16xf32> -> vector<512x16xf32>
    %c0_3 = arith.constant 0 : index
    %c0_4 = arith.constant 0 : index
    %3 = vector.load %arg3[%c0_3, %c0_4] : memref<1x16xf32, #tpu.memory_space<vmem>>, vector<1x16xf32>
    %4 = vector.broadcast %3 : vector<1x16xf32> to vector<512x16xf32>
    %5 = arith.mulf %2, %4 : vector<512x16xf32>
    %c0_5 = arith.constant 0 : index
    %c0_6 = arith.constant 0 : index
    %6 = vector.load %arg4[%c0_5, %c0_6] : memref<1x16xf32, #tpu.memory_space<vmem>>, vector<1x16xf32>
    %7 = vector.broadcast %6 : vector<1x16xf32> to vector<512x16xf32>
    %8 = arith.addf %5, %7 : vector<512x16xf32>
    %9 = arith.negf %8 : vector<512x16xf32>
    %10 = math.exp %9 : vector<512x16xf32>
    %cst_7 = arith.constant 1.000000e+00 : f32
    %11 = vector.broadcast %cst_7 : f32 to vector<512x16xf32>
    %12 = arith.addf %11, %10 : vector<512x16xf32>
    %13 = arith.divf %11, %12 : vector<512x16xf32>
    %14 = arith.mulf %8, %13 : vector<512x16xf32>
    %c0_8 = arith.constant 0 : index
    %c0_9 = arith.constant 0 : index
    %15 = vector.load %arg5[%c0_8, %c0_9] : memref<512x16xf32, #tpu.memory_space<vmem>>, vector<512x16xf32>
    tpu.vector_store %arg5[%c0_8, %c0_9], %14 {strides = array<i32>} : memref<512x16xf32, #tpu.memory_space<vmem>>, vector<512x16xf32>,
    return
  }
  func.func @transform_0(%arg0: i32) -> (i32, i32) {
    %c0_i32 = arith.constant 0 : i32
    %c0_i32_0 = arith.constant 0 : i32
    return %arg0, %c0_i32 : i32, i32
  }
  func.func @transform_1(%arg0: i32) -> (i32, i32) {
    %c0_i32 = arith.constant 0 : i32
    %c0_i32_0 = arith.constant 0 : i32
    %c0_i32_1 = arith.constant 0 : i32
    return %c0_i32, %c0_i32_0 : i32, i32
  }
  func.func @transform_2(%arg0: i32) -> (i32, i32) {
    %c0_i32 = arith.constant 0 : i32
    %c0_i32_0 = arith.constant 0 : i32
    %c0_i32_1 = arith.constant 0 : i32
    return %c0_i32, %c0_i32_0 : i32, i32
  }
  func.func @transform_3(%arg0: i32) -> (i32, i32) {
    %c0_i32 = arith.constant 0 : i32
    %c0_i32_0 = arith.constant 0 : i32
    %c0_i32_1 = arith.constant 0 : i32
    return %c0_i32, %c0_i32_0 : i32, i32
  }
  func.func @transform_4(%arg0: i32) -> (i32, i32) {
    %c0_i32 = arith.constant 0 : i32
    %c0_i32_0 = arith.constant 0 : i32
    return %arg0, %c0_i32 : i32, i32
  }
}

module attributes {stable_mosaic.version = 11 : i64} {
  func.func @_dw_bn_swish_pool_kernel(%arg0: i32, %arg1: i32, %arg2: memref<1x20x20x16xf32, #tpu.memory_space<vmem>>, %arg3: memref<25x1x16xf32, #tpu.memory_space<vmem>>, %arg4: memref<1x16xf32, #tpu.memory_space<vmem>>, %arg5: memref<1x16xf32, #tpu.memory_space<vmem>>, %arg6: memref<1x8x16x16xf32, #tpu.memory_space<vmem>>, %arg7: memref<1x1x1x16xf32, #tpu.memory_space<vmem>>) attributes {dimension_semantics = [#tpu.dimension_semantics<parallel>, #tpu.dimension_semantics<parallel>], iteration_bounds = array<i64: 2, 2>, scalar_prefetch = 0 : i64, scratch_operands = 0 : i64, tpu.core_type = #tpu.core_type<tc>, window_params = [{transform_indices = @transform_0, window_bounds = array<i64: 1, 20, 20, 16>}, {pipeline_mode = #tpu.pipeline_mode<synchronous>, transform_indices = @transform_1, window_bounds = array<i64: 25, 1, 16>}, {pipeline_mode = #tpu.pipeline_mode<synchronous>, transform_indices = @transform_2, window_bounds = array<i64: 1, 16>}, {pipeline_mode = #tpu.pipeline_mode<synchronous>, transform_indices = @transform_3, window_bounds = array<i64: 1, 16>}, {transform_indices = @transform_4, window_bounds = array<i64: 1, 8, 16, 16>}, {transform_indices = @transform_5, window_bounds = array<i64: 1, 1, 1, 16>}]} {
    %c8_i32 = arith.constant 8 : i32
    %0 = arith.muli %arg1, %c8_i32 : i32
    %1 = tpu.assume_multiple %0, 8 : i32
    %cst = arith.constant 0.000000e+00 : f32
    %2 = vector.broadcast %cst : f32 to vector<8x16x16xf32>
    %c0_i32 = arith.constant 0 : i32
    %3 = arith.addi %1, %c0_i32 : i32
    %c0 = arith.constant 0 : index
    %4 = arith.index_cast %3 : i32 to index
    %c0_0 = arith.constant 0 : index
    %c0_1 = arith.constant 0 : index
    %5 = vector.load %arg2[%c0, %4, %c0_0, %c0_1] : memref<1x20x20x16xf32, #tpu.memory_space<vmem>>, vector<1x8x16x16xf32>
    %6 = vector.shape_cast %5 : vector<1x8x16x16xf32> to vector<8x16x16xf32>
    %c0_2 = arith.constant 0 : index
    %c0_3 = arith.constant 0 : index
    %c0_4 = arith.constant 0 : index
    %7 = vector.load %arg3[%c0_2, %c0_3, %c0_4] : memref<25x1x16xf32, #tpu.memory_space<vmem>>, vector<1x1x16xf32>
    %8 = vector.shape_cast %7 : vector<1x1x16xf32> to vector<1x16xf32>
    %9 = vector.shape_cast %8 : vector<1x16xf32> to vector<1x1x16xf32>
    %10 = vector.broadcast %9 : vector<1x1x16xf32> to vector<8x16x16xf32>
    %11 = arith.mulf %6, %10 : vector<8x16x16xf32>
    %12 = arith.addf %2, %11 : vector<8x16x16xf32>
    %c0_i32_5 = arith.constant 0 : i32
    %13 = arith.addi %1, %c0_i32_5 : i32
    %c0_6 = arith.constant 0 : index
    %14 = arith.index_cast %13 : i32 to index
    %c1 = arith.constant 1 : index
    %c0_7 = arith.constant 0 : index
    %15 = vector.load %arg2[%c0_6, %14, %c1, %c0_7] : memref<1x20x20x16xf32, #tpu.memory_space<vmem>>, vector<1x8x16x16xf32>
    %16 = vector.shape_cast %15 : vector<1x8x16x16xf32> to vector<8x16x16xf32>
    %c1_8 = arith.constant 1 : index
    %c0_9 = arith.constant 0 : index
    %c0_10 = arith.constant 0 : index
    %17 = vector.load %arg3[%c1_8, %c0_9, %c0_10] : memref<25x1x16xf32, #tpu.memory_space<vmem>>, vector<1x1x16xf32>
    %18 = vector.shape_cast %17 : vector<1x1x16xf32> to vector<1x16xf32>
    %19 = vector.shape_cast %18 : vector<1x16xf32> to vector<1x1x16xf32>
    %20 = vector.broadcast %19 : vector<1x1x16xf32> to vector<8x16x16xf32>
    %21 = arith.mulf %16, %20 : vector<8x16x16xf32>
    %22 = arith.addf %12, %21 : vector<8x16x16xf32>
    %c0_i32_11 = arith.constant 0 : i32
    %23 = arith.addi %1, %c0_i32_11 : i32
    %c0_12 = arith.constant 0 : index
    %24 = arith.index_cast %23 : i32 to index
    %c2 = arith.constant 2 : index
    %c0_13 = arith.constant 0 : index
    %25 = vector.load %arg2[%c0_12, %24, %c2, %c0_13] : memref<1x20x20x16xf32, #tpu.memory_space<vmem>>, vector<1x8x16x16xf32>
    %26 = vector.shape_cast %25 : vector<1x8x16x16xf32> to vector<8x16x16xf32>
    %c2_14 = arith.constant 2 : index
    %c0_15 = arith.constant 0 : index
    %c0_16 = arith.constant 0 : index
    %27 = vector.load %arg3[%c2_14, %c0_15, %c0_16] : memref<25x1x16xf32, #tpu.memory_space<vmem>>, vector<1x1x16xf32>
    %28 = vector.shape_cast %27 : vector<1x1x16xf32> to vector<1x16xf32>
    %29 = vector.shape_cast %28 : vector<1x16xf32> to vector<1x1x16xf32>
    %30 = vector.broadcast %29 : vector<1x1x16xf32> to vector<8x16x16xf32>
    %31 = arith.mulf %26, %30 : vector<8x16x16xf32>
    %32 = arith.addf %22, %31 : vector<8x16x16xf32>
    %c0_i32_17 = arith.constant 0 : i32
    %33 = arith.addi %1, %c0_i32_17 : i32
    %c0_18 = arith.constant 0 : index
    %34 = arith.index_cast %33 : i32 to index
    %c3 = arith.constant 3 : index
    %c0_19 = arith.constant 0 : index
    %35 = vector.load %arg2[%c0_18, %34, %c3, %c0_19] : memref<1x20x20x16xf32, #tpu.memory_space<vmem>>, vector<1x8x16x16xf32>
    %36 = vector.shape_cast %35 : vector<1x8x16x16xf32> to vector<8x16x16xf32>
    %c3_20 = arith.constant 3 : index
    %c0_21 = arith.constant 0 : index
    %c0_22 = arith.constant 0 : index
    %37 = vector.load %arg3[%c3_20, %c0_21, %c0_22] : memref<25x1x16xf32, #tpu.memory_space<vmem>>, vector<1x1x16xf32>
    %38 = vector.shape_cast %37 : vector<1x1x16xf32> to vector<1x16xf32>
    %39 = vector.shape_cast %38 : vector<1x16xf32> to vector<1x1x16xf32>
    %40 = vector.broadcast %39 : vector<1x1x16xf32> to vector<8x16x16xf32>
    %41 = arith.mulf %36, %40 : vector<8x16x16xf32>
    %42 = arith.addf %32, %41 : vector<8x16x16xf32>
    %c0_i32_23 = arith.constant 0 : i32
    %43 = arith.addi %1, %c0_i32_23 : i32
    %c0_24 = arith.constant 0 : index
    %44 = arith.index_cast %43 : i32 to index
    %c4 = arith.constant 4 : index
    %c0_25 = arith.constant 0 : index
    %45 = vector.load %arg2[%c0_24, %44, %c4, %c0_25] : memref<1x20x20x16xf32, #tpu.memory_space<vmem>>, vector<1x8x16x16xf32>
    %46 = vector.shape_cast %45 : vector<1x8x16x16xf32> to vector<8x16x16xf32>
    %c4_26 = arith.constant 4 : index
    %c0_27 = arith.constant 0 : index
    %c0_28 = arith.constant 0 : index
    %47 = vector.load %arg3[%c4_26, %c0_27, %c0_28] : memref<25x1x16xf32, #tpu.memory_space<vmem>>, vector<1x1x16xf32>
    %48 = vector.shape_cast %47 : vector<1x1x16xf32> to vector<1x16xf32>
    %49 = vector.shape_cast %48 : vector<1x16xf32> to vector<1x1x16xf32>
    %50 = vector.broadcast %49 : vector<1x1x16xf32> to vector<8x16x16xf32>
    %51 = arith.mulf %46, %50 : vector<8x16x16xf32>
    %52 = arith.addf %42, %51 : vector<8x16x16xf32>
    %c1_i32 = arith.constant 1 : i32
    %53 = arith.addi %1, %c1_i32 : i32
    %c0_29 = arith.constant 0 : index
    %54 = arith.index_cast %53 : i32 to index
    %c0_30 = arith.constant 0 : index
    %c0_31 = arith.constant 0 : index
    %55 = vector.load %arg2[%c0_29, %54, %c0_30, %c0_31] : memref<1x20x20x16xf32, #tpu.memory_space<vmem>>, vector<1x8x16x16xf32>
    %56 = vector.shape_cast %55 : vector<1x8x16x16xf32> to vector<8x16x16xf32>
    %c5 = arith.constant 5 : index
    %c0_32 = arith.constant 0 : index
    %c0_33 = arith.constant 0 : index
    %57 = vector.load %arg3[%c5, %c0_32, %c0_33] : memref<25x1x16xf32, #tpu.memory_space<vmem>>, vector<1x1x16xf32>
    %58 = vector.shape_cast %57 : vector<1x1x16xf32> to vector<1x16xf32>
    %59 = vector.shape_cast %58 : vector<1x16xf32> to vector<1x1x16xf32>
    %60 = vector.broadcast %59 : vector<1x1x16xf32> to vector<8x16x16xf32>
    %61 = arith.mulf %56, %60 : vector<8x16x16xf32>
    %62 = arith.addf %52, %61 : vector<8x16x16xf32>
    %c1_i32_34 = arith.constant 1 : i32
    %63 = arith.addi %1, %c1_i32_34 : i32
    %c0_35 = arith.constant 0 : index
    %64 = arith.index_cast %63 : i32 to index
    %c1_36 = arith.constant 1 : index
    %c0_37 = arith.constant 0 : index
    %65 = vector.load %arg2[%c0_35, %64, %c1_36, %c0_37] : memref<1x20x20x16xf32, #tpu.memory_space<vmem>>, vector<1x8x16x16xf32>
    %66 = vector.shape_cast %65 : vector<1x8x16x16xf32> to vector<8x16x16xf32>
    %c6 = arith.constant 6 : index
    %c0_38 = arith.constant 0 : index
    %c0_39 = arith.constant 0 : index
    %67 = vector.load %arg3[%c6, %c0_38, %c0_39] : memref<25x1x16xf32, #tpu.memory_space<vmem>>, vector<1x1x16xf32>
    %68 = vector.shape_cast %67 : vector<1x1x16xf32> to vector<1x16xf32>
    %69 = vector.shape_cast %68 : vector<1x16xf32> to vector<1x1x16xf32>
    %70 = vector.broadcast %69 : vector<1x1x16xf32> to vector<8x16x16xf32>
    %71 = arith.mulf %66, %70 : vector<8x16x16xf32>
    %72 = arith.addf %62, %71 : vector<8x16x16xf32>
    %c1_i32_40 = arith.constant 1 : i32
    %73 = arith.addi %1, %c1_i32_40 : i32
    %c0_41 = arith.constant 0 : index
    %74 = arith.index_cast %73 : i32 to index
    %c2_42 = arith.constant 2 : index
    %c0_43 = arith.constant 0 : index
    %75 = vector.load %arg2[%c0_41, %74, %c2_42, %c0_43] : memref<1x20x20x16xf32, #tpu.memory_space<vmem>>, vector<1x8x16x16xf32>
    %76 = vector.shape_cast %75 : vector<1x8x16x16xf32> to vector<8x16x16xf32>
    %c7 = arith.constant 7 : index
    %c0_44 = arith.constant 0 : index
    %c0_45 = arith.constant 0 : index
    %77 = vector.load %arg3[%c7, %c0_44, %c0_45] : memref<25x1x16xf32, #tpu.memory_space<vmem>>, vector<1x1x16xf32>
    %78 = vector.shape_cast %77 : vector<1x1x16xf32> to vector<1x16xf32>
    %79 = vector.shape_cast %78 : vector<1x16xf32> to vector<1x1x16xf32>
    %80 = vector.broadcast %79 : vector<1x1x16xf32> to vector<8x16x16xf32>
    %81 = arith.mulf %76, %80 : vector<8x16x16xf32>
    %82 = arith.addf %72, %81 : vector<8x16x16xf32>
    %c1_i32_46 = arith.constant 1 : i32
    %83 = arith.addi %1, %c1_i32_46 : i32
    %c0_47 = arith.constant 0 : index
    %84 = arith.index_cast %83 : i32 to index
    %c3_48 = arith.constant 3 : index
    %c0_49 = arith.constant 0 : index
    %85 = vector.load %arg2[%c0_47, %84, %c3_48, %c0_49] : memref<1x20x20x16xf32, #tpu.memory_space<vmem>>, vector<1x8x16x16xf32>
    %86 = vector.shape_cast %85 : vector<1x8x16x16xf32> to vector<8x16x16xf32>
    %c8 = arith.constant 8 : index
    %c0_50 = arith.constant 0 : index
    %c0_51 = arith.constant 0 : index
    %87 = vector.load %arg3[%c8, %c0_50, %c0_51] : memref<25x1x16xf32, #tpu.memory_space<vmem>>, vector<1x1x16xf32>
    %88 = vector.shape_cast %87 : vector<1x1x16xf32> to vector<1x16xf32>
    %89 = vector.shape_cast %88 : vector<1x16xf32> to vector<1x1x16xf32>
    %90 = vector.broadcast %89 : vector<1x1x16xf32> to vector<8x16x16xf32>
    %91 = arith.mulf %86, %90 : vector<8x16x16xf32>
    %92 = arith.addf %82, %91 : vector<8x16x16xf32>
    %c1_i32_52 = arith.constant 1 : i32
    %93 = arith.addi %1, %c1_i32_52 : i32
    %c0_53 = arith.constant 0 : index
    %94 = arith.index_cast %93 : i32 to index
    %c4_54 = arith.constant 4 : index
    %c0_55 = arith.constant 0 : index
    %95 = vector.load %arg2[%c0_53, %94, %c4_54, %c0_55] : memref<1x20x20x16xf32, #tpu.memory_space<vmem>>, vector<1x8x16x16xf32>
    %96 = vector.shape_cast %95 : vector<1x8x16x16xf32> to vector<8x16x16xf32>
    %c9 = arith.constant 9 : index
    %c0_56 = arith.constant 0 : index
    %c0_57 = arith.constant 0 : index
    %97 = vector.load %arg3[%c9, %c0_56, %c0_57] : memref<25x1x16xf32, #tpu.memory_space<vmem>>, vector<1x1x16xf32>
    %98 = vector.shape_cast %97 : vector<1x1x16xf32> to vector<1x16xf32>
    %99 = vector.shape_cast %98 : vector<1x16xf32> to vector<1x1x16xf32>
    %100 = vector.broadcast %99 : vector<1x1x16xf32> to vector<8x16x16xf32>
    %101 = arith.mulf %96, %100 : vector<8x16x16xf32>
    %102 = arith.addf %92, %101 : vector<8x16x16xf32>
    %c2_i32 = arith.constant 2 : i32
    %103 = arith.addi %1, %c2_i32 : i32
    %c0_58 = arith.constant 0 : index
    %104 = arith.index_cast %103 : i32 to index
    %c0_59 = arith.constant 0 : index
    %c0_60 = arith.constant 0 : index
    %105 = vector.load %arg2[%c0_58, %104, %c0_59, %c0_60] : memref<1x20x20x16xf32, #tpu.memory_space<vmem>>, vector<1x8x16x16xf32>
    %106 = vector.shape_cast %105 : vector<1x8x16x16xf32> to vector<8x16x16xf32>
    %c10 = arith.constant 10 : index
    %c0_61 = arith.constant 0 : index
    %c0_62 = arith.constant 0 : index
    %107 = vector.load %arg3[%c10, %c0_61, %c0_62] : memref<25x1x16xf32, #tpu.memory_space<vmem>>, vector<1x1x16xf32>
    %108 = vector.shape_cast %107 : vector<1x1x16xf32> to vector<1x16xf32>
    %109 = vector.shape_cast %108 : vector<1x16xf32> to vector<1x1x16xf32>
    %110 = vector.broadcast %109 : vector<1x1x16xf32> to vector<8x16x16xf32>
    %111 = arith.mulf %106, %110 : vector<8x16x16xf32>
    %112 = arith.addf %102, %111 : vector<8x16x16xf32>
    %c2_i32_63 = arith.constant 2 : i32
    %113 = arith.addi %1, %c2_i32_63 : i32
    %c0_64 = arith.constant 0 : index
    %114 = arith.index_cast %113 : i32 to index
    %c1_65 = arith.constant 1 : index
    %c0_66 = arith.constant 0 : index
    %115 = vector.load %arg2[%c0_64, %114, %c1_65, %c0_66] : memref<1x20x20x16xf32, #tpu.memory_space<vmem>>, vector<1x8x16x16xf32>
    %116 = vector.shape_cast %115 : vector<1x8x16x16xf32> to vector<8x16x16xf32>
    %c11 = arith.constant 11 : index
    %c0_67 = arith.constant 0 : index
    %c0_68 = arith.constant 0 : index
    %117 = vector.load %arg3[%c11, %c0_67, %c0_68] : memref<25x1x16xf32, #tpu.memory_space<vmem>>, vector<1x1x16xf32>
    %118 = vector.shape_cast %117 : vector<1x1x16xf32> to vector<1x16xf32>
    %119 = vector.shape_cast %118 : vector<1x16xf32> to vector<1x1x16xf32>
    %120 = vector.broadcast %119 : vector<1x1x16xf32> to vector<8x16x16xf32>
    %121 = arith.mulf %116, %120 : vector<8x16x16xf32>
    %122 = arith.addf %112, %121 : vector<8x16x16xf32>
    %c2_i32_69 = arith.constant 2 : i32
    %123 = arith.addi %1, %c2_i32_69 : i32
    %c0_70 = arith.constant 0 : index
    %124 = arith.index_cast %123 : i32 to index
    %c2_71 = arith.constant 2 : index
    %c0_72 = arith.constant 0 : index
    %125 = vector.load %arg2[%c0_70, %124, %c2_71, %c0_72] : memref<1x20x20x16xf32, #tpu.memory_space<vmem>>, vector<1x8x16x16xf32>
    %126 = vector.shape_cast %125 : vector<1x8x16x16xf32> to vector<8x16x16xf32>
    %c12 = arith.constant 12 : index
    %c0_73 = arith.constant 0 : index
    %c0_74 = arith.constant 0 : index
    %127 = vector.load %arg3[%c12, %c0_73, %c0_74] : memref<25x1x16xf32, #tpu.memory_space<vmem>>, vector<1x1x16xf32>
    %128 = vector.shape_cast %127 : vector<1x1x16xf32> to vector<1x16xf32>
    %129 = vector.shape_cast %128 : vector<1x16xf32> to vector<1x1x16xf32>
    %130 = vector.broadcast %129 : vector<1x1x16xf32> to vector<8x16x16xf32>
    %131 = arith.mulf %126, %130 : vector<8x16x16xf32>
    %132 = arith.addf %122, %131 : vector<8x16x16xf32>
    %c2_i32_75 = arith.constant 2 : i32
    %133 = arith.addi %1, %c2_i32_75 : i32
    %c0_76 = arith.constant 0 : index
    %134 = arith.index_cast %133 : i32 to index
    %c3_77 = arith.constant 3 : index
    %c0_78 = arith.constant 0 : index
    %135 = vector.load %arg2[%c0_76, %134, %c3_77, %c0_78] : memref<1x20x20x16xf32, #tpu.memory_space<vmem>>, vector<1x8x16x16xf32>
    %136 = vector.shape_cast %135 : vector<1x8x16x16xf32> to vector<8x16x16xf32>
    %c13 = arith.constant 13 : index
    %c0_79 = arith.constant 0 : index
    %c0_80 = arith.constant 0 : index
    %137 = vector.load %arg3[%c13, %c0_79, %c0_80] : memref<25x1x16xf32, #tpu.memory_space<vmem>>, vector<1x1x16xf32>
    %138 = vector.shape_cast %137 : vector<1x1x16xf32> to vector<1x16xf32>
    %139 = vector.shape_cast %138 : vector<1x16xf32> to vector<1x1x16xf32>
    %140 = vector.broadcast %139 : vector<1x1x16xf32> to vector<8x16x16xf32>
    %141 = arith.mulf %136, %140 : vector<8x16x16xf32>
    %142 = arith.addf %132, %141 : vector<8x16x16xf32>
    %c2_i32_81 = arith.constant 2 : i32
    %143 = arith.addi %1, %c2_i32_81 : i32
    %c0_82 = arith.constant 0 : index
    %144 = arith.index_cast %143 : i32 to index
    %c4_83 = arith.constant 4 : index
    %c0_84 = arith.constant 0 : index
    %145 = vector.load %arg2[%c0_82, %144, %c4_83, %c0_84] : memref<1x20x20x16xf32, #tpu.memory_space<vmem>>, vector<1x8x16x16xf32>
    %146 = vector.shape_cast %145 : vector<1x8x16x16xf32> to vector<8x16x16xf32>
    %c14 = arith.constant 14 : index
    %c0_85 = arith.constant 0 : index
    %c0_86 = arith.constant 0 : index
    %147 = vector.load %arg3[%c14, %c0_85, %c0_86] : memref<25x1x16xf32, #tpu.memory_space<vmem>>, vector<1x1x16xf32>
    %148 = vector.shape_cast %147 : vector<1x1x16xf32> to vector<1x16xf32>
    %149 = vector.shape_cast %148 : vector<1x16xf32> to vector<1x1x16xf32>
    %150 = vector.broadcast %149 : vector<1x1x16xf32> to vector<8x16x16xf32>
    %151 = arith.mulf %146, %150 : vector<8x16x16xf32>
    %152 = arith.addf %142, %151 : vector<8x16x16xf32>
    %c3_i32 = arith.constant 3 : i32
    %153 = arith.addi %1, %c3_i32 : i32
    %c0_87 = arith.constant 0 : index
    %154 = arith.index_cast %153 : i32 to index
    %c0_88 = arith.constant 0 : index
    %c0_89 = arith.constant 0 : index
    %155 = vector.load %arg2[%c0_87, %154, %c0_88, %c0_89] : memref<1x20x20x16xf32, #tpu.memory_space<vmem>>, vector<1x8x16x16xf32>
    %156 = vector.shape_cast %155 : vector<1x8x16x16xf32> to vector<8x16x16xf32>
    %c15 = arith.constant 15 : index
    %c0_90 = arith.constant 0 : index
    %c0_91 = arith.constant 0 : index
    %157 = vector.load %arg3[%c15, %c0_90, %c0_91] : memref<25x1x16xf32, #tpu.memory_space<vmem>>, vector<1x1x16xf32>
    %158 = vector.shape_cast %157 : vector<1x1x16xf32> to vector<1x16xf32>
    %159 = vector.shape_cast %158 : vector<1x16xf32> to vector<1x1x16xf32>
    %160 = vector.broadcast %159 : vector<1x1x16xf32> to vector<8x16x16xf32>
    %161 = arith.mulf %156, %160 : vector<8x16x16xf32>
    %162 = arith.addf %152, %161 : vector<8x16x16xf32>
    %c3_i32_92 = arith.constant 3 : i32
    %163 = arith.addi %1, %c3_i32_92 : i32
    %c0_93 = arith.constant 0 : index
    %164 = arith.index_cast %163 : i32 to index
    %c1_94 = arith.constant 1 : index
    %c0_95 = arith.constant 0 : index
    %165 = vector.load %arg2[%c0_93, %164, %c1_94, %c0_95] : memref<1x20x20x16xf32, #tpu.memory_space<vmem>>, vector<1x8x16x16xf32>
    %166 = vector.shape_cast %165 : vector<1x8x16x16xf32> to vector<8x16x16xf32>
    %c16 = arith.constant 16 : index
    %c0_96 = arith.constant 0 : index
    %c0_97 = arith.constant 0 : index
    %167 = vector.load %arg3[%c16, %c0_96, %c0_97] : memref<25x1x16xf32, #tpu.memory_space<vmem>>, vector<1x1x16xf32>
    %168 = vector.shape_cast %167 : vector<1x1x16xf32> to vector<1x16xf32>
    %169 = vector.shape_cast %168 : vector<1x16xf32> to vector<1x1x16xf32>
    %170 = vector.broadcast %169 : vector<1x1x16xf32> to vector<8x16x16xf32>
    %171 = arith.mulf %166, %170 : vector<8x16x16xf32>
    %172 = arith.addf %162, %171 : vector<8x16x16xf32>
    %c3_i32_98 = arith.constant 3 : i32
    %173 = arith.addi %1, %c3_i32_98 : i32
    %c0_99 = arith.constant 0 : index
    %174 = arith.index_cast %173 : i32 to index
    %c2_100 = arith.constant 2 : index
    %c0_101 = arith.constant 0 : index
    %175 = vector.load %arg2[%c0_99, %174, %c2_100, %c0_101] : memref<1x20x20x16xf32, #tpu.memory_space<vmem>>, vector<1x8x16x16xf32>
    %176 = vector.shape_cast %175 : vector<1x8x16x16xf32> to vector<8x16x16xf32>
    %c17 = arith.constant 17 : index
    %c0_102 = arith.constant 0 : index
    %c0_103 = arith.constant 0 : index
    %177 = vector.load %arg3[%c17, %c0_102, %c0_103] : memref<25x1x16xf32, #tpu.memory_space<vmem>>, vector<1x1x16xf32>
    %178 = vector.shape_cast %177 : vector<1x1x16xf32> to vector<1x16xf32>
    %179 = vector.shape_cast %178 : vector<1x16xf32> to vector<1x1x16xf32>
    %180 = vector.broadcast %179 : vector<1x1x16xf32> to vector<8x16x16xf32>
    %181 = arith.mulf %176, %180 : vector<8x16x16xf32>
    %182 = arith.addf %172, %181 : vector<8x16x16xf32>
    %c3_i32_104 = arith.constant 3 : i32
    %183 = arith.addi %1, %c3_i32_104 : i32
    %c0_105 = arith.constant 0 : index
    %184 = arith.index_cast %183 : i32 to index
    %c3_106 = arith.constant 3 : index
    %c0_107 = arith.constant 0 : index
    %185 = vector.load %arg2[%c0_105, %184, %c3_106, %c0_107] : memref<1x20x20x16xf32, #tpu.memory_space<vmem>>, vector<1x8x16x16xf32>
    %186 = vector.shape_cast %185 : vector<1x8x16x16xf32> to vector<8x16x16xf32>
    %c18 = arith.constant 18 : index
    %c0_108 = arith.constant 0 : index
    %c0_109 = arith.constant 0 : index
    %187 = vector.load %arg3[%c18, %c0_108, %c0_109] : memref<25x1x16xf32, #tpu.memory_space<vmem>>, vector<1x1x16xf32>
    %188 = vector.shape_cast %187 : vector<1x1x16xf32> to vector<1x16xf32>
    %189 = vector.shape_cast %188 : vector<1x16xf32> to vector<1x1x16xf32>
    %190 = vector.broadcast %189 : vector<1x1x16xf32> to vector<8x16x16xf32>
    %191 = arith.mulf %186, %190 : vector<8x16x16xf32>
    %192 = arith.addf %182, %191 : vector<8x16x16xf32>
    %c3_i32_110 = arith.constant 3 : i32
    %193 = arith.addi %1, %c3_i32_110 : i32
    %c0_111 = arith.constant 0 : index
    %194 = arith.index_cast %193 : i32 to index
    %c4_112 = arith.constant 4 : index
    %c0_113 = arith.constant 0 : index
    %195 = vector.load %arg2[%c0_111, %194, %c4_112, %c0_113] : memref<1x20x20x16xf32, #tpu.memory_space<vmem>>, vector<1x8x16x16xf32>
    %196 = vector.shape_cast %195 : vector<1x8x16x16xf32> to vector<8x16x16xf32>
    %c19 = arith.constant 19 : index
    %c0_114 = arith.constant 0 : index
    %c0_115 = arith.constant 0 : index
    %197 = vector.load %arg3[%c19, %c0_114, %c0_115] : memref<25x1x16xf32, #tpu.memory_space<vmem>>, vector<1x1x16xf32>
    %198 = vector.shape_cast %197 : vector<1x1x16xf32> to vector<1x16xf32>
    %199 = vector.shape_cast %198 : vector<1x16xf32> to vector<1x1x16xf32>
    %200 = vector.broadcast %199 : vector<1x1x16xf32> to vector<8x16x16xf32>
    %201 = arith.mulf %196, %200 : vector<8x16x16xf32>
    %202 = arith.addf %192, %201 : vector<8x16x16xf32>
    %c4_i32 = arith.constant 4 : i32
    %203 = arith.addi %1, %c4_i32 : i32
    %c0_116 = arith.constant 0 : index
    %204 = arith.index_cast %203 : i32 to index
    %c0_117 = arith.constant 0 : index
    %c0_118 = arith.constant 0 : index
    %205 = vector.load %arg2[%c0_116, %204, %c0_117, %c0_118] : memref<1x20x20x16xf32, #tpu.memory_space<vmem>>, vector<1x8x16x16xf32>
    %206 = vector.shape_cast %205 : vector<1x8x16x16xf32> to vector<8x16x16xf32>
    %c20 = arith.constant 20 : index
    %c0_119 = arith.constant 0 : index
    %c0_120 = arith.constant 0 : index
    %207 = vector.load %arg3[%c20, %c0_119, %c0_120] : memref<25x1x16xf32, #tpu.memory_space<vmem>>, vector<1x1x16xf32>
    %208 = vector.shape_cast %207 : vector<1x1x16xf32> to vector<1x16xf32>
    %209 = vector.shape_cast %208 : vector<1x16xf32> to vector<1x1x16xf32>
    %210 = vector.broadcast %209 : vector<1x1x16xf32> to vector<8x16x16xf32>
    %211 = arith.mulf %206, %210 : vector<8x16x16xf32>
    %212 = arith.addf %202, %211 : vector<8x16x16xf32>
    %c4_i32_121 = arith.constant 4 : i32
    %213 = arith.addi %1, %c4_i32_121 : i32
    %c0_122 = arith.constant 0 : index
    %214 = arith.index_cast %213 : i32 to index
    %c1_123 = arith.constant 1 : index
    %c0_124 = arith.constant 0 : index
    %215 = vector.load %arg2[%c0_122, %214, %c1_123, %c0_124] : memref<1x20x20x16xf32, #tpu.memory_space<vmem>>, vector<1x8x16x16xf32>
    %216 = vector.shape_cast %215 : vector<1x8x16x16xf32> to vector<8x16x16xf32>
    %c21 = arith.constant 21 : index
    %c0_125 = arith.constant 0 : index
    %c0_126 = arith.constant 0 : index
    %217 = vector.load %arg3[%c21, %c0_125, %c0_126] : memref<25x1x16xf32, #tpu.memory_space<vmem>>, vector<1x1x16xf32>
    %218 = vector.shape_cast %217 : vector<1x1x16xf32> to vector<1x16xf32>
    %219 = vector.shape_cast %218 : vector<1x16xf32> to vector<1x1x16xf32>
    %220 = vector.broadcast %219 : vector<1x1x16xf32> to vector<8x16x16xf32>
    %221 = arith.mulf %216, %220 : vector<8x16x16xf32>
    %222 = arith.addf %212, %221 : vector<8x16x16xf32>
    %c4_i32_127 = arith.constant 4 : i32
    %223 = arith.addi %1, %c4_i32_127 : i32
    %c0_128 = arith.constant 0 : index
    %224 = arith.index_cast %223 : i32 to index
    %c2_129 = arith.constant 2 : index
    %c0_130 = arith.constant 0 : index
    %225 = vector.load %arg2[%c0_128, %224, %c2_129, %c0_130] : memref<1x20x20x16xf32, #tpu.memory_space<vmem>>, vector<1x8x16x16xf32>
    %226 = vector.shape_cast %225 : vector<1x8x16x16xf32> to vector<8x16x16xf32>
    %c22 = arith.constant 22 : index
    %c0_131 = arith.constant 0 : index
    %c0_132 = arith.constant 0 : index
    %227 = vector.load %arg3[%c22, %c0_131, %c0_132] : memref<25x1x16xf32, #tpu.memory_space<vmem>>, vector<1x1x16xf32>
    %228 = vector.shape_cast %227 : vector<1x1x16xf32> to vector<1x16xf32>
    %229 = vector.shape_cast %228 : vector<1x16xf32> to vector<1x1x16xf32>
    %230 = vector.broadcast %229 : vector<1x1x16xf32> to vector<8x16x16xf32>
    %231 = arith.mulf %226, %230 : vector<8x16x16xf32>
    %232 = arith.addf %222, %231 : vector<8x16x16xf32>
    %c4_i32_133 = arith.constant 4 : i32
    %233 = arith.addi %1, %c4_i32_133 : i32
    %c0_134 = arith.constant 0 : index
    %234 = arith.index_cast %233 : i32 to index
    %c3_135 = arith.constant 3 : index
    %c0_136 = arith.constant 0 : index
    %235 = vector.load %arg2[%c0_134, %234, %c3_135, %c0_136] : memref<1x20x20x16xf32, #tpu.memory_space<vmem>>, vector<1x8x16x16xf32>
    %236 = vector.shape_cast %235 : vector<1x8x16x16xf32> to vector<8x16x16xf32>
    %c23 = arith.constant 23 : index
    %c0_137 = arith.constant 0 : index
    %c0_138 = arith.constant 0 : index
    %237 = vector.load %arg3[%c23, %c0_137, %c0_138] : memref<25x1x16xf32, #tpu.memory_space<vmem>>, vector<1x1x16xf32>
    %238 = vector.shape_cast %237 : vector<1x1x16xf32> to vector<1x16xf32>
    %239 = vector.shape_cast %238 : vector<1x16xf32> to vector<1x1x16xf32>
    %240 = vector.broadcast %239 : vector<1x1x16xf32> to vector<8x16x16xf32>
    %241 = arith.mulf %236, %240 : vector<8x16x16xf32>
    %242 = arith.addf %232, %241 : vector<8x16x16xf32>
    %c4_i32_139 = arith.constant 4 : i32
    %243 = arith.addi %1, %c4_i32_139 : i32
    %c0_140 = arith.constant 0 : index
    %244 = arith.index_cast %243 : i32 to index
    %c4_141 = arith.constant 4 : index
    %c0_142 = arith.constant 0 : index
    %245 = vector.load %arg2[%c0_140, %244, %c4_141, %c0_142] : memref<1x20x20x16xf32, #tpu.memory_space<vmem>>, vector<1x8x16x16xf32>
    %246 = vector.shape_cast %245 : vector<1x8x16x16xf32> to vector<8x16x16xf32>
    %c24 = arith.constant 24 : index
    %c0_143 = arith.constant 0 : index
    %c0_144 = arith.constant 0 : index
    %247 = vector.load %arg3[%c24, %c0_143, %c0_144] : memref<25x1x16xf32, #tpu.memory_space<vmem>>, vector<1x1x16xf32>
    %248 = vector.shape_cast %247 : vector<1x1x16xf32> to vector<1x16xf32>
    %249 = vector.shape_cast %248 : vector<1x16xf32> to vector<1x1x16xf32>
    %250 = vector.broadcast %249 : vector<1x1x16xf32> to vector<8x16x16xf32>
    %251 = arith.mulf %246, %250 : vector<8x16x16xf32>
    %252 = arith.addf %242, %251 : vector<8x16x16xf32>
    %c0_145 = arith.constant 0 : index
    %c0_146 = arith.constant 0 : index
    %253 = vector.load %arg4[%c0_145, %c0_146] : memref<1x16xf32, #tpu.memory_space<vmem>>, vector<1x16xf32>
    %254 = vector.shape_cast %253 : vector<1x16xf32> to vector<1x1x16xf32>
    %255 = vector.broadcast %254 : vector<1x1x16xf32> to vector<8x16x16xf32>
    %256 = arith.mulf %252, %255 : vector<8x16x16xf32>
    %c0_147 = arith.constant 0 : index
    %c0_148 = arith.constant 0 : index
    %257 = vector.load %arg5[%c0_147, %c0_148] : memref<1x16xf32, #tpu.memory_space<vmem>>, vector<1x16xf32>
    %258 = vector.shape_cast %257 : vector<1x16xf32> to vector<1x1x16xf32>
    %259 = vector.broadcast %258 : vector<1x1x16xf32> to vector<8x16x16xf32>
    %260 = arith.addf %256, %259 : vector<8x16x16xf32>
    %261 = arith.negf %260 : vector<8x16x16xf32>
    %262 = math.exp %261 : vector<8x16x16xf32>
    %cst_149 = arith.constant 1.000000e+00 : f32
    %263 = vector.broadcast %cst_149 : f32 to vector<8x16x16xf32>
    %264 = arith.addf %263, %262 : vector<8x16x16xf32>
    %265 = arith.divf %263, %264 : vector<8x16x16xf32>
    %266 = arith.mulf %260, %265 : vector<8x16x16xf32>
    %c0_150 = arith.constant 0 : index
    %c0_151 = arith.constant 0 : index
    %c0_152 = arith.constant 0 : index
    %c0_153 = arith.constant 0 : index
    %267 = vector.load %arg6[%c0_150, %c0_151, %c0_152, %c0_153] : memref<1x8x16x16xf32, #tpu.memory_space<vmem>>, vector<1x8x16x16xf32>
    %268 = vector.shape_cast %267 : vector<1x8x16x16xf32> to vector<8x16x16xf32>
    %269 = vector.shape_cast %266 : vector<8x16x16xf32> to vector<1x8x16x16xf32>
    tpu.vector_store %arg6[%c0_150, %c0_151, %c0_152, %c0_153], %269 {strides = array<i32>} : memref<1x8x16x16xf32, #tpu.memory_space<vmem>>, vector<1x8x16x16xf32>,
    %cst_154 = arith.constant dense<0.000000e+00> : vector<16xf32>
    %270 = vector.multi_reduction <add>, %266, %cst_154 [0, 1] : vector<8x16x16xf32> to vector<16xf32>
    %271 = vector.shape_cast %270 : vector<16xf32> to vector<1x1x16xf32>
    %272 = vector.shape_cast %271 : vector<1x1x16xf32> to vector<1x1x1x16xf32>
    %c0_155 = arith.constant 0 : index
    %c0_156 = arith.constant 0 : index
    %c0_157 = arith.constant 0 : index
    %c0_158 = arith.constant 0 : index
    %273 = vector.load %arg7[%c0_155, %c0_156, %c0_157, %c0_158] : memref<1x1x1x16xf32, #tpu.memory_space<vmem>>, vector<1x1x1x16xf32>
    tpu.vector_store %arg7[%c0_155, %c0_156, %c0_157, %c0_158], %272 {strides = array<i32>} : memref<1x1x1x16xf32, #tpu.memory_space<vmem>>, vector<1x1x1x16xf32>,
    return
  }
  func.func @transform_0(%arg0: i32, %arg1: i32) -> (i32, i32, i32, i32) {
    %c0_i32 = arith.constant 0 : i32
    %c0_i32_0 = arith.constant 0 : i32
    %c0_i32_1 = arith.constant 0 : i32
    %c0_i32_2 = arith.constant 0 : i32
    return %arg0, %c0_i32, %c0_i32_0, %c0_i32_1 : i32, i32, i32, i32
  }
  func.func @transform_1(%arg0: i32, %arg1: i32) -> (i32, i32, i32) {
    %c0_i32 = arith.constant 0 : i32
    %c0_i32_0 = arith.constant 0 : i32
    %c0_i32_1 = arith.constant 0 : i32
    %c0_i32_2 = arith.constant 0 : i32
    return %c0_i32, %c0_i32_0, %c0_i32_1 : i32, i32, i32
  }
  func.func @transform_2(%arg0: i32, %arg1: i32) -> (i32, i32) {
    %c0_i32 = arith.constant 0 : i32
    %c0_i32_0 = arith.constant 0 : i32
    %c0_i32_1 = arith.constant 0 : i32
    return %c0_i32, %c0_i32_0 : i32, i32
  }
  func.func @transform_3(%arg0: i32, %arg1: i32) -> (i32, i32) {
    %c0_i32 = arith.constant 0 : i32
    %c0_i32_0 = arith.constant 0 : i32
    %c0_i32_1 = arith.constant 0 : i32
    return %c0_i32, %c0_i32_0 : i32, i32
  }
  func.func @transform_4(%arg0: i32, %arg1: i32) -> (i32, i32, i32, i32) {
    %c0_i32 = arith.constant 0 : i32
    %c0_i32_0 = arith.constant 0 : i32
    %c0_i32_1 = arith.constant 0 : i32
    return %arg0, %arg1, %c0_i32, %c0_i32_0 : i32, i32, i32, i32
  }
  func.func @transform_5(%arg0: i32, %arg1: i32) -> (i32, i32, i32, i32) {
    %c0_i32 = arith.constant 0 : i32
    %c0_i32_0 = arith.constant 0 : i32
    %c0_i32_1 = arith.constant 0 : i32
    return %arg0, %arg1, %c0_i32, %c0_i32_0 : i32, i32, i32, i32
  }
}

module attributes {stable_mosaic.version = 11 : i64} {
  func.func @_pw_gate_bn_res_kernel(%arg0: i32, %arg1: i32, %arg2: memref<1x256x16xbf16, #tpu.memory_space<vmem>>, %arg3: memref<1x1x16xbf16, #tpu.memory_space<vmem>>, %arg4: memref<16x8xbf16, #tpu.memory_space<vmem>>, %arg5: memref<1x8xf32, #tpu.memory_space<vmem>>, %arg6: memref<1x8xf32, #tpu.memory_space<vmem>>, %arg7: memref<1x256x8xf32, #tpu.memory_space<vmem>>, %arg8: memref<1x256x8xf32, #tpu.memory_space<vmem>>) attributes {dimension_semantics = [#tpu.dimension_semantics<parallel>, #tpu.dimension_semantics<parallel>], iteration_bounds = array<i64: 2, 1>, scalar_prefetch = 0 : i64, scratch_operands = 0 : i64, tpu.core_type = #tpu.core_type<tc>, window_params = [{transform_indices = @transform_0, window_bounds = array<i64: 1, 256, 16>}, {transform_indices = @transform_1, window_bounds = array<i64: 1, 1, 16>}, {pipeline_mode = #tpu.pipeline_mode<synchronous>, transform_indices = @transform_2, window_bounds = array<i64: 16, 8>}, {pipeline_mode = #tpu.pipeline_mode<synchronous>, transform_indices = @transform_3, window_bounds = array<i64: 1, 8>}, {pipeline_mode = #tpu.pipeline_mode<synchronous>, transform_indices = @transform_4, window_bounds = array<i64: 1, 8>}, {transform_indices = @transform_5, window_bounds = array<i64: 1, 256, 8>}, {transform_indices = @transform_6, window_bounds = array<i64: 1, 256, 8>}]} {
    %c0 = arith.constant 0 : index
    %c0_0 = arith.constant 0 : index
    %c0_1 = arith.constant 0 : index
    %0 = vector.load %arg2[%c0, %c0_0, %c0_1] : memref<1x256x16xbf16, #tpu.memory_space<vmem>>, vector<1x256x16xbf16>
    %1 = vector.shape_cast %0 : vector<1x256x16xbf16> to vector<256x16xbf16>
    %c0_2 = arith.constant 0 : index
    %c0_3 = arith.constant 0 : index
    %c0_4 = arith.constant 0 : index
    %2 = vector.load %arg3[%c0_2, %c0_3, %c0_4] : memref<1x1x16xbf16, #tpu.memory_space<vmem>>, vector<1x1x16xbf16>
    %3 = vector.shape_cast %2 : vector<1x1x16xbf16> to vector<1x16xbf16>
    %4 = vector.broadcast %3 : vector<1x16xbf16> to vector<256x16xbf16>
    %5 = arith.mulf %1, %4 : vector<256x16xbf16>
    %c0_5 = arith.constant 0 : index
    %c0_6 = arith.constant 0 : index
    %6 = vector.load %arg4[%c0_5, %c0_6] : memref<16x8xbf16, #tpu.memory_space<vmem>>, vector<16x8xbf16>
    %cst = arith.constant dense<0.000000e+00> : vector<256x8xf32>
    %7 = tpu.matmul %5, %6, %cst {dimension_numbers = #tpu.dot_dimension_numbers<[1], [0], [0], [1], [0, 0, 1, 1], [], []>} : vector<256x16xbf16>, vector<16x8xbf16>, vector<256x8xf32> -> vector<256x8xf32>
    %c0_7 = arith.constant 0 : index
    %c0_8 = arith.constant 0 : index
    %8 = vector.load %arg5[%c0_7, %c0_8] : memref<1x8xf32, #tpu.memory_space<vmem>>, vector<1x8xf32>
    %9 = vector.broadcast %8 : vector<1x8xf32> to vector<256x8xf32>
    %10 = arith.mulf %7, %9 : vector<256x8xf32>
    %c0_9 = arith.constant 0 : index
    %c0_10 = arith.constant 0 : index
    %11 = vector.load %arg6[%c0_9, %c0_10] : memref<1x8xf32, #tpu.memory_space<vmem>>, vector<1x8xf32>
    %12 = vector.broadcast %11 : vector<1x8xf32> to vector<256x8xf32>
    %13 = arith.addf %10, %12 : vector<256x8xf32>
    %c0_11 = arith.constant 0 : index
    %c0_12 = arith.constant 0 : index
    %c0_13 = arith.constant 0 : index
    %14 = vector.load %arg7[%c0_11, %c0_12, %c0_13] : memref<1x256x8xf32, #tpu.memory_space<vmem>>, vector<1x256x8xf32>
    %15 = vector.shape_cast %14 : vector<1x256x8xf32> to vector<256x8xf32>
    %16 = arith.addf %13, %15 : vector<256x8xf32>
    %c0_14 = arith.constant 0 : index
    %c0_15 = arith.constant 0 : index
    %c0_16 = arith.constant 0 : index
    %17 = vector.load %arg8[%c0_14, %c0_15, %c0_16] : memref<1x256x8xf32, #tpu.memory_space<vmem>>, vector<1x256x8xf32>
    %18 = vector.shape_cast %17 : vector<1x256x8xf32> to vector<256x8xf32>
    %19 = vector.shape_cast %16 : vector<256x8xf32> to vector<1x256x8xf32>
    tpu.vector_store %arg8[%c0_14, %c0_15, %c0_16], %19 {strides = array<i32>} : memref<1x256x8xf32, #tpu.memory_space<vmem>>, vector<1x256x8xf32>,
    return
  }
  func.func @transform_0(%arg0: i32, %arg1: i32) -> (i32, i32, i32) {
    %c0_i32 = arith.constant 0 : i32
    %c0_i32_0 = arith.constant 0 : i32
    return %arg0, %arg1, %c0_i32 : i32, i32, i32
  }
  func.func @transform_1(%arg0: i32, %arg1: i32) -> (i32, i32, i32) {
    %c0_i32 = arith.constant 0 : i32
    %c0_i32_0 = arith.constant 0 : i32
    %c0_i32_1 = arith.constant 0 : i32
    return %arg0, %c0_i32, %c0_i32_0 : i32, i32, i32
  }
  func.func @transform_2(%arg0: i32, %arg1: i32) -> (i32, i32) {
    %c0_i32 = arith.constant 0 : i32
    %c0_i32_0 = arith.constant 0 : i32
    %c0_i32_1 = arith.constant 0 : i32
    return %c0_i32, %c0_i32_0 : i32, i32
  }
  func.func @transform_3(%arg0: i32, %arg1: i32) -> (i32, i32) {
    %c0_i32 = arith.constant 0 : i32
    %c0_i32_0 = arith.constant 0 : i32
    %c0_i32_1 = arith.constant 0 : i32
    return %c0_i32, %c0_i32_0 : i32, i32
  }
  func.func @transform_4(%arg0: i32, %arg1: i32) -> (i32, i32) {
    %c0_i32 = arith.constant 0 : i32
    %c0_i32_0 = arith.constant 0 : i32
    %c0_i32_1 = arith.constant 0 : i32
    return %c0_i32, %c0_i32_0 : i32, i32
  }
  func.func @transform_5(%arg0: i32, %arg1: i32) -> (i32, i32, i32) {
    %c0_i32 = arith.constant 0 : i32
    %c0_i32_0 = arith.constant 0 : i32
    return %arg0, %arg1, %c0_i32 : i32, i32, i32
  }
  func.func @transform_6(%arg0: i32, %arg1: i32) -> (i32, i32, i32) {
    %c0_i32 = arith.constant 0 : i32
    %c0_i32_0 = arith.constant 0 : i32
    return %arg0, %arg1, %c0_i32 : i32, i32, i32
  }
}

</mosaic_0001>

<llo_original>
// kernel: _lambda_.3
$region0: #{_lambda_.3}
  #allocation0 [shape = 'u32[]', space=smem, size = 0x4, offset = 0x4, fixed_abs, tag = 'smem constant byte address 0x4 - core index']
  #allocation1 [shape = 'u32[72,128]{1,0:T(1,128)}', space=vmem, size = 0x9000, scoped, tag = 'internal scratch']
  %s0 = inlined_call_operand.vmem [shape: bf16[512,8], index: 0, kind: input, shape index: {}]
  %s1 = inlined_call_operand.vmem [shape: bf16[8,16], index: 1, kind: input, shape index: {}]
  %s2 = inlined_call_operand.vmem [shape: f32[1,16], index: 2, kind: input, shape index: {}]
  %s3 = inlined_call_operand.vmem [shape: f32[1,16], index: 3, kind: input, shape index: {}]
  %s4 = inlined_call_operand.vmem [shape: f32[512,16], index: 4, kind: output, shape index: {}]
  %s5 = sld [smem:[#allocation0]]
  $region26: #{_lambda_.3} parent=0
    _
  %s7 = ssub.s32 1, %s5
  %s8 = scalar_select 0, %s7, %s5
  // Predicated region
  $region2: #{_lambda_.3} parent=0 // pred_check
    _
  $region3: #{_lambda_.3} parent=0 // pred_check_branch
    %10 = sbr.rel (0) target = $region5
  $region4: #{_lambda_.3} parent=0 // pred_region
    _
  $region5: #{_lambda_.3} parent=0 // pred_fallthru
    _
  // Predicated region
  $region6: #{_lambda_.3} parent=0 // pred_check
    _
  $region7: #{_lambda_.3} parent=0 // pred_check_branch
    %12 = sbr.rel (0) target = $region9
  $region8: #{_lambda_.3} parent=0 // pred_region
    _
  $region9: #{_lambda_.3} parent=0 // pred_fallthru
    _
  // Predicated region
  $region10: #{_lambda_.3} parent=0 // pred_check
    _
  $region11: #{_lambda_.3} parent=0 // pred_check_branch
    %14 = sbr.rel (0) target = $region13
  $region12: #{_lambda_.3} parent=0 // pred_region
    _
  $region13: #{_lambda_.3} parent=0 // pred_fallthru
    _
  // Predicated region
  $region14: #{_lambda_.3} parent=0 // pred_check
    _
  $region15: #{_lambda_.3} parent=0 // pred_check_branch
    %16 = sbr.rel (0) target = $region17
  $region16: #{_lambda_.3} parent=0 // pred_region
    _
  $region17: #{_lambda_.3} parent=0 // pred_fallthru
    _
  %v18 = vld [vmem:[%s0] sm:$0xf]
  %v19 = vld [vmem:[%s0 + $0x4] sm:$0xf]
  %v20 = vld [vmem:[%s0 + $0x8] sm:$0xf]
  %v21 = vld [vmem:[%s0 + $0xc] sm:$0xf]
  %v22 = vld [vmem:[%s0 + $0x10] sm:$0xf]
  %v23 = vld [vmem:[%s0 + $0x14] sm:$0xf]
  %v24 = vld [vmem:[%s0 + $0x18] sm:$0xf]
  %v25 = vld [vmem:[%s0 + $0x1c] sm:$0xf]
  %v26 = vld [vmem:[%s0 + $0x20] sm:$0xf]
  %v27 = vld [vmem:[%s0 + $0x24] sm:$0xf]
  %v28 = vld [vmem:[%s0 + $0x28] sm:$0xf]
  %v29 = vld [vmem:[%s0 + $0x2c] sm:$0xf]
  %v30 = vld [vmem:[%s0 + $0x30] sm:$0xf]
  %v31 = vld [vmem:[%s0 + $0x34] sm:$0xf]
  %v32 = vld [vmem:[%s0 + $0x38] sm:$0xf]
  %v33 = vld [vmem:[%s0 + $0x3c] sm:$0xf]
  %v34 = vld [vmem:[%s0 + $0x40] sm:$0xf]
  %v35 = vld [vmem:[%s0 + $0x44] sm:$0xf]
  %v36 = vld [vmem:[%s0 + $0x48] sm:$0xf]
  %v37 = vld [vmem:[%s0 + $0x4c] sm:$0xf]
  %v38 = vld [vmem:[%s0 + $0x50] sm:$0xf]
  %v39 = vld [vmem:[%s0 + $0x54] sm:$0xf]
  %v40 = vld [vmem:[%s0 + $0x58] sm:$0xf]
  %v41 = vld [vmem:[%s0 + $0x5c] sm:$0xf]
  %v42 = vld [vmem:[%s0 + $0x60] sm:$0xf]
  %v43 = vld [vmem:[%s0 + $0x64] sm:$0xf]
  %v44 = vld [vmem:[%s0 + $0x68] sm:$0xf]
  %v45 = vld [vmem:[%s0 + $0x6c] sm:$0xf]
  %v46 = vld [vmem:[%s0 + $0x70] sm:$0xf]
  %v47 = vld [vmem:[%s0 + $0x74] sm:$0xf]
  %v48 = vld [vmem:[%s0 + $0x78] sm:$0xf]
  %v49 = vld [vmem:[%s0 + $0x7c] sm:$0xf]
  %v50 = vld [vmem:[%s0 + $0x80] sm:$0xf]
  %v51 = vld [vmem:[%s0 + $0x84] sm:$0xf]
  %v52 = vld [vmem:[%s0 + $0x88] sm:$0xf]
  %v53 = vld [vmem:[%s0 + $0x8c] sm:$0xf]
  %v54 = vld [vmem:[%s0 + $0x90] sm:$0xf]
  %v55 = vld [vmem:[%s0 + $0x94] sm:$0xf]
  %v56 = vld [vmem:[%s0 + $0x98] sm:$0xf]
  %v57 = vld [vmem:[%s0 + $0x9c] sm:$0xf]
  %v58 = vld [vmem:[%s0 + $0xa0] sm:$0xf]
  %v59 = vld [vmem:[%s0 + $0xa4] sm:$0xf]
  %v60 = vld [vmem:[%s0 + $0xa8] sm:$0xf]
  %v61 = vld [vmem:[%s0 + $0xac] sm:$0xf]
  %v62 = vld [vmem:[%s0 + $0xb0] sm:$0xf]
  %v63 = vld [vmem:[%s0 + $0xb4] sm:$0xf]
  %v64 = vld [vmem:[%s0 + $0xb8] sm:$0xf]
  %v65 = vld [vmem:[%s0 + $0xbc] sm:$0xf]
  %v66 = vld [vmem:[%s0 + $0xc0] sm:$0xf]
  %v67 = vld [vmem:[%s0 + $0xc4] sm:$0xf]
  %v68 = vld [vmem:[%s0 + $0xc8] sm:$0xf]
  %v69 = vld [vmem:[%s0 + $0xcc] sm:$0xf]
  %v70 = vld [vmem:[%s0 + $0xd0] sm:$0xf]
  %v71 = vld [vmem:[%s0 + $0xd4] sm:$0xf]
  %v72 = vld [vmem:[%s0 + $0xd8] sm:$0xf]
  %v73 = vld [vmem:[%s0 + $0xdc] sm:$0xf]
  %v74 = vld [vmem:[%s0 + $0xe0] sm:$0xf]
  %v75 = vld [vmem:[%s0 + $0xe4] sm:$0xf]
  %v76 = vld [vmem:[%s0 + $0xe8] sm:$0xf]
  %v77 = vld [vmem:[%s0 + $0xec] sm:$0xf]
  %v78 = vld [vmem:[%s0 + $0xf0] sm:$0xf]
  %v79 = vld [vmem:[%s0 + $0xf4] sm:$0xf]
  %v80 = vld [vmem:[%s0 + $0xf8] sm:$0xf]
  %v81 = vld [vmem:[%s0 + $0xfc] sm:$0xf]
  %v82 = vld [vmem:[%s1] sm:$0xf]
  %v147 = vunpack.c.l.b16 %v18
  %v148 = vunpack.c.l.b16 %v19
  %v149 = vunpack.c.l.b16 %v20
  %v150 = vunpack.c.l.b16 %v21
  %v151 = vunpack.c.l.b16 %v22
  %v152 = vunpack.c.l.b16 %v23
  %v153 = vunpack.c.l.b16 %v24
  %v154 = vunpack.c.l.b16 %v25
  %v155 = vunpack.c.l.b16 %v26
  %v156 = vunpack.c.l.b16 %v27
  %v157 = vunpack.c.l.b16 %v28
  %v158 = vunpack.c.l.b16 %v29
  %v159 = vunpack.c.l.b16 %v30
  %v160 = vunpack.c.l.b16 %v31
  %v161 = vunpack.c.l.b16 %v32
  %v162 = vunpack.c.l.b16 %v33
  %v163 = vunpack.c.l.b16 %v34
  %v164 = vunpack.c.l.b16 %v35
  %v165 = vunpack.c.l.b16 %v36
  %v166 = vunpack.c.l.b16 %v37
  %v167 = vunpack.c.l.b16 %v38
  %v168 = vunpack.c.l.b16 %v39
  %v169 = vunpack.c.l.b16 %v40
  %v170 = vunpack.c.l.b16 %v41
  %v171 = vunpack.c.l.b16 %v42
  %v172 = vunpack.c.l.b16 %v43
  %v173 = vunpack.c.l.b16 %v44
  %v174 = vunpack.c.l.b16 %v45
  %v175 = vunpack.c.l.b16 %v46
  %v176 = vunpack.c.l.b16 %v47
  %v177 = vunpack.c.l.b16 %v48
  %v178 = vunpack.c.l.b16 %v49
  %v179 = vunpack.c.l.b16 %v50
  %v180 = vunpack.c.l.b16 %v51
  %v181 = vunpack.c.l.b16 %v52
  %v182 = vunpack.c.l.b16 %v53
  %v183 = vunpack.c.l.b16 %v54
  %v184 = vunpack.c.l.b16 %v55
  %v185 = vunpack.c.l.b16 %v56
  %v186 = vunpack.c.l.b16 %v57
  %v187 = vunpack.c.l.b16 %v58
  %v188 = vunpack.c.l.b16 %v59
  %v189 = vunpack.c.l.b16 %v60
  %v190 = vunpack.c.l.b16 %v61
  %v191 = vunpack.c.l.b16 %v62
  %v192 = vunpack.c.l.b16 %v63
  %v193 = vunpack.c.l.b16 %v64
  %v194 = vunpack.c.l.b16 %v65
  %v195 = vunpack.c.l.b16 %v66
  %v196 = vunpack.c.l.b16 %v67
  %v197 = vunpack.c.l.b16 %v68
  %v198 = vunpack.c.l.b16 %v69
  %v199 = vunpack.c.l.b16 %v70
  %v200 = vunpack.c.l.b16 %v71
  %v201 = vunpack.c.l.b16 %v72
  %v202 = vunpack.c.l.b16 %v73
  %v203 = vunpack.c.l.b16 %v74
  %v204 = vunpack.c.l.b16 %v75
  %v205 = vunpack.c.l.b16 %v76
  %v206 = vunpack.c.l.b16 %v77
  %v207 = vunpack.c.l.b16 %v78
  %v208 = vunpack.c.l.b16 %v79
  %v209 = vunpack.c.l.b16 %v80
  %v210 = vunpack.c.l.b16 %v81
  %v211 = vpack.c.b16 %v148, %v147
  %v212 = vpack.c.b16 %v150, %v149
  %v213 = vpack.c.b16 %v152, %v151
  %v214 = vpack.c.b16 %v154, %v153
  %v215 = vpack.c.b16 %v156, %v155
  %v216 = vpack.c.b16 %v158, %v157
  %v217 = vpack.c.b16 %v160, %v159
  %v218 = vpack.c.b16 %v162, %v161
  %v219 = vpack.c.b16 %v164, %v163
  %v220 = vpack.c.b16 %v166, %v165
  %v221 = vpack.c.b16 %v168, %v167
  %v222 = vpack.c.b16 %v170, %v169
  %v223 = vpack.c.b16 %v172, %v171
  %v224 = vpack.c.b16 %v174, %v173
  %v225 = vpack.c.b16 %v176, %v175
  %v226 = vpack.c.b16 %v178, %v177
  %v227 = vpack.c.b16 %v180, %v179
  %v228 = vpack.c.b16 %v182, %v181
  %v229 = vpack.c.b16 %v184, %v183
  %v230 = vpack.c.b16 %v186, %v185
  %v231 = vpack.c.b16 %v188, %v187
  %v232 = vpack.c.b16 %v190, %v189
  %v233 = vpack.c.b16 %v192, %v191
  %v234 = vpack.c.b16 %v194, %v193
  %v235 = vpack.c.b16 %v196, %v195
  %v236 = vpack.c.b16 %v198, %v197
  %v237 = vpack.c.b16 %v200, %v199
  %v238 = vpack.c.b16 %v202, %v201
  %v239 = vpack.c.b16 %v204, %v203
  %v240 = vpack.c.b16 %v206, %v205
  %v241 = vpack.c.b16 %v208, %v207
  %v242 = vpack.c.b16 %v210, %v209
  %vm243 = vcmask 64512
  %v245 = vsel %vm243, %v211, 0
  %v248 = vsel %vm243, %v212, 0
  %v251 = vsel %vm243, %v213, 0
  %v254 = vsel %vm243, %v214, 0
  %v257 = vsel %vm243, %v215, 0
  %v260 = vsel %vm243, %v216, 0
  %v263 = vsel %vm243, %v217, 0
  %v266 = vsel %vm243, %v218, 0
  %v269 = vsel %vm243, %v219, 0
  %v272 = vsel %vm243, %v220, 0
  %v275 = vsel %vm243, %v221, 0
  %v278 = vsel %vm243, %v222, 0
  %v281 = vsel %vm243, %v223, 0
  %v284 = vsel %vm243, %v224, 0
  %v287 = vsel %vm243, %v225, 0
  %v290 = vsel %vm243, %v226, 0
  %v293 = vsel %vm243, %v227, 0
  %v296 = vsel %vm243, %v228, 0
  %v299 = vsel %vm243, %v229, 0
  %v302 = vsel %vm243, %v230, 0
  %v305 = vsel %vm243, %v231, 0
  %v308 = vsel %vm243, %v232, 0
  %v311 = vsel %vm243, %v233, 0
  %v314 = vsel %vm243, %v234, 0
  %v317 = vsel %vm243, %v235, 0
  %v320 = vsel %vm243, %v236, 0
  %v323 = vsel %vm243, %v237, 0
  %v326 = vsel %vm243, %v238, 0
  %v329 = vsel %vm243, %v239, 0
  %v332 = vsel %vm243, %v240, 0
  %v335 = vsel %vm243, %v241, 0
  %v338 = vsel %vm243, %v242, 0
  %vm340 = vcmask 1043456
  %v342 = vsel %vm340, %v82, 0
  %344 = vmatpush.bf16.msra.mxu0 0
  %345 = vmatpush.bf16.msra.mxu0 0
  %346 = vmatpush.bf16.msra.mxu0 0
  %347 = vmatpush.bf16.msra.mxu0 0
  %348 = vmatpush.bf16.msra.mxu0 0
  %349 = vmatpush.bf16.msra.mxu0 0
  %350 = vmatpush.bf16.msra.mxu0 0
  %351 = vmatpush.bf16.msra.mxu0 %v342
  %352 = vmatmul.bf16.gmra.mxu0 %v245
  %v353 = vpop.f32.mrf.mxu0
  %v354 = vadd.f32 0.0, %v353
  %v355 = vpop.f32.mrf.mxu0
  %v356 = vadd.f32 0.0, %v355
  %357 = vmatmul.bf16.gmra.mxu0 %v248
  %v358 = vpop.f32.mrf.mxu0
  %v359 = vadd.f32 0.0, %v358
  %v360 = vpop.f32.mrf.mxu0
  %v361 = vadd.f32 0.0, %v360
  %362 = vmatmul.bf16.gmra.mxu0 %v251
  %v363 = vpop.f32.mrf.mxu0
  %v364 = vadd.f32 0.0, %v363
  %v365 = vpop.f32.mrf.mxu0
  %v366 = vadd.f32 0.0, %v365
  %367 = vmatmul.bf16.gmra.mxu0 %v254
  %v368 = vpop.f32.mrf.mxu0
  %v369 = vadd.f32 0.0, %v368
  %v370 = vpop.f32.mrf.mxu0
  %v371 = vadd.f32 0.0, %v370
  %372 = vmatmul.bf16.gmra.mxu0 %v257
  %v373 = vpop.f32.mrf.mxu0
  %v374 = vadd.f32 0.0, %v373
  %v375 = vpop.f32.mrf.mxu0
  %v376 = vadd.f32 0.0, %v375
  %377 = vmatmul.bf16.gmra.mxu0 %v260
  %v378 = vpop.f32.mrf.mxu0
  %v379 = vadd.f32 0.0, %v378
  %v380 = vpop.f32.mrf.mxu0
  %v381 = vadd.f32 0.0, %v380
  %382 = vmatmul.bf16.gmra.mxu0 %v263
  %v383 = vpop.f32.mrf.mxu0
  %v384 = vadd.f32 0.0, %v383
  %v385 = vpop.f32.mrf.mxu0
  %v386 = vadd.f32 0.0, %v385
  %387 = vmatmul.bf16.gmra.mxu0 %v266
  %v388 = vpop.f32.mrf.mxu0
  %v389 = vadd.f32 0.0, %v388
  %v390 = vpop.f32.mrf.mxu0
  %v391 = vadd.f32 0.0, %v390
  %392 = vmatmul.bf16.gmra.mxu0 %v269
  %v393 = vpop.f32.mrf.mxu0
  %v394 = vadd.f32 0.0, %v393
  %v395 = vpop.f32.mrf.mxu0
  %v396 = vadd.f32 0.0, %v395
  %397 = vmatmul.bf16.gmra.mxu0 %v272
  %v398 = vpop.f32.mrf.mxu0
  %v399 = vadd.f32 0.0, %v398
  %v400 = vpop.f32.mrf.mxu0
  %v401 = vadd.f32 0.0, %v400
  %402 = vmatmul.bf16.gmra.mxu0 %v275
  %v403 = vpop.f32.mrf.mxu0
  %v404 = vadd.f32 0.0, %v403
  %v405 = vpop.f32.mrf.mxu0
  %v406 = vadd.f32 0.0, %v405
  %407 = vmatmul.bf16.gmra.mxu0 %v278
  %v408 = vpop.f32.mrf.mxu0
  %v409 = vadd.f32 0.0, %v408
  %v410 = vpop.f32.mrf.mxu0
  %v411 = vadd.f32 0.0, %v410
  %412 = vmatmul.bf16.gmra.mxu0 %v281
  %v413 = vpop.f32.mrf.mxu0
  %v414 = vadd.f32 0.0, %v413
  %v415 = vpop.f32.mrf.mxu0
  %v416 = vadd.f32 0.0, %v415
  %417 = vmatmul.bf16.gmra.mxu0 %v284
  %v418 = vpop.f32.mrf.mxu0
  %v419 = vadd.f32 0.0, %v418
  %v420 = vpop.f32.mrf.mxu0
  %v421 = vadd.f32 0.0, %v420
  %422 = vmatmul.bf16.gmra.mxu0 %v287
  %v423 = vpop.f32.mrf.mxu0
  %v424 = vadd.f32 0.0, %v423
  %v425 = vpop.f32.mrf.mxu0
  %v426 = vadd.f32 0.0, %v425
  %427 = vmatmul.bf16.gmra.mxu0 %v290
  %v428 = vpop.f32.mrf.mxu0
  %v429 = vadd.f32 0.0, %v428
  %v430 = vpop.f32.mrf.mxu0
  %v431 = vadd.f32 0.0, %v430
  %432 = vmatmul.bf16.gmra.mxu0 %v293
  %v433 = vpop.f32.mrf.mxu0
  %v434 = vadd.f32 0.0, %v433
  %v435 = vpop.f32.mrf.mxu0
  %v436 = vadd.f32 0.0, %v435
  %437 = vmatmul.bf16.gmra.mxu0 %v296
  %v438 = vpop.f32.mrf.mxu0
  %v439 = vadd.f32 0.0, %v438
  %v440 = vpop.f32.mrf.mxu0
  %v441 = vadd.f32 0.0, %v440
  %442 = vmatmul.bf16.gmra.mxu0 %v299
  %v443 = vpop.f32.mrf.mxu0
  %v444 = vadd.f32 0.0, %v443
  %v445 = vpop.f32.mrf.mxu0
  %v446 = vadd.f32 0.0, %v445
  %447 = vmatmul.bf16.gmra.mxu0 %v302
  %v448 = vpop.f32.mrf.mxu0
  %v449 = vadd.f32 0.0, %v448
  %v450 = vpop.f32.mrf.mxu0
  %v451 = vadd.f32 0.0, %v450
  %452 = vmatmul.bf16.gmra.mxu0 %v305
  %v453 = vpop.f32.mrf.mxu0
  %v454 = vadd.f32 0.0, %v453
  %v455 = vpop.f32.mrf.mxu0
  %v456 = vadd.f32 0.0, %v455
  %457 = vmatmul.bf16.gmra.mxu0 %v308
  %v458 = vpop.f32.mrf.mxu0
  %v459 = vadd.f32 0.0, %v458
  %v460 = vpop.f32.mrf.mxu0
  %v461 = vadd.f32 0.0, %v460
  %462 = vmatmul.bf16.gmra.mxu0 %v311
  %v463 = vpop.f32.mrf.mxu0
  %v464 = vadd.f32 0.0, %v463
  %v465 = vpop.f32.mrf.mxu0
  %v466 = vadd.f32 0.0, %v465
  %467 = vmatmul.bf16.gmra.mxu0 %v314
  %v468 = vpop.f32.mrf.mxu0
  %v469 = vadd.f32 0.0, %v468
  %v470 = vpop.f32.mrf.mxu0
  %v471 = vadd.f32 0.0, %v470
  %472 = vmatmul.bf16.gmra.mxu0 %v317
  %v473 = vpop.f32.mrf.mxu0
  %v474 = vadd.f32 0.0, %v473
  %v475 = vpop.f32.mrf.mxu0
  %v476 = vadd.f32 0.0, %v475
  %477 = vmatmul.bf16.gmra.mxu0 %v320
  %v478 = vpop.f32.mrf.mxu0
  %v479 = vadd.f32 0.0, %v478
  %v480 = vpop.f32.mrf.mxu0
  %v481 = vadd.f32 0.0, %v480
  %482 = vmatmul.bf16.gmra.mxu0 %v323
  %v483 = vpop.f32.mrf.mxu0
  %v484 = vadd.f32 0.0, %v483
  %v485 = vpop.f32.mrf.mxu0
  %v486 = vadd.f32 0.0, %v485
  %487 = vmatmul.bf16.gmra.mxu0 %v326
  %v488 = vpop.f32.mrf.mxu0
  %v489 = vadd.f32 0.0, %v488
  %v490 = vpop.f32.mrf.mxu0
  %v491 = vadd.f32 0.0, %v490
  %492 = vmatmul.bf16.gmra.mxu0 %v329
  %v493 = vpop.f32.mrf.mxu0
  %v494 = vadd.f32 0.0, %v493
  %v495 = vpop.f32.mrf.mxu0
  %v496 = vadd.f32 0.0, %v495
  %497 = vmatmul.bf16.gmra.mxu0 %v332
  %v498 = vpop.f32.mrf.mxu0
  %v499 = vadd.f32 0.0, %v498
  %v500 = vpop.f32.mrf.mxu0
  %v501 = vadd.f32 0.0, %v500
  %502 = vmatmul.bf16.gmra.mxu0 %v335
  %v503 = vpop.f32.mrf.mxu0
  %v504 = vadd.f32 0.0, %v503
  %v505 = vpop.f32.mrf.mxu0
  %v506 = vadd.f32 0.0, %v505
  %507 = vmatmul.bf16.gmra.mxu0 %v338
  %v508 = vpop.f32.mrf.mxu0
  %v509 = vadd.f32 0.0, %v508
  %v510 = vpop.f32.mrf.mxu0
  %v511 = vadd.f32 0.0, %v510
  %512 = vdwg.mxu0
  %v513 = vld [vmem:[%s2] sm:$0x1]
  %v515 = vperm.slane %v513, 0
  %v517 = vmul.f32 %v354, %v515
  %v518 = vmul.f32 %v356, %v515
  %v519 = vmul.f32 %v359, %v515
  %v520 = vmul.f32 %v361, %v515
  %v521 = vmul.f32 %v364, %v515
  %v522 = vmul.f32 %v366, %v515
  %v523 = vmul.f32 %v369, %v515
  %v524 = vmul.f32 %v371, %v515
  %v525 = vmul.f32 %v374, %v515
  %v526 = vmul.f32 %v376, %v515
  %v527 = vmul.f32 %v379, %v515
  %v528 = vmul.f32 %v381, %v515
  %v529 = vmul.f32 %v384, %v515
  %v530 = vmul.f32 %v386, %v515
  %v531 = vmul.f32 %v389, %v515
  %v532 = vmul.f32 %v391, %v515
  %v533 = vmul.f32 %v394, %v515
  %v534 = vmul.f32 %v396, %v515
  %v535 = vmul.f32 %v399, %v515
  %v536 = vmul.f32 %v401, %v515
  %v537 = vmul.f32 %v404, %v515
  %v538 = vmul.f32 %v406, %v515
  %v539 = vmul.f32 %v409, %v515
  %v540 = vmul.f32 %v411, %v515
  %v541 = vmul.f32 %v414, %v515
  %v542 = vmul.f32 %v416, %v515
  %v543 = vmul.f32 %v419, %v515
  %v544 = vmul.f32 %v421, %v515
  %v545 = vmul.f32 %v424, %v515
  %v546 = vmul.f32 %v426, %v515
  %v547 = vmul.f32 %v429, %v515
  %v548 = vmul.f32 %v431, %v515
  %v549 = vmul.f32 %v434, %v515
  %v550 = vmul.f32 %v436, %v515
  %v551 = vmul.f32 %v439, %v515
  %v552 = vmul.f32 %v441, %v515
  %v553 = vmul.f32 %v444, %v515
  %v554 = vmul.f32 %v446, %v515
  %v555 = vmul.f32 %v449, %v515
  %v556 = vmul.f32 %v451, %v515
  %v557 = vmul.f32 %v454, %v515
  %v558 = vmul.f32 %v456, %v515
  %v559 = vmul.f32 %v459, %v515
  %v560 = vmul.f32 %v461, %v515
  %v561 = vmul.f32 %v464, %v515
  %v562 = vmul.f32 %v466, %v515
  %v563 = vmul.f32 %v469, %v515
  %v564 = vmul.f32 %v471, %v515
  %v565 = vmul.f32 %v474, %v515
  %v566 = vmul.f32 %v476, %v515
  %v567 = vmul.f32 %v479, %v515
  %v568 = vmul.f32 %v481, %v515
  %v569 = vmul.f32 %v484, %v515
  %v570 = vmul.f32 %v486, %v515
  %v571 = vmul.f32 %v489, %v515
  %v572 = vmul.f32 %v491, %v515
  %v573 = vmul.f32 %v494, %v515
  %v574 = vmul.f32 %v496, %v515
  %v575 = vmul.f32 %v499, %v515
  %v576 = vmul.f32 %v501, %v515
  %v577 = vmul.f32 %v504, %v515
  %v578 = vmul.f32 %v506, %v515
  %v579 = vmul.f32 %v509, %v515
  %v580 = vmul.f32 %v511, %v515
  %v581 = vld [vmem:[%s3] sm:$0x1]
  %v583 = vperm.slane %v581, 0
  %v585 = vadd.f32 %v517, %v583
  %v586 = vadd.f32 %v518, %v583
  %v587 = vadd.f32 %v519, %v583
  %v588 = vadd.f32 %v520, %v583
  %v589 = vadd.f32 %v521, %v583
  %v590 = vadd.f32 %v522, %v583
  %v591 = vadd.f32 %v523, %v583
  %v592 = vadd.f32 %v524, %v583
  %v593 = vadd.f32 %v525, %v583
  %v594 = vadd.f32 %v526, %v583
  %v595 = vadd.f32 %v527, %v583
  %v596 = vadd.f32 %v528, %v583
  %v597 = vadd.f32 %v529, %v583
  %v598 = vadd.f32 %v530, %v583
  %v599 = vadd.f32 %v531, %v583
  %v600 = vadd.f32 %v532, %v583
  %v601 = vadd.f32 %v533, %v583
  %v602 = vadd.f32 %v534, %v583
  %v603 = vadd.f32 %v535, %v583
  %v604 = vadd.f32 %v536, %v583
  %v605 = vadd.f32 %v537, %v583
  %v606 = vadd.f32 %v538, %v583
  %v607 = vadd.f32 %v539, %v583
  %v608 = vadd.f32 %v540, %v583
  %v609 = vadd.f32 %v541, %v583
  %v610 = vadd.f32 %v542, %v583
  %v611 = vadd.f32 %v543, %v583
  %v612 = vadd.f32 %v544, %v583
  %v613 = vadd.f32 %v545, %v583
  %v614 = vadd.f32 %v546, %v583
  %v615 = vadd.f32 %v547, %v583
  %v616 = vadd.f32 %v548, %v583
  %v617 = vadd.f32 %v549, %v583
  %v618 = vadd.f32 %v550, %v583
  %v619 = vadd.f32 %v551, %v583
  %v620 = vadd.f32 %v552, %v583
  %v621 = vadd.f32 %v553, %v583
  %v622 = vadd.f32 %v554, %v583
  %v623 = vadd.f32 %v555, %v583
  %v624 = vadd.f32 %v556, %v583
  %v625 = vadd.f32 %v557, %v583
  %v626 = vadd.f32 %v558, %v583
  %v627 = vadd.f32 %v559, %v583
  %v628 = vadd.f32 %v560, %v583
  %v629 = vadd.f32 %v561, %v583
  %v630 = vadd.f32 %v562, %v583
  %v631 = vadd.f32 %v563, %v583
  %v632 = vadd.f32 %v564, %v583
  %v633 = vadd.f32 %v565, %v583
  %v634 = vadd.f32 %v566, %v583
  %v635 = vadd.f32 %v567, %v583
  %v636 = vadd.f32 %v568, %v583
  %v637 = vadd.f32 %v569, %v583
  %v638 = vadd.f32 %v570, %v583
  %v639 = vadd.f32 %v571, %v583
  %v640 = vadd.f32 %v572, %v583
  %v641 = vadd.f32 %v573, %v583
  %v642 = vadd.f32 %v574, %v583
  %v643 = vadd.f32 %v575, %v583
  %v644 = vadd.f32 %v576, %v583
  %v645 = vadd.f32 %v577, %v583
  %v646 = vadd.f32 %v578, %v583
  %v647 = vadd.f32 %v579, %v583
  %v648 = vadd.f32 %v580, %v583
  %v649 = vxor.u32 %v585, 2147483648
  %v650 = vxor.u32 %v586, 2147483648
  %v651 = vxor.u32 %v587, 2147483648
  %v652 = vxor.u32 %v588, 2147483648
  %v653 = vxor.u32 %v589, 2147483648
  %v654 = vxor.u32 %v590, 2147483648
  %v655 = vxor.u32 %v591, 2147483648
  %v656 = vxor.u32 %v592, 2147483648
  %v657 = vxor.u32 %v593, 2147483648
  %v658 = vxor.u32 %v594, 2147483648
  %v659 = vxor.u32 %v595, 2147483648
  %v660 = vxor.u32 %v596, 2147483648
  %v661 = vxor.u32 %v597, 2147483648
  %v662 = vxor.u32 %v598, 2147483648
  %v663 = vxor.u32 %v599, 2147483648
  %v664 = vxor.u32 %v600, 2147483648
  %v665 = vxor.u32 %v601, 2147483648
  %v666 = vxor.u32 %v602, 2147483648
  %v667 = vxor.u32 %v603, 2147483648
  %v668 = vxor.u32 %v604, 2147483648
  %v669 = vxor.u32 %v605, 2147483648
  %v670 = vxor.u32 %v606, 2147483648
  %v671 = vxor.u32 %v607, 2147483648
  %v672 = vxor.u32 %v608, 2147483648
  %v673 = vxor.u32 %v609, 2147483648
  %v674 = vxor.u32 %v610, 2147483648
  %v675 = vxor.u32 %v611, 2147483648
  %v676 = vxor.u32 %v612, 2147483648
  %v677 = vxor.u32 %v613, 2147483648
  %v678 = vxor.u32 %v614, 2147483648
  %v679 = vxor.u32 %v615, 2147483648
  %v680 = vxor.u32 %v616, 2147483648
  %v681 = vxor.u32 %v617, 2147483648
  %v682 = vxor.u32 %v618, 2147483648
  %v683 = vxor.u32 %v619, 2147483648
  %v684 = vxor.u32 %v620, 2147483648
  %v685 = vxor.u32 %v621, 2147483648
  %v686 = vxor.u32 %v622, 2147483648
  %v687 = vxor.u32 %v623, 2147483648
  %v688 = vxor.u32 %v624, 2147483648
  %v689 = vxor.u32 %v625, 2147483648
  %v690 = vxor.u32 %v626, 2147483648
  %v691 = vxor.u32 %v627, 2147483648
  %v692 = vxor.u32 %v628, 2147483648
  %v693 = vxor.u32 %v629, 2147483648
  %v694 = vxor.u32 %v630, 2147483648
  %v695 = vxor.u32 %v631, 2147483648
  %v696 = vxor.u32 %v632, 2147483648
  %v697 = vxor.u32 %v633, 2147483648
  %v698 = vxor.u32 %v634, 2147483648
  %v699 = vxor.u32 %v635, 2147483648
  %v700 = vxor.u32 %v636, 2147483648
  %v701 = vxor.u32 %v637, 2147483648
  %v702 = vxor.u32 %v638, 2147483648
  %v703 = vxor.u32 %v639, 2147483648
  %v704 = vxor.u32 %v640, 2147483648
  %v705 = vxor.u32 %v641, 2147483648
  %v706 = vxor.u32 %v642, 2147483648
  %v707 = vxor.u32 %v643, 2147483648
  %v708 = vxor.u32 %v644, 2147483648
  %v709 = vxor.u32 %v645, 2147483648
  %v710 = vxor.u32 %v646, 2147483648
  %v711 = vxor.u32 %v647, 2147483648
  %v712 = vxor.u32 %v648, 2147483648
  %v713 = vmul.f32 %v649, 1.442695
  %v714 = vpow.pop %v713
  %v715 = vmul.f32 %v650, 1.442695
  %v716 = vpow.pop %v715
  %v717 = vmul.f32 %v651, 1.442695
  %v718 = vpow.pop %v717
  %v719 = vmul.f32 %v652, 1.442695
  %v720 = vpow.pop %v719
  %v721 = vmul.f32 %v653, 1.442695
  %v722 = vpow.pop %v721
  %v723 = vmul.f32 %v654, 1.442695
  %v724 = vpow.pop %v723
  %v725 = vmul.f32 %v655, 1.442695
  %v726 = vpow.pop %v725
  %v727 = vmul.f32 %v656, 1.442695
  %v728 = vpow.pop %v727
  %v729 = vmul.f32 %v657, 1.442695
  %v730 = vpow.pop %v729
  %v731 = vmul.f32 %v658, 1.442695
  %v732 = vpow.pop %v731
  %v733 = vmul.f32 %v659, 1.442695
  %v734 = vpow.pop %v733
  %v735 = vmul.f32 %v660, 1.442695
  %v736 = vpow.pop %v735
  %v737 = vmul.f32 %v661, 1.442695
  %v738 = vpow.pop %v737
  %v739 = vmul.f32 %v662, 1.442695
  %v740 = vpow.pop %v739
  %v741 = vmul.f32 %v663, 1.442695
  %v742 = vpow.pop %v741
  %v743 = vmul.f32 %v664, 1.442695
  %v744 = vpow.pop %v743
  %v745 = vmul.f32 %v665, 1.442695
  %v746 = vpow.pop %v745
  %v747 = vmul.f32 %v666, 1.442695
  %v748 = vpow.pop %v747
  %v749 = vmul.f32 %v667, 1.442695
  %v750 = vpow.pop %v749
  %v751 = vmul.f32 %v668, 1.442695
  %v752 = vpow.pop %v751
  %v753 = vmul.f32 %v669, 1.442695
  %v754 = vpow.pop %v753
  %v755 = vmul.f32 %v670, 1.442695
  %v756 = vpow.pop %v755
  %v757 = vmul.f32 %v671, 1.442695
  %v758 = vpow.pop %v757
  %v759 = vmul.f32 %v672, 1.442695
  %v760 = vpow.pop %v759
  %v761 = vmul.f32 %v673, 1.442695
  %v762 = vpow.pop %v761
  %v763 = vmul.f32 %v674, 1.442695
  %v764 = vpow.pop %v763
  %v765 = vmul.f32 %v675, 1.442695
  %v766 = vpow.pop %v765
  %v767 = vmul.f32 %v676, 1.442695
  %v768 = vpow.pop %v767
  %v769 = vmul.f32 %v677, 1.442695
  %v770 = vpow.pop %v769
  %v771 = vmul.f32 %v678, 1.442695
  %v772 = vpow.pop %v771
  %v773 = vmul.f32 %v679, 1.442695
  %v774 = vpow.pop %v773
  %v775 = vmul.f32 %v680, 1.442695
  %v776 = vpow.pop %v775
  %v777 = vmul.f32 %v681, 1.442695
  %v778 = vpow.pop %v777
  %v779 = vmul.f32 %v682, 1.442695
  %v780 = vpow.pop %v779
  %v781 = vmul.f32 %v683, 1.442695
  %v782 = vpow.pop %v781
  %v783 = vmul.f32 %v684, 1.442695
  %v784 = vpow.pop %v783
  %v785 = vmul.f32 %v685, 1.442695
  %v786 = vpow.pop %v785
  %v787 = vmul.f32 %v686, 1.442695
  %v788 = vpow.pop %v787
  %v789 = vmul.f32 %v687, 1.442695
  %v790 = vpow.pop %v789
  %v791 = vmul.f32 %v688, 1.442695
  %v792 = vpow.pop %v791
  %v793 = vmul.f32 %v689, 1.442695
  %v794 = vpow.pop %v793
  %v795 = vmul.f32 %v690, 1.442695
  %v796 = vpow.pop %v795
  %v797 = vmul.f32 %v691, 1.442695
  %v798 = vpow.pop %v797
  %v799 = vmul.f32 %v692, 1.442695
  %v800 = vpow.pop %v799
  %v801 = vmul.f32 %v693, 1.442695
  %v802 = vpow.pop %v801
  %v803 = vmul.f32 %v694, 1.442695
  %v804 = vpow.pop %v803
  %v805 = vmul.f32 %v695, 1.442695
  %v806 = vpow.pop %v805
  %v807 = vmul.f32 %v696, 1.442695
  %v808 = vpow.pop %v807
  %v809 = vmul.f32 %v697, 1.442695
  %v810 = vpow.pop %v809
  %v811 = vmul.f32 %v698, 1.442695
  %v812 = vpow.pop %v811
  %v813 = vmul.f32 %v699, 1.442695
  %v814 = vpow.pop %v813
  %v815 = vmul.f32 %v700, 1.442695
  %v816 = vpow.pop %v815
  %v817 = vmul.f32 %v701, 1.442695
  %v818 = vpow.pop %v817
  %v819 = vmul.f32 %v702, 1.442695
  %v820 = vpow.pop %v819
  %v821 = vmul.f32 %v703, 1.442695
  %v822 = vpow.pop %v821
  %v823 = vmul.f32 %v704, 1.442695
  %v824 = vpow.pop %v823
  %v825 = vmul.f32 %v705, 1.442695
  %v826 = vpow.pop %v825
  %v827 = vmul.f32 %v706, 1.442695
  %v828 = vpow.pop %v827
  %v829 = vmul.f32 %v707, 1.442695
  %v830 = vpow.pop %v829
  %v831 = vmul.f32 %v708, 1.442695
  %v832 = vpow.pop %v831
  %v833 = vmul.f32 %v709, 1.442695
  %v834 = vpow.pop %v833
  %v835 = vmul.f32 %v710, 1.442695
  %v836 = vpow.pop %v835
  %v837 = vmul.f32 %v711, 1.442695
  %v838 = vpow.pop %v837
  %v839 = vmul.f32 %v712, 1.442695
  %v840 = vpow.pop %v839
  %v841 = vadd.f32 %v714, 1.0
  %v842 = vadd.f32 %v716, 1.0
  %v843 = vadd.f32 %v718, 1.0
  %v844 = vadd.f32 %v720, 1.0
  %v845 = vadd.f32 %v722, 1.0
  %v846 = vadd.f32 %v724, 1.0
  %v847 = vadd.f32 %v726, 1.0
  %v848 = vadd.f32 %v728, 1.0
  %v849 = vadd.f32 %v730, 1.0
  %v850 = vadd.f32 %v732, 1.0
  %v851 = vadd.f32 %v734, 1.0
  %v852 = vadd.f32 %v736, 1.0
  %v853 = vadd.f32 %v738, 1.0
  %v854 = vadd.f32 %v740, 1.0
  %v855 = vadd.f32 %v742, 1.0
  %v856 = vadd.f32 %v744, 1.0
  %v857 = vadd.f32 %v746, 1.0
  %v858 = vadd.f32 %v748, 1.0
  %v859 = vadd.f32 %v750, 1.0
  %v860 = vadd.f32 %v752, 1.0
  %v861 = vadd.f32 %v754, 1.0
  %v862 = vadd.f32 %v756, 1.0
  %v863 = vadd.f32 %v758, 1.0
  %v864 = vadd.f32 %v760, 1.0
  %v865 = vadd.f32 %v762, 1.0
  %v866 = vadd.f32 %v764, 1.0
  %v867 = vadd.f32 %v766, 1.0
  %v868 = vadd.f32 %v768, 1.0
  %v869 = vadd.f32 %v770, 1.0
  %v870 = vadd.f32 %v772, 1.0
  %v871 = vadd.f32 %v774, 1.0
  %v872 = vadd.f32 %v776, 1.0
  %v873 = vadd.f32 %v778, 1.0
  %v874 = vadd.f32 %v780, 1.0
  %v875 = vadd.f32 %v782, 1.0
  %v876 = vadd.f32 %v784, 1.0
  %v877 = vadd.f32 %v786, 1.0
  %v878 = vadd.f32 %v788, 1.0
  %v879 = vadd.f32 %v790, 1.0
  %v880 = vadd.f32 %v792, 1.0
  %v881 = vadd.f32 %v794, 1.0
  %v882 = vadd.f32 %v796, 1.0
  %v883 = vadd.f32 %v798, 1.0
  %v884 = vadd.f32 %v800, 1.0
  %v885 = vadd.f32 %v802, 1.0
  %v886 = vadd.f32 %v804, 1.0
  %v887 = vadd.f32 %v806, 1.0
  %v888 = vadd.f32 %v808, 1.0
  %v889 = vadd.f32 %v810, 1.0
  %v890 = vadd.f32 %v812, 1.0
  %v891 = vadd.f32 %v814, 1.0
  %v892 = vadd.f32 %v816, 1.0
  %v893 = vadd.f32 %v818, 1.0
  %v894 = vadd.f32 %v820, 1.0
  %v895 = vadd.f32 %v822, 1.0
  %v896 = vadd.f32 %v824, 1.0
  %v897 = vadd.f32 %v826, 1.0
  %v898 = vadd.f32 %v828, 1.0
  %v899 = vadd.f32 %v830, 1.0
  %v900 = vadd.f32 %v832, 1.0
  %v901 = vadd.f32 %v834, 1.0
  %v902 = vadd.f32 %v836, 1.0
  %v903 = vadd.f32 %v838, 1.0
  %v904 = vadd.f32 %v840, 1.0
  %v905 = vrcp.pop %v841
  %v906 = vmul.f32 %v841, %v905
  %v907 = vsub.f32 1.0, %v906
  %v908 = vmul.f32 %v905, %v907
  %v909 = vadd.f32 %v905, %v908
  %vm910 = vweird.f32 %v841
  %vm911 = vweird.f32 %v905
  %vm912 = vmor %vm910, %vm911
  %v913 = vsel %vm912, %v905, %v909
  %v914 = vand.u32 2147483647, %v841
  %vm915 = vcmp.eq.f32.partialorder %v914, 8.507059e+37
  %v916 = vand.u32 %v841, 2147483648
  %v917 = vor.u32 1.1754944e-38, %v916
  %v918 = vsel %vm915, %v917, %v913
  %v919 = vmul.f32 1.0, %v918
  %v920 = vrcp.pop %v842
  %v921 = vmul.f32 %v842, %v920
  %v922 = vsub.f32 1.0, %v921
  %v923 = vmul.f32 %v920, %v922
  %v924 = vadd.f32 %v920, %v923
  %vm925 = vweird.f32 %v842
  %vm926 = vweird.f32 %v920
  %vm927 = vmor %vm925, %vm926
  %v928 = vsel %vm927, %v920, %v924
  %v929 = vand.u32 2147483647, %v842
  %vm930 = vcmp.eq.f32.partialorder %v929, 8.507059e+37
  %v931 = vand.u32 %v842, 2147483648
  %v932 = vor.u32 1.1754944e-38, %v931
  %v933 = vsel %vm930, %v932, %v928
  %v934 = vmul.f32 1.0, %v933
  %v935 = vrcp.pop %v843
  %v936 = vmul.f32 %v843, %v935
  %v937 = vsub.f32 1.0, %v936
  %v938 = vmul.f32 %v935, %v937
  %v939 = vadd.f32 %v935, %v938
  %vm940 = vweird.f32 %v843
  %vm941 = vweird.f32 %v935
  %vm942 = vmor %vm940, %vm941
  %v943 = vsel %vm942, %v935, %v939
  %v944 = vand.u32 2147483647, %v843
  %vm945 = vcmp.eq.f32.partialorder %v944, 8.507059e+37
  %v946 = vand.u32 %v843, 2147483648
  %v947 = vor.u32 1.1754944e-38, %v946
  %v948 = vsel %vm945, %v947, %v943
  %v949 = vmul.f32 1.0, %v948
  %v950 = vrcp.pop %v844
  %v951 = vmul.f32 %v844, %v950
  %v952 = vsub.f32 1.0, %v951
  %v953 = vmul.f32 %v950, %v952
  %v954 = vadd.f32 %v950, %v953
  %vm955 = vweird.f32 %v844
  %vm956 = vweird.f32 %v950
  %vm957 = vmor %vm955, %vm956
  %v958 = vsel %vm957, %v950, %v954
  %v959 = vand.u32 2147483647, %v844
  %vm960 = vcmp.eq.f32.partialorder %v959, 8.507059e+37
  %v961 = vand.u32 %v844, 2147483648
  %v962 = vor.u32 1.1754944e-38, %v961
  %v963 = vsel %vm960, %v962, %v958
  %v964 = vmul.f32 1.0, %v963
  %v965 = vrcp.pop %v845
  %v966 = vmul.f32 %v845, %v965
  %v967 = vsub.f32 1.0, %v966
  %v968 = vmul.f32 %v965, %v967
  %v969 = vadd.f32 %v965, %v968
  %vm970 = vweird.f32 %v845
  %vm971 = vweird.f32 %v965
  %vm972 = vmor %vm970, %vm971
  %v973 = vsel %vm972, %v965, %v969
  %v974 = vand.u32 2147483647, %v845
  %vm975 = vcmp.eq.f32.partialorder %v974, 8.507059e+37
  %v976 = vand.u32 %v845, 2147483648
  %v977 = vor.u32 1.1754944e-38, %v976
  %v978 = vsel %vm975, %v977, %v973
  %v979 = vmul.f32 1.0, %v978
  %v980 = vrcp.pop %v846
  %v981 = vmul.f32 %v846, %v980
  %v982 = vsub.f32 1.0, %v981
  %v983 = vmul.f32 %v980, %v982
  %v984 = vadd.f32 %v980, %v983
  %vm985 = vweird.f32 %v846
  %vm986 = vweird.f32 %v980
  %vm987 = vmor %vm985, %vm986
  %v988 = vsel %vm987, %v980, %v984
  %v989 = vand.u32 2147483647, %v846
  %vm990 = vcmp.eq.f32.partialorder %v989, 8.507059e+37
  %v991 = vand.u32 %v846, 2147483648
  %v992 = vor.u32 1.1754944e-38, %v991
  %v993 = vsel %vm990, %v992, %v988
  %v994 = vmul.f32 1.0, %v993
  %v995 = vrcp.pop %v847
  %v996 = vmul.f32 %v847, %v995
  %v997 = vsub.f32 1.0, %v996
  %v998 = vmul.f32 %v995, %v997
  %v999 = vadd.f32 %v995, %v998
  %vm1000 = vweird.f32 %v847
  %vm1001 = vweird.f32 %v995
  %vm1002 = vmor %vm1000, %vm1001
  %v1003 = vsel %vm1002, %v995, %v999
  %v1004 = vand.u32 2147483647, %v847
  %vm1005 = vcmp.eq.f32.partialorder %v1004, 8.507059e+37
  %v1006 = vand.u32 %v847, 2147483648
  %v1007 = vor.u32 1.1754944e-38, %v1006
  %v1008 = vsel %vm1005, %v1007, %v1003
  %v1009 = vmul.f32 1.0, %v1008
  %v1010 = vrcp.pop %v848
  %v1011 = vmul.f32 %v848, %v1010
  %v1012 = vsub.f32 1.0, %v1011
  %v1013 = vmul.f32 %v1010, %v1012
  %v1014 = vadd.f32 %v1010, %v1013
  %vm1015 = vweird.f32 %v848
  %vm1016 = vweird.f32 %v1010
  %vm1017 = vmor %vm1015, %vm1016
  %v1018 = vsel %vm1017, %v1010, %v1014
  %v1019 = vand.u32 2147483647, %v848
  %vm1020 = vcmp.eq.f32.partialorder %v1019, 8.507059e+37
  %v1021 = vand.u32 %v848, 2147483648
  %v1022 = vor.u32 1.1754944e-38, %v1021
  %v1023 = vsel %vm1020, %v1022, %v1018
  %v1024 = vmul.f32 1.0, %v1023
  %v1025 = vrcp.pop %v849
  %v1026 = vmul.f32 %v849, %v1025
  %v1027 = vsub.f32 1.0, %v1026
  %v1028 = vmul.f32 %v1025, %v1027
  %v1029 = vadd.f32 %v1025, %v1028
  %vm1030 = vweird.f32 %v849
  %vm1031 = vweird.f32 %v1025
  %vm1032 = vmor %vm1030, %vm1031
  %v1033 = vsel %vm1032, %v1025, %v1029
  %v1034 = vand.u32 2147483647, %v849
  %vm1035 = vcmp.eq.f32.partialorder %v1034, 8.507059e+37
  %v1036 = vand.u32 %v849, 2147483648
  %v1037 = vor.u32 1.1754944e-38, %v1036
  %v1038 = vsel %vm1035, %v1037, %v1033
  %v1039 = vmul.f32 1.0, %v1038
  %v1040 = vrcp.pop %v850
  %v1041 = vmul.f32 %v850, %v1040
  %v1042 = vsub.f32 1.0, %v1041
  %v1043 = vmul.f32 %v1040, %v1042
  %v1044 = vadd.f32 %v1040, %v1043
  %vm1045 = vweird.f32 %v850
  %vm1046 = vweird.f32 %v1040
  %vm1047 = vmor %vm1045, %vm1046
  %v1048 = vsel %vm1047, %v1040, %v1044
  %v1049 = vand.u32 2147483647, %v850
  %vm1050 = vcmp.eq.f32.partialorder %v1049, 8.507059e+37
  %v1051 = vand.u32 %v850, 2147483648
  %v1052 = vor.u32 1.1754944e-38, %v1051
  %v1053 = vsel %vm1050, %v1052, %v1048
  %v1054 = vmul.f32 1.0, %v1053
  %v1055 = vrcp.pop %v851
  %v1056 = vmul.f32 %v851, %v1055
  %v1057 = vsub.f32 1.0, %v1056
  %v1058 = vmul.f32 %v1055, %v1057
  %v1059 = vadd.f32 %v1055, %v1058
  %vm1060 = vweird.f32 %v851
  %vm1061 = vweird.f32 %v1055
  %vm1062 = vmor %vm1060, %vm1061
  %v1063 = vsel %vm1062, %v1055, %v1059
  %v1064 = vand.u32 2147483647, %v851
  %vm1065 = vcmp.eq.f32.partialorder %v1064, 8.507059e+37
  %v1066 = vand.u32 %v851, 2147483648
  %v1067 = vor.u32 1.1754944e-38, %v1066
  %v1068 = vsel %vm1065, %v1067, %v1063
  %v1069 = vmul.f32 1.0, %v1068
  %v1070 = vrcp.pop %v852
  %v1071 = vmul.f32 %v852, %v1070
  %v1072 = vsub.f32 1.0, %v1071
  %v1073 = vmul.f32 %v1070, %v1072
  %v1074 = vadd.f32 %v1070, %v1073
  %vm1075 = vweird.f32 %v852
  %vm1076 = vweird.f32 %v1070
  %vm1077 = vmor %vm1075, %vm1076
  %v1078 = vsel %vm1077, %v1070, %v1074
  %v1079 = vand.u32 2147483647, %v852
  %vm1080 = vcmp.eq.f32.partialorder %v1079, 8.507059e+37
  %v1081 = vand.u32 %v852, 2147483648
  %v1082 = vor.u32 1.1754944e-38, %v1081
  %v1083 = vsel %vm1080, %v1082, %v1078
  %v1084 = vmul.f32 1.0, %v1083
  %v1085 = vrcp.pop %v853
  %v1086 = vmul.f32 %v853, %v1085
  %v1087 = vsub.f32 1.0, %v1086
  %v1088 = vmul.f32 %v1085, %v1087
  %v1089 = vadd.f32 %v1085, %v1088
  %vm1090 = vweird.f32 %v853
  %vm1091 = vweird.f32 %v1085
  %vm1092 = vmor %vm1090, %vm1091
  %v1093 = vsel %vm1092, %v1085, %v1089
  %v1094 = vand.u32 2147483647, %v853
  %vm1095 = vcmp.eq.f32.partialorder %v1094, 8.507059e+37
  %v1096 = vand.u32 %v853, 2147483648
  %v1097 = vor.u32 1.1754944e-38, %v1096
  %v1098 = vsel %vm1095, %v1097, %v1093
  %v1099 = vmul.f32 1.0, %v1098
  %v1100 = vrcp.pop %v854
  %v1101 = vmul.f32 %v854, %v1100
  %v1102 = vsub.f32 1.0, %v1101
  %v1103 = vmul.f32 %v1100, %v1102
  %v1104 = vadd.f32 %v1100, %v1103
  %vm1105 = vweird.f32 %v854
  %vm1106 = vweird.f32 %v1100
  %vm1107 = vmor %vm1105, %vm1106
  %v1108 = vsel %vm1107, %v1100, %v1104
  %v1109 = vand.u32 2147483647, %v854
  %vm1110 = vcmp.eq.f32.partialorder %v1109, 8.507059e+37
  %v1111 = vand.u32 %v854, 2147483648
  %v1112 = vor.u32 1.1754944e-38, %v1111
  %v1113 = vsel %vm1110, %v1112, %v1108
  %v1114 = vmul.f32 1.0, %v1113
  %v1115 = vrcp.pop %v855
  %v1116 = vmul.f32 %v855, %v1115
  %v1117 = vsub.f32 1.0, %v1116
  %v1118 = vmul.f32 %v1115, %v1117
  %v1119 = vadd.f32 %v1115, %v1118
  %vm1120 = vweird.f32 %v855
  %vm1121 = vweird.f32 %v1115
  %vm1122 = vmor %vm1120, %vm1121
  %v1123 = vsel %vm1122, %v1115, %v1119
  %v1124 = vand.u32 2147483647, %v855
  %vm1125 = vcmp.eq.f32.partialorder %v1124, 8.507059e+37
  %v1126 = vand.u32 %v855, 2147483648
  %v1127 = vor.u32 1.1754944e-38, %v1126
  %v1128 = vsel %vm1125, %v1127, %v1123
  %v1129 = vmul.f32 1.0, %v1128
  %v1130 = vrcp.pop %v856
  %v1131 = vmul.f32 %v856, %v1130
  %v1132 = vsub.f32 1.0, %v1131
  %v1133 = vmul.f32 %v1130, %v1132
  %v1134 = vadd.f32 %v1130, %v1133
  %vm1135 = vweird.f32 %v856
  %vm1136 = vweird.f32 %v1130
  %vm1137 = vmor %vm1135, %vm1136
  %v1138 = vsel %vm1137, %v1130, %v1134
  %v1139 = vand.u32 2147483647, %v856
  %vm1140 = vcmp.eq.f32.partialorder %v1139, 8.507059e+37
  %v1141 = vand.u32 %v856, 2147483648
  %v1142 = vor.u32 1.1754944e-38, %v1141
  %v1143 = vsel %vm1140, %v1142, %v1138
  %v1144 = vmul.f32 1.0, %v1143
  %v1145 = vrcp.pop %v857
  %v1146 = vmul.f32 %v857, %v1145
  %v1147 = vsub.f32 1.0, %v1146
  %v1148 = vmul.f32 %v1145, %v1147
  %v1149 = vadd.f32 %v1145, %v1148
  %vm1150 = vweird.f32 %v857
  %vm1151 = vweird.f32 %v1145
  %vm1152 = vmor %vm1150, %vm1151
  %v1153 = vsel %vm1152, %v1145, %v1149
  %v1154 = vand.u32 2147483647, %v857
  %vm1155 = vcmp.eq.f32.partialorder %v1154, 8.507059e+37
  %v1156 = vand.u32 %v857, 2147483648
  %v1157 = vor.u32 1.1754944e-38, %v1156
  %v1158 = vsel %vm1155, %v1157, %v1153
  %v1159 = vmul.f32 1.0, %v1158
  %v1160 = vrcp.pop %v858
  %v1161 = vmul.f32 %v858, %v1160
  %v1162 = vsub.f32 1.0, %v1161
  %v1163 = vmul.f32 %v1160, %v1162
  %v1164 = vadd.f32 %v1160, %v1163
  %vm1165 = vweird.f32 %v858
  %vm1166 = vweird.f32 %v1160
  %vm1167 = vmor %vm1165, %vm1166
  %v1168 = vsel %vm1167, %v1160, %v1164
  %v1169 = vand.u32 2147483647, %v858
  %vm1170 = vcmp.eq.f32.partialorder %v1169, 8.507059e+37
  %v1171 = vand.u32 %v858, 2147483648
  %v1172 = vor.u32 1.1754944e-38, %v1171
  %v1173 = vsel %vm1170, %v1172, %v1168
  %v1174 = vmul.f32 1.0, %v1173
  %v1175 = vrcp.pop %v859
  %v1176 = vmul.f32 %v859, %v1175
  %v1177 = vsub.f32 1.0, %v1176
  %v1178 = vmul.f32 %v1175, %v1177
  %v1179 = vadd.f32 %v1175, %v1178
  %vm1180 = vweird.f32 %v859
  %vm1181 = vweird.f32 %v1175
  %vm1182 = vmor %vm1180, %vm1181
  %v1183 = vsel %vm1182, %v1175, %v1179
  %v1184 = vand.u32 2147483647, %v859
  %vm1185 = vcmp.eq.f32.partialorder %v1184, 8.507059e+37
  %v1186 = vand.u32 %v859, 2147483648
  %v1187 = vor.u32 1.1754944e-38, %v1186
  %v1188 = vsel %vm1185, %v1187, %v1183
  %v1189 = vmul.f32 1.0, %v1188
  %v1190 = vrcp.pop %v860
  %v1191 = vmul.f32 %v860, %v1190
  %v1192 = vsub.f32 1.0, %v1191
  %v1193 = vmul.f32 %v1190, %v1192
  %v1194 = vadd.f32 %v1190, %v1193
  %vm1195 = vweird.f32 %v860
  %vm1196 = vweird.f32 %v1190
  %vm1197 = vmor %vm1195, %vm1196
  %v1198 = vsel %vm1197, %v1190, %v1194
  %v1199 = vand.u32 2147483647, %v860
  %vm1200 = vcmp.eq.f32.partialorder %v1199, 8.507059e+37
  %v1201 = vand.u32 %v860, 2147483648
  %v1202 = vor.u32 1.1754944e-38, %v1201
  %v1203 = vsel %vm1200, %v1202, %v1198
  %v1204 = vmul.f32 1.0, %v1203
  %v1205 = vrcp.pop %v861
  %v1206 = vmul.f32 %v861, %v1205
  %v1207 = vsub.f32 1.0, %v1206
  %v1208 = vmul.f32 %v1205, %v1207
  %v1209 = vadd.f32 %v1205, %v1208
  %vm1210 = vweird.f32 %v861
  %vm1211 = vweird.f32 %v1205
  %vm1212 = vmor %vm1210, %vm1211
  %v1213 = vsel %vm1212, %v1205, %v1209
  %v1214 = vand.u32 2147483647, %v861
  %vm1215 = vcmp.eq.f32.partialorder %v1214, 8.507059e+37
  %v1216 = vand.u32 %v861, 2147483648
  %v1217 = vor.u32 1.1754944e-38, %v1216
  %v1218 = vsel %vm1215, %v1217, %v1213
  %v1219 = vmul.f32 1.0, %v1218
  %v1220 = vrcp.pop %v862
  %v1221 = vmul.f32 %v862, %v1220
  %v1222 = vsub.f32 1.0, %v1221
  %v1223 = vmul.f32 %v1220, %v1222
  %v1224 = vadd.f32 %v1220, %v1223
  %vm1225 = vweird.f32 %v862
  %vm1226 = vweird.f32 %v1220
  %vm1227 = vmor %vm1225, %vm1226
  %v1228 = vsel %vm1227, %v1220, %v1224
  %v1229 = vand.u32 2147483647, %v862
  %vm1230 = vcmp.eq.f32.partialorder %v1229, 8.507059e+37
  %v1231 = vand.u32 %v862, 2147483648
  %v1232 = vor.u32 1.1754944e-38, %v1231
  %v1233 = vsel %vm1230, %v1232, %v1228
  %v1234 = vmul.f32 1.0, %v1233
  %v1235 = vrcp.pop %v863
  %v1236 = vmul.f32 %v863, %v1235
  %v1237 = vsub.f32 1.0, %v1236
  %v1238 = vmul.f32 %v1235, %v1237
  %v1239 = vadd.f32 %v1235, %v1238
  %vm1240 = vweird.f32 %v863
  %vm1241 = vweird.f32 %v1235
  %vm1242 = vmor %vm1240, %vm1241
  %v1243 = vsel %vm1242, %v1235, %v1239
  %v1244 = vand.u32 2147483647, %v863
  %vm1245 = vcmp.eq.f32.partialorder %v1244, 8.507059e+37
  %v1246 = vand.u32 %v863, 2147483648
  %v1247 = vor.u32 1.1754944e-38, %v1246
  %v1248 = vsel %vm1245, %v1247, %v1243
  %v1249 = vmul.f32 1.0, %v1248
  %v1250 = vrcp.pop %v864
  %v1251 = vmul.f32 %v864, %v1250
  %v1252 = vsub.f32 1.0, %v1251
  %v1253 = vmul.f32 %v1250, %v1252
  %v1254 = vadd.f32 %v1250, %v1253
  %vm1255 = vweird.f32 %v864
  %vm1256 = vweird.f32 %v1250
  %vm1257 = vmor %vm1255, %vm1256
  %v1258 = vsel %vm1257, %v1250, %v1254
  %v1259 = vand.u32 2147483647, %v864
  %vm1260 = vcmp.eq.f32.partialorder %v1259, 8.507059e+37
  %v1261 = vand.u32 %v864, 2147483648
  %v1262 = vor.u32 1.1754944e-38, %v1261
  %v1263 = vsel %vm1260, %v1262, %v1258
  %v1264 = vmul.f32 1.0, %v1263
  %v1265 = vrcp.pop %v865
  %v1266 = vmul.f32 %v865, %v1265
  %v1267 = vsub.f32 1.0, %v1266
  %v1268 = vmul.f32 %v1265, %v1267
  %v1269 = vadd.f32 %v1265, %v1268
  %vm1270 = vweird.f32 %v865
  %vm1271 = vweird.f32 %v1265
  %vm1272 = vmor %vm1270, %vm1271
  %v1273 = vsel %vm1272, %v1265, %v1269
  %v1274 = vand.u32 2147483647, %v865
  %vm1275 = vcmp.eq.f32.partialorder %v1274, 8.507059e+37
  %v1276 = vand.u32 %v865, 2147483648
  %v1277 = vor.u32 1.1754944e-38, %v1276
  %v1278 = vsel %vm1275, %v1277, %v1273
  %v1279 = vmul.f32 1.0, %v1278
  %v1280 = vrcp.pop %v866
  %v1281 = vmul.f32 %v866, %v1280
  %v1282 = vsub.f32 1.0, %v1281
  %v1283 = vmul.f32 %v1280, %v1282
  %v1284 = vadd.f32 %v1280, %v1283
  %vm1285 = vweird.f32 %v866
  %vm1286 = vweird.f32 %v1280
  %vm1287 = vmor %vm1285, %vm1286
  %v1288 = vsel %vm1287, %v1280, %v1284
  %v1289 = vand.u32 2147483647, %v866
  %vm1290 = vcmp.eq.f32.partialorder %v1289, 8.507059e+37
  %v1291 = vand.u32 %v866, 2147483648
  %v1292 = vor.u32 1.1754944e-38, %v1291
  %v1293 = vsel %vm1290, %v1292, %v1288
  %v1294 = vmul.f32 1.0, %v1293
  %v1295 = vrcp.pop %v867
  %v1296 = vmul.f32 %v867, %v1295
  %v1297 = vsub.f32 1.0, %v1296
  %v1298 = vmul.f32 %v1295, %v1297
  %v1299 = vadd.f32 %v1295, %v1298
  %vm1300 = vweird.f32 %v867
  %vm1301 = vweird.f32 %v1295
  %vm1302 = vmor %vm1300, %vm1301
  %v1303 = vsel %vm1302, %v1295, %v1299
  %v1304 = vand.u32 2147483647, %v867
  %vm1305 = vcmp.eq.f32.partialorder %v1304, 8.507059e+37
  %v1306 = vand.u32 %v867, 2147483648
  %v1307 = vor.u32 1.1754944e-38, %v1306
  %v1308 = vsel %vm1305, %v1307, %v1303
  %v1309 = vmul.f32 1.0, %v1308
  %v1310 = vrcp.pop %v868
  %v1311 = vmul.f32 %v868, %v1310
  %v1312 = vsub.f32 1.0, %v1311
  %v1313 = vmul.f32 %v1310, %v1312
  %v1314 = vadd.f32 %v1310, %v1313
  %vm1315 = vweird.f32 %v868
  %vm1316 = vweird.f32 %v1310
  %vm1317 = vmor %vm1315, %vm1316
  %v1318 = vsel %vm1317, %v1310, %v1314
  %v1319 = vand.u32 2147483647, %v868
  %vm1320 = vcmp.eq.f32.partialorder %v1319, 8.507059e+37
  %v1321 = vand.u32 %v868, 2147483648
  %v1322 = vor.u32 1.1754944e-38, %v1321
  %v1323 = vsel %vm1320, %v1322, %v1318
  %v1324 = vmul.f32 1.0, %v1323
  %v1325 = vrcp.pop %v869
  %v1326 = vmul.f32 %v869, %v1325
  %v1327 = vsub.f32 1.0, %v1326
  %v1328 = vmul.f32 %v1325, %v1327
  %v1329 = vadd.f32 %v1325, %v1328
  %vm1330 = vweird.f32 %v869
  %vm1331 = vweird.f32 %v1325
  %vm1332 = vmor %vm1330, %vm1331
  %v1333 = vsel %vm1332, %v1325, %v1329
  %v1334 = vand.u32 2147483647, %v869
  %vm1335 = vcmp.eq.f32.partialorder %v1334, 8.507059e+37
  %v1336 = vand.u32 %v869, 2147483648
  %v1337 = vor.u32 1.1754944e-38, %v1336
  %v1338 = vsel %vm1335, %v1337, %v1333
  %v1339 = vmul.f32 1.0, %v1338
  %v1340 = vrcp.pop %v870
  %v1341 = vmul.f32 %v870, %v1340
  %v1342 = vsub.f32 1.0, %v1341
  %v1343 = vmul.f32 %v1340, %v1342
  %v1344 = vadd.f32 %v1340, %v1343
  %vm1345 = vweird.f32 %v870
  %vm1346 = vweird.f32 %v1340
  %vm1347 = vmor %vm1345, %vm1346
  %v1348 = vsel %vm1347, %v1340, %v1344
  %v1349 = vand.u32 2147483647, %v870
  %vm1350 = vcmp.eq.f32.partialorder %v1349, 8.507059e+37
  %v1351 = vand.u32 %v870, 2147483648
  %v1352 = vor.u32 1.1754944e-38, %v1351
  %v1353 = vsel %vm1350, %v1352, %v1348
  %v1354 = vmul.f32 1.0, %v1353
  %v1355 = vrcp.pop %v871
  %v1356 = vmul.f32 %v871, %v1355
  %v1357 = vsub.f32 1.0, %v1356
  %v1358 = vmul.f32 %v1355, %v1357
  %v1359 = vadd.f32 %v1355, %v1358
  %vm1360 = vweird.f32 %v871
  %vm1361 = vweird.f32 %v1355
  %vm1362 = vmor %vm1360, %vm1361
  %v1363 = vsel %vm1362, %v1355, %v1359
  %v1364 = vand.u32 2147483647, %v871
  %vm1365 = vcmp.eq.f32.partialorder %v1364, 8.507059e+37
  %v1366 = vand.u32 %v871, 2147483648
  %v1367 = vor.u32 1.1754944e-38, %v1366
  %v1368 = vsel %vm1365, %v1367, %v1363
  %v1369 = vmul.f32 1.0, %v1368
  %v1370 = vrcp.pop %v872
  %v1371 = vmul.f32 %v872, %v1370
  %v1372 = vsub.f32 1.0, %v1371
  %v1373 = vmul.f32 %v1370, %v1372
  %v1374 = vadd.f32 %v1370, %v1373
  %vm1375 = vweird.f32 %v872
  %vm1376 = vweird.f32 %v1370
  %vm1377 = vmor %vm1375, %vm1376
  %v1378 = vsel %vm1377, %v1370, %v1374
  %v1379 = vand.u32 2147483647, %v872
  %vm1380 = vcmp.eq.f32.partialorder %v1379, 8.507059e+37
  %v1381 = vand.u32 %v872, 2147483648
  %v1382 = vor.u32 1.1754944e-38, %v1381
  %v1383 = vsel %vm1380, %v1382, %v1378
  %v1384 = vmul.f32 1.0, %v1383
  %v1385 = vrcp.pop %v873
  %v1386 = vmul.f32 %v873, %v1385
  %v1387 = vsub.f32 1.0, %v1386
  %v1388 = vmul.f32 %v1385, %v1387
  %v1389 = vadd.f32 %v1385, %v1388
  %vm1390 = vweird.f32 %v873
  %vm1391 = vweird.f32 %v1385
  %vm1392 = vmor %vm1390, %vm1391
  %v1393 = vsel %vm1392, %v1385, %v1389
  %v1394 = vand.u32 2147483647, %v873
  %vm1395 = vcmp.eq.f32.partialorder %v1394, 8.507059e+37
  %v1396 = vand.u32 %v873, 2147483648
  %v1397 = vor.u32 1.1754944e-38, %v1396
  %v1398 = vsel %vm1395, %v1397, %v1393
  %v1399 = vmul.f32 1.0, %v1398
  %v1400 = vrcp.pop %v874
  %v1401 = vmul.f32 %v874, %v1400
  %v1402 = vsub.f32 1.0, %v1401
  %v1403 = vmul.f32 %v1400, %v1402
  %v1404 = vadd.f32 %v1400, %v1403
  %vm1405 = vweird.f32 %v874
  %vm1406 = vweird.f32 %v1400
  %vm1407 = vmor %vm1405, %vm1406
  %v1408 = vsel %vm1407, %v1400, %v1404
  %v1409 = vand.u32 2147483647, %v874
  %vm1410 = vcmp.eq.f32.partialorder %v1409, 8.507059e+37
  %v1411 = vand.u32 %v874, 2147483648
  %v1412 = vor.u32 1.1754944e-38, %v1411
  %v1413 = vsel %vm1410, %v1412, %v1408
  %v1414 = vmul.f32 1.0, %v1413
  %v1415 = vrcp.pop %v875
  %v1416 = vmul.f32 %v875, %v1415
  %v1417 = vsub.f32 1.0, %v1416
  %v1418 = vmul.f32 %v1415, %v1417
  %v1419 = vadd.f32 %v1415, %v1418
  %vm1420 = vweird.f32 %v875
  %vm1421 = vweird.f32 %v1415
  %vm1422 = vmor %vm1420, %vm1421
  %v1423 = vsel %vm1422, %v1415, %v1419
  %v1424 = vand.u32 2147483647, %v875
  %vm1425 = vcmp.eq.f32.partialorder %v1424, 8.507059e+37
  %v1426 = vand.u32 %v875, 2147483648
  %v1427 = vor.u32 1.1754944e-38, %v1426
  %v1428 = vsel %vm1425, %v1427, %v1423
  %v1429 = vmul.f32 1.0, %v1428
  %v1430 = vrcp.pop %v876
  %v1431 = vmul.f32 %v876, %v1430
  %v1432 = vsub.f32 1.0, %v1431
  %v1433 = vmul.f32 %v1430, %v1432
  %v1434 = vadd.f32 %v1430, %v1433
  %vm1435 = vweird.f32 %v876
  %vm1436 = vweird.f32 %v1430
  %vm1437 = vmor %vm1435, %vm1436
  %v1438 = vsel %vm1437, %v1430, %v1434
  %v1439 = vand.u32 2147483647, %v876
  %vm1440 = vcmp.eq.f32.partialorder %v1439, 8.507059e+37
  %v1441 = vand.u32 %v876, 2147483648
  %v1442 = vor.u32 1.1754944e-38, %v1441
  %v1443 = vsel %vm1440, %v1442, %v1438
  %v1444 = vmul.f32 1.0, %v1443
  %v1445 = vrcp.pop %v877
  %v1446 = vmul.f32 %v877, %v1445
  %v1447 = vsub.f32 1.0, %v1446
  %v1448 = vmul.f32 %v1445, %v1447
  %v1449 = vadd.f32 %v1445, %v1448
  %vm1450 = vweird.f32 %v877
  %vm1451 = vweird.f32 %v1445
  %vm1452 = vmor %vm1450, %vm1451
  %v1453 = vsel %vm1452, %v1445, %v1449
  %v1454 = vand.u32 2147483647, %v877
  %vm1455 = vcmp.eq.f32.partialorder %v1454, 8.507059e+37
  %v1456 = vand.u32 %v877, 2147483648
  %v1457 = vor.u32 1.1754944e-38, %v1456
  %v1458 = vsel %vm1455, %v1457, %v1453
  %v1459 = vmul.f32 1.0, %v1458
  %v1460 = vrcp.pop %v878
  %v1461 = vmul.f32 %v878, %v1460
  %v1462 = vsub.f32 1.0, %v1461
  %v1463 = vmul.f32 %v1460, %v1462
  %v1464 = vadd.f32 %v1460, %v1463
  %vm1465 = vweird.f32 %v878
  %vm1466 = vweird.f32 %v1460
  %vm1467 = vmor %vm1465, %vm1466
  %v1468 = vsel %vm1467, %v1460, %v1464
  %v1469 = vand.u32 2147483647, %v878
  %vm1470 = vcmp.eq.f32.partialorder %v1469, 8.507059e+37
  %v1471 = vand.u32 %v878, 2147483648
  %v1472 = vor.u32 1.1754944e-38, %v1471
  %v1473 = vsel %vm1470, %v1472, %v1468
  %v1474 = vmul.f32 1.0, %v1473
  %v1475 = vrcp.pop %v879
  %v1476 = vmul.f32 %v879, %v1475
  %v1477 = vsub.f32 1.0, %v1476
  %v1478 = vmul.f32 %v1475, %v1477
  %v1479 = vadd.f32 %v1475, %v1478
  %vm1480 = vweird.f32 %v879
  %vm1481 = vweird.f32 %v1475
  %vm1482 = vmor %vm1480, %vm1481
  %v1483 = vsel %vm1482, %v1475, %v1479
  %v1484 = vand.u32 2147483647, %v879
  %vm1485 = vcmp.eq.f32.partialorder %v1484, 8.507059e+37
  %v1486 = vand.u32 %v879, 2147483648
  %v1487 = vor.u32 1.1754944e-38, %v1486
  %v1488 = vsel %vm1485, %v1487, %v1483
  %v1489 = vmul.f32 1.0, %v1488
  %v1490 = vrcp.pop %v880
  %v1491 = vmul.f32 %v880, %v1490
  %v1492 = vsub.f32 1.0, %v1491
  %v1493 = vmul.f32 %v1490, %v1492
  %v1494 = vadd.f32 %v1490, %v1493
  %vm1495 = vweird.f32 %v880
  %vm1496 = vweird.f32 %v1490
  %vm1497 = vmor %vm1495, %vm1496
  %v1498 = vsel %vm1497, %v1490, %v1494
  %v1499 = vand.u32 2147483647, %v880
  %vm1500 = vcmp.eq.f32.partialorder %v1499, 8.507059e+37
  %v1501 = vand.u32 %v880, 2147483648
  %v1502 = vor.u32 1.1754944e-38, %v1501
  %v1503 = vsel %vm1500, %v1502, %v1498
  %v1504 = vmul.f32 1.0, %v1503
  %v1505 = vrcp.pop %v881
  %v1506 = vmul.f32 %v881, %v1505
  %v1507 = vsub.f32 1.0, %v1506
  %v1508 = vmul.f32 %v1505, %v1507
  %v1509 = vadd.f32 %v1505, %v1508
  %vm1510 = vweird.f32 %v881
  %vm1511 = vweird.f32 %v1505
  %vm1512 = vmor %vm1510, %vm1511
  %v1513 = vsel %vm1512, %v1505, %v1509
  %v1514 = vand.u32 2147483647, %v881
  %vm1515 = vcmp.eq.f32.partialorder %v1514, 8.507059e+37
  %v1516 = vand.u32 %v881, 2147483648
  %v1517 = vor.u32 1.1754944e-38, %v1516
  %v1518 = vsel %vm1515, %v1517, %v1513
  %v1519 = vmul.f32 1.0, %v1518
  %v1520 = vrcp.pop %v882
  %v1521 = vmul.f32 %v882, %v1520
  %v1522 = vsub.f32 1.0, %v1521
  %v1523 = vmul.f32 %v1520, %v1522
  %v1524 = vadd.f32 %v1520, %v1523
  %vm1525 = vweird.f32 %v882
  %vm1526 = vweird.f32 %v1520
  %vm1527 = vmor %vm1525, %vm1526
  %v1528 = vsel %vm1527, %v1520, %v1524
  %v1529 = vand.u32 2147483647, %v882
  %vm1530 = vcmp.eq.f32.partialorder %v1529, 8.507059e+37
  %v1531 = vand.u32 %v882, 2147483648
  %v1532 = vor.u32 1.1754944e-38, %v1531
  %v1533 = vsel %vm1530, %v1532, %v1528
  %v1534 = vmul.f32 1.0, %v1533
  %v1535 = vrcp.pop %v883
  %v1536 = vmul.f32 %v883, %v1535
  %v1537 = vsub.f32 1.0, %v1536
  %v1538 = vmul.f32 %v1535, %v1537
  %v1539 = vadd.f32 %v1535, %v1538
  %vm1540 = vweird.f32 %v883
  %vm1541 = vweird.f32 %v1535
  %vm1542 = vmor %vm1540, %vm1541
  %v1543 = vsel %vm1542, %v1535, %v1539
  %v1544 = vand.u32 2147483647, %v883
  %vm1545 = vcmp.eq.f32.partialorder %v1544, 8.507059e+37
  %v1546 = vand.u32 %v883, 2147483648
  %v1547 = vor.u32 1.1754944e-38, %v1546
  %v1548 = vsel %vm1545, %v1547, %v1543
  %v1549 = vmul.f32 1.0, %v1548
  %v1550 = vrcp.pop %v884
  %v1551 = vmul.f32 %v884, %v1550
  %v1552 = vsub.f32 1.0, %v1551
  %v1553 = vmul.f32 %v1550, %v1552
  %v1554 = vadd.f32 %v1550, %v1553
  %vm1555 = vweird.f32 %v884
  %vm1556 = vweird.f32 %v1550
  %vm1557 = vmor %vm1555, %vm1556
  %v1558 = vsel %vm1557, %v1550, %v1554
  %v1559 = vand.u32 2147483647, %v884
  %vm1560 = vcmp.eq.f32.partialorder %v1559, 8.507059e+37
  %v1561 = vand.u32 %v884, 2147483648
  %v1562 = vor.u32 1.1754944e-38, %v1561
  %v1563 = vsel %vm1560, %v1562, %v1558
  %v1564 = vmul.f32 1.0, %v1563
  %v1565 = vrcp.pop %v885
  %v1566 = vmul.f32 %v885, %v1565
  %v1567 = vsub.f32 1.0, %v1566
  %v1568 = vmul.f32 %v1565, %v1567
  %v1569 = vadd.f32 %v1565, %v1568
  %vm1570 = vweird.f32 %v885
  %vm1571 = vweird.f32 %v1565
  %vm1572 = vmor %vm1570, %vm1571
  %v1573 = vsel %vm1572, %v1565, %v1569
  %v1574 = vand.u32 2147483647, %v885
  %vm1575 = vcmp.eq.f32.partialorder %v1574, 8.507059e+37
  %v1576 = vand.u32 %v885, 2147483648
  %v1577 = vor.u32 1.1754944e-38, %v1576
  %v1578 = vsel %vm1575, %v1577, %v1573
  %v1579 = vmul.f32 1.0, %v1578
  %v1580 = vrcp.pop %v886
  %v1581 = vmul.f32 %v886, %v1580
  %v1582 = vsub.f32 1.0, %v1581
  %v1583 = vmul.f32 %v1580, %v1582
  %v1584 = vadd.f32 %v1580, %v1583
  %vm1585 = vweird.f32 %v886
  %vm1586 = vweird.f32 %v1580
  %vm1587 = vmor %vm1585, %vm1586
  %v1588 = vsel %vm1587, %v1580, %v1584
  %v1589 = vand.u32 2147483647, %v886
  %vm1590 = vcmp.eq.f32.partialorder %v1589, 8.507059e+37
  %v1591 = vand.u32 %v886, 2147483648
  %v1592 = vor.u32 1.1754944e-38, %v1591
  %v1593 = vsel %vm1590, %v1592, %v1588
  %v1594 = vmul.f32 1.0, %v1593
  %v1595 = vrcp.pop %v887
  %v1596 = vmul.f32 %v887, %v1595
  %v1597 = vsub.f32 1.0, %v1596
  %v1598 = vmul.f32 %v1595, %v1597
  %v1599 = vadd.f32 %v1595, %v1598
  %vm1600 = vweird.f32 %v887
  %vm1601 = vweird.f32 %v1595
  %vm1602 = vmor %vm1600, %vm1601
  %v1603 = vsel %vm1602, %v1595, %v1599
  %v1604 = vand.u32 2147483647, %v887
  %vm1605 = vcmp.eq.f32.partialorder %v1604, 8.507059e+37
  %v1606 = vand.u32 %v887, 2147483648
  %v1607 = vor.u32 1.1754944e-38, %v1606
  %v1608 = vsel %vm1605, %v1607, %v1603
  %v1609 = vmul.f32 1.0, %v1608
  %v1610 = vrcp.pop %v888
  %v1611 = vmul.f32 %v888, %v1610
  %v1612 = vsub.f32 1.0, %v1611
  %v1613 = vmul.f32 %v1610, %v1612
  %v1614 = vadd.f32 %v1610, %v1613
  %vm1615 = vweird.f32 %v888
  %vm1616 = vweird.f32 %v1610
  %vm1617 = vmor %vm1615, %vm1616
  %v1618 = vsel %vm1617, %v1610, %v1614
  %v1619 = vand.u32 2147483647, %v888
  %vm1620 = vcmp.eq.f32.partialorder %v1619, 8.507059e+37
  %v1621 = vand.u32 %v888, 2147483648
  %v1622 = vor.u32 1.1754944e-38, %v1621
  %v1623 = vsel %vm1620, %v1622, %v1618
  %v1624 = vmul.f32 1.0, %v1623
  %v1625 = vrcp.pop %v889
  %v1626 = vmul.f32 %v889, %v1625
  %v1627 = vsub.f32 1.0, %v1626
  %v1628 = vmul.f32 %v1625, %v1627
  %v1629 = vadd.f32 %v1625, %v1628
  %vm1630 = vweird.f32 %v889
  %vm1631 = vweird.f32 %v1625
  %vm1632 = vmor %vm1630, %vm1631
  %v1633 = vsel %vm1632, %v1625, %v1629
  %v1634 = vand.u32 2147483647, %v889
  %vm1635 = vcmp.eq.f32.partialorder %v1634, 8.507059e+37
  %v1636 = vand.u32 %v889, 2147483648
  %v1637 = vor.u32 1.1754944e-38, %v1636
  %v1638 = vsel %vm1635, %v1637, %v1633
  %v1639 = vmul.f32 1.0, %v1638
  %v1640 = vrcp.pop %v890
  %v1641 = vmul.f32 %v890, %v1640
  %v1642 = vsub.f32 1.0, %v1641
  %v1643 = vmul.f32 %v1640, %v1642
  %v1644 = vadd.f32 %v1640, %v1643
  %vm1645 = vweird.f32 %v890
  %vm1646 = vweird.f32 %v1640
  %vm1647 = vmor %vm1645, %vm1646
  %v1648 = vsel %vm1647, %v1640, %v1644
  %v1649 = vand.u32 2147483647, %v890
  %vm1650 = vcmp.eq.f32.partialorder %v1649, 8.507059e+37
  %v1651 = vand.u32 %v890, 2147483648
  %v1652 = vor.u32 1.1754944e-38, %v1651
  %v1653 = vsel %vm1650, %v1652, %v1648
  %v1654 = vmul.f32 1.0, %v1653
  %v1655 = vrcp.pop %v891
  %v1656 = vmul.f32 %v891, %v1655
  %v1657 = vsub.f32 1.0, %v1656
  %v1658 = vmul.f32 %v1655, %v1657
  %v1659 = vadd.f32 %v1655, %v1658
  %vm1660 = vweird.f32 %v891
  %vm1661 = vweird.f32 %v1655
  %vm1662 = vmor %vm1660, %vm1661
  %v1663 = vsel %vm1662, %v1655, %v1659
  %v1664 = vand.u32 2147483647, %v891
  %vm1665 = vcmp.eq.f32.partialorder %v1664, 8.507059e+37
  %v1666 = vand.u32 %v891, 2147483648
  %v1667 = vor.u32 1.1754944e-38, %v1666
  %v1668 = vsel %vm1665, %v1667, %v1663
  %v1669 = vmul.f32 1.0, %v1668
  %v1670 = vrcp.pop %v892
  %v1671 = vmul.f32 %v892, %v1670
  %v1672 = vsub.f32 1.0, %v1671
  %v1673 = vmul.f32 %v1670, %v1672
  %v1674 = vadd.f32 %v1670, %v1673
  %vm1675 = vweird.f32 %v892
  %vm1676 = vweird.f32 %v1670
  %vm1677 = vmor %vm1675, %vm1676
  %v1678 = vsel %vm1677, %v1670, %v1674
  %v1679 = vand.u32 2147483647, %v892
  %vm1680 = vcmp.eq.f32.partialorder %v1679, 8.507059e+37
  %v1681 = vand.u32 %v892, 2147483648
  %v1682 = vor.u32 1.1754944e-38, %v1681
  %v1683 = vsel %vm1680, %v1682, %v1678
  %v1684 = vmul.f32 1.0, %v1683
  %v1685 = vrcp.pop %v893
  %v1686 = vmul.f32 %v893, %v1685
  %v1687 = vsub.f32 1.0, %v1686
  %v1688 = vmul.f32 %v1685, %v1687
  %v1689 = vadd.f32 %v1685, %v1688
  %vm1690 = vweird.f32 %v893
  %vm1691 = vweird.f32 %v1685
  %vm1692 = vmor %vm1690, %vm1691
  %v1693 = vsel %vm1692, %v1685, %v1689
  %v1694 = vand.u32 2147483647, %v893
  %vm1695 = vcmp.eq.f32.partialorder %v1694, 8.507059e+37
  %v1696 = vand.u32 %v893, 2147483648
  %v1697 = vor.u32 1.1754944e-38, %v1696
  %v1698 = vsel %vm1695, %v1697, %v1693
  %v1699 = vmul.f32 1.0, %v1698
  %v1700 = vrcp.pop %v894
  %v1701 = vmul.f32 %v894, %v1700
  %v1702 = vsub.f32 1.0, %v1701
  %v1703 = vmul.f32 %v1700, %v1702
  %v1704 = vadd.f32 %v1700, %v1703
  %vm1705 = vweird.f32 %v894
  %vm1706 = vweird.f32 %v1700
  %vm1707 = vmor %vm1705, %vm1706
  %v1708 = vsel %vm1707, %v1700, %v1704
  %v1709 = vand.u32 2147483647, %v894
  %vm1710 = vcmp.eq.f32.partialorder %v1709, 8.507059e+37
  %v1711 = vand.u32 %v894, 2147483648
  %v1712 = vor.u32 1.1754944e-38, %v1711
  %v1713 = vsel %vm1710, %v1712, %v1708
  %v1714 = vmul.f32 1.0, %v1713
  %v1715 = vrcp.pop %v895
  %v1716 = vmul.f32 %v895, %v1715
  %v1717 = vsub.f32 1.0, %v1716
  %v1718 = vmul.f32 %v1715, %v1717
  %v1719 = vadd.f32 %v1715, %v1718
  %vm1720 = vweird.f32 %v895
  %vm1721 = vweird.f32 %v1715
  %vm1722 = vmor %vm1720, %vm1721
  %v1723 = vsel %vm1722, %v1715, %v1719
  %v1724 = vand.u32 2147483647, %v895
  %vm1725 = vcmp.eq.f32.partialorder %v1724, 8.507059e+37
  %v1726 = vand.u32 %v895, 2147483648
  %v1727 = vor.u32 1.1754944e-38, %v1726
  %v1728 = vsel %vm1725, %v1727, %v1723
  %v1729 = vmul.f32 1.0, %v1728
  %v1730 = vrcp.pop %v896
  %v1731 = vmul.f32 %v896, %v1730
  %v1732 = vsub.f32 1.0, %v1731
  %v1733 = vmul.f32 %v1730, %v1732
  %v1734 = vadd.f32 %v1730, %v1733
  %vm1735 = vweird.f32 %v896
  %vm1736 = vweird.f32 %v1730
  %vm1737 = vmor %vm1735, %vm1736
  %v1738 = vsel %vm1737, %v1730, %v1734
  %v1739 = vand.u32 2147483647, %v896
  %vm1740 = vcmp.eq.f32.partialorder %v1739, 8.507059e+37
  %v1741 = vand.u32 %v896, 2147483648
  %v1742 = vor.u32 1.1754944e-38, %v1741
  %v1743 = vsel %vm1740, %v1742, %v1738
  %v1744 = vmul.f32 1.0, %v1743
  %v1745 = vrcp.pop %v897
  %v1746 = vmul.f32 %v897, %v1745
  %v1747 = vsub.f32 1.0, %v1746
  %v1748 = vmul.f32 %v1745, %v1747
  %v1749 = vadd.f32 %v1745, %v1748
  %vm1750 = vweird.f32 %v897
  %vm1751 = vweird.f32 %v1745
  %vm1752 = vmor %vm1750, %vm1751
  %v1753 = vsel %vm1752, %v1745, %v1749
  %v1754 = vand.u32 2147483647, %v897
  %vm1755 = vcmp.eq.f32.partialorder %v1754, 8.507059e+37
  %v1756 = vand.u32 %v897, 2147483648
  %v1757 = vor.u32 1.1754944e-38, %v1756
  %v1758 = vsel %vm1755, %v1757, %v1753
  %v1759 = vmul.f32 1.0, %v1758
  %v1760 = vrcp.pop %v898
  %v1761 = vmul.f32 %v898, %v1760
  %v1762 = vsub.f32 1.0, %v1761
  %v1763 = vmul.f32 %v1760, %v1762
  %v1764 = vadd.f32 %v1760, %v1763
  %vm1765 = vweird.f32 %v898
  %vm1766 = vweird.f32 %v1760
  %vm1767 = vmor %vm1765, %vm1766
  %v1768 = vsel %vm1767, %v1760, %v1764
  %v1769 = vand.u32 2147483647, %v898
  %vm1770 = vcmp.eq.f32.partialorder %v1769, 8.507059e+37
  %v1771 = vand.u32 %v898, 2147483648
  %v1772 = vor.u32 1.1754944e-38, %v1771
  %v1773 = vsel %vm1770, %v1772, %v1768
  %v1774 = vmul.f32 1.0, %v1773
  %v1775 = vrcp.pop %v899
  %v1776 = vmul.f32 %v899, %v1775
  %v1777 = vsub.f32 1.0, %v1776
  %v1778 = vmul.f32 %v1775, %v1777
  %v1779 = vadd.f32 %v1775, %v1778
  %vm1780 = vweird.f32 %v899
  %vm1781 = vweird.f32 %v1775
  %vm1782 = vmor %vm1780, %vm1781
  %v1783 = vsel %vm1782, %v1775, %v1779
  %v1784 = vand.u32 2147483647, %v899
  %vm1785 = vcmp.eq.f32.partialorder %v1784, 8.507059e+37
  %v1786 = vand.u32 %v899, 2147483648
  %v1787 = vor.u32 1.1754944e-38, %v1786
  %v1788 = vsel %vm1785, %v1787, %v1783
  %v1789 = vmul.f32 1.0, %v1788
  %v1790 = vrcp.pop %v900
  %v1791 = vmul.f32 %v900, %v1790
  %v1792 = vsub.f32 1.0, %v1791
  %v1793 = vmul.f32 %v1790, %v1792
  %v1794 = vadd.f32 %v1790, %v1793
  %vm1795 = vweird.f32 %v900
  %vm1796 = vweird.f32 %v1790
  %vm1797 = vmor %vm1795, %vm1796
  %v1798 = vsel %vm1797, %v1790, %v1794
  %v1799 = vand.u32 2147483647, %v900
  %vm1800 = vcmp.eq.f32.partialorder %v1799, 8.507059e+37
  %v1801 = vand.u32 %v900, 2147483648
  %v1802 = vor.u32 1.1754944e-38, %v1801
  %v1803 = vsel %vm1800, %v1802, %v1798
  %v1804 = vmul.f32 1.0, %v1803
  %v1805 = vrcp.pop %v901
  %v1806 = vmul.f32 %v901, %v1805
  %v1807 = vsub.f32 1.0, %v1806
  %v1808 = vmul.f32 %v1805, %v1807
  %v1809 = vadd.f32 %v1805, %v1808
  %vm1810 = vweird.f32 %v901
  %vm1811 = vweird.f32 %v1805
  %vm1812 = vmor %vm1810, %vm1811
  %v1813 = vsel %vm1812, %v1805, %v1809
  %v1814 = vand.u32 2147483647, %v901
  %vm1815 = vcmp.eq.f32.partialorder %v1814, 8.507059e+37
  %v1816 = vand.u32 %v901, 2147483648
  %v1817 = vor.u32 1.1754944e-38, %v1816
  %v1818 = vsel %vm1815, %v1817, %v1813
  %v1819 = vmul.f32 1.0, %v1818
  %v1820 = vrcp.pop %v902
  %v1821 = vmul.f32 %v902, %v1820
  %v1822 = vsub.f32 1.0, %v1821
  %v1823 = vmul.f32 %v1820, %v1822
  %v1824 = vadd.f32 %v1820, %v1823
  %vm1825 = vweird.f32 %v902
  %vm1826 = vweird.f32 %v1820
  %vm1827 = vmor %vm1825, %vm1826
  %v1828 = vsel %vm1827, %v1820, %v1824
  %v1829 = vand.u32 2147483647, %v902
  %vm1830 = vcmp.eq.f32.partialorder %v1829, 8.507059e+37
  %v1831 = vand.u32 %v902, 2147483648
  %v1832 = vor.u32 1.1754944e-38, %v1831
  %v1833 = vsel %vm1830, %v1832, %v1828
  %v1834 = vmul.f32 1.0, %v1833
  %v1835 = vrcp.pop %v903
  %v1836 = vmul.f32 %v903, %v1835
  %v1837 = vsub.f32 1.0, %v1836
  %v1838 = vmul.f32 %v1835, %v1837
  %v1839 = vadd.f32 %v1835, %v1838
  %vm1840 = vweird.f32 %v903
  %vm1841 = vweird.f32 %v1835
  %vm1842 = vmor %vm1840, %vm1841
  %v1843 = vsel %vm1842, %v1835, %v1839
  %v1844 = vand.u32 2147483647, %v903
  %vm1845 = vcmp.eq.f32.partialorder %v1844, 8.507059e+37
  %v1846 = vand.u32 %v903, 2147483648
  %v1847 = vor.u32 1.1754944e-38, %v1846
  %v1848 = vsel %vm1845, %v1847, %v1843
  %v1849 = vmul.f32 1.0, %v1848
  %v1850 = vrcp.pop %v904
  %v1851 = vmul.f32 %v904, %v1850
  %v1852 = vsub.f32 1.0, %v1851
  %v1853 = vmul.f32 %v1850, %v1852
  %v1854 = vadd.f32 %v1850, %v1853
  %vm1855 = vweird.f32 %v904
  %vm1856 = vweird.f32 %v1850
  %vm1857 = vmor %vm1855, %vm1856
  %v1858 = vsel %vm1857, %v1850, %v1854
  %v1859 = vand.u32 2147483647, %v904
  %vm1860 = vcmp.eq.f32.partialorder %v1859, 8.507059e+37
  %v1861 = vand.u32 %v904, 2147483648
  %v1862 = vor.u32 1.1754944e-38, %v1861
  %v1863 = vsel %vm1860, %v1862, %v1858
  %v1864 = vmul.f32 1.0, %v1863
  %v1865 = vmul.f32 %v585, %v919
  %v1866 = vmul.f32 %v586, %v934
  %v1867 = vmul.f32 %v587, %v949
  %v1868 = vmul.f32 %v588, %v964
  %v1869 = vmul.f32 %v589, %v979
  %v1870 = vmul.f32 %v590, %v994
  %v1871 = vmul.f32 %v591, %v1009
  %v1872 = vmul.f32 %v592, %v1024
  %v1873 = vmul.f32 %v593, %v1039
  %v1874 = vmul.f32 %v594, %v1054
  %v1875 = vmul.f32 %v595, %v1069
  %v1876 = vmul.f32 %v596, %v1084
  %v1877 = vmul.f32 %v597, %v1099
  %v1878 = vmul.f32 %v598, %v1114
  %v1879 = vmul.f32 %v599, %v1129
  %v1880 = vmul.f32 %v600, %v1144
  %v1881 = vmul.f32 %v601, %v1159
  %v1882 = vmul.f32 %v602, %v1174
  %v1883 = vmul.f32 %v603, %v1189
  %v1884 = vmul.f32 %v604, %v1204
  %v1885 = vmul.f32 %v605, %v1219
  %v1886 = vmul.f32 %v606, %v1234
  %v1887 = vmul.f32 %v607, %v1249
  %v1888 = vmul.f32 %v608, %v1264
  %v1889 = vmul.f32 %v609, %v1279
  %v1890 = vmul.f32 %v610, %v1294
  %v1891 = vmul.f32 %v611, %v1309
  %v1892 = vmul.f32 %v612, %v1324
  %v1893 = vmul.f32 %v613, %v1339
  %v1894 = vmul.f32 %v614, %v1354
  %v1895 = vmul.f32 %v615, %v1369
  %v1896 = vmul.f32 %v616, %v1384
  %v1897 = vmul.f32 %v617, %v1399
  %v1898 = vmul.f32 %v618, %v1414
  %v1899 = vmul.f32 %v619, %v1429
  %v1900 = vmul.f32 %v620, %v1444
  %v1901 = vmul.f32 %v621, %v1459
  %v1902 = vmul.f32 %v622, %v1474
  %v1903 = vmul.f32 %v623, %v1489
  %v1904 = vmul.f32 %v624, %v1504
  %v1905 = vmul.f32 %v625, %v1519
  %v1906 = vmul.f32 %v626, %v1534
  %v1907 = vmul.f32 %v627, %v1549
  %v1908 = vmul.f32 %v628, %v1564
  %v1909 = vmul.f32 %v629, %v1579
  %v1910 = vmul.f32 %v630, %v1594
  %v1911 = vmul.f32 %v631, %v1609
  %v1912 = vmul.f32 %v632, %v1624
  %v1913 = vmul.f32 %v633, %v1639
  %v1914 = vmul.f32 %v634, %v1654
  %v1915 = vmul.f32 %v635, %v1669
  %v1916 = vmul.f32 %v636, %v1684
  %v1917 = vmul.f32 %v637, %v1699
  %v1918 = vmul.f32 %v638, %v1714
  %v1919 = vmul.f32 %v639, %v1729
  %v1920 = vmul.f32 %v640, %v1744
  %v1921 = vmul.f32 %v641, %v1759
  %v1922 = vmul.f32 %v642, %v1774
  %v1923 = vmul.f32 %v643, %v1789
  %v1924 = vmul.f32 %v644, %v1804
  %v1925 = vmul.f32 %v645, %v1819
  %v1926 = vmul.f32 %v646, %v1834
  %v1927 = vmul.f32 %v647, %v1849
  %v1928 = vmul.f32 %v648, %v1864
  %vm1929 = vcmask 130048
  %1930 = vst.msk [vmem:[%s4] sm:$0xff] %vm1929, %v1865
  %1931 = vst.msk [vmem:[%s4 + $0x8] sm:$0xff] %vm1929, %v1866
  %1932 = vst.msk [vmem:[%s4 + $0x10] sm:$0xff] %vm1929, %v1867
  %1933 = vst.msk [vmem:[%s4 + $0x18] sm:$0xff] %vm1929, %v1868
  %1934 = vst.msk [vmem:[%s4 + $0x20] sm:$0xff] %vm1929, %v1869
  %1935 = vst.msk [vmem:[%s4 + $0x28] sm:$0xff] %vm1929, %v1870
  %1936 = vst.msk [vmem:[%s4 + $0x30] sm:$0xff] %vm1929, %v1871
  %1937 = vst.msk [vmem:[%s4 + $0x38] sm:$0xff] %vm1929, %v1872
  %1938 = vst.msk [vmem:[%s4 + $0x40] sm:$0xff] %vm1929, %v1873
  %1939 = vst.msk [vmem:[%s4 + $0x48] sm:$0xff] %vm1929, %v1874
  %1940 = vst.msk [vmem:[%s4 + $0x50] sm:$0xff] %vm1929, %v1875
  %1941 = vst.msk [vmem:[%s4 + $0x58] sm:$0xff] %vm1929, %v1876
  %1942 = vst.msk [vmem:[%s4 + $0x60] sm:$0xff] %vm1929, %v1877
  %1943 = vst.msk [vmem:[%s4 + $0x68] sm:$0xff] %vm1929, %v1878
  %1944 = vst.msk [vmem:[%s4 + $0x70] sm:$0xff] %vm1929, %v1879
  %1945 = vst.msk [vmem:[%s4 + $0x78] sm:$0xff] %vm1929, %v1880
  %1946 = vst.msk [vmem:[%s4 + $0x80] sm:$0xff] %vm1929, %v1881
  %1947 = vst.msk [vmem:[%s4 + $0x88] sm:$0xff] %vm1929, %v1882
  %1948 = vst.msk [vmem:[%s4 + $0x90] sm:$0xff] %vm1929, %v1883
  %1949 = vst.msk [vmem:[%s4 + $0x98] sm:$0xff] %vm1929, %v1884
  %1950 = vst.msk [vmem:[%s4 + $0xa0] sm:$0xff] %vm1929, %v1885
  %1951 = vst.msk [vmem:[%s4 + $0xa8] sm:$0xff] %vm1929, %v1886
  %1952 = vst.msk [vmem:[%s4 + $0xb0] sm:$0xff] %vm1929, %v1887
  %1953 = vst.msk [vmem:[%s4 + $0xb8] sm:$0xff] %vm1929, %v1888
  %1954 = vst.msk [vmem:[%s4 + $0xc0] sm:$0xff] %vm1929, %v1889
  %1955 = vst.msk [vmem:[%s4 + $0xc8] sm:$0xff] %vm1929, %v1890
  %1956 = vst.msk [vmem:[%s4 + $0xd0] sm:$0xff] %vm1929, %v1891
  %1957 = vst.msk [vmem:[%s4 + $0xd8] sm:$0xff] %vm1929, %v1892
  %1958 = vst.msk [vmem:[%s4 + $0xe0] sm:$0xff] %vm1929, %v1893
  %1959 = vst.msk [vmem:[%s4 + $0xe8] sm:$0xff] %vm1929, %v1894
  %1960 = vst.msk [vmem:[%s4 + $0xf0] sm:$0xff] %vm1929, %v1895
  %1961 = vst.msk [vmem:[%s4 + $0xf8] sm:$0xff] %vm1929, %v1896
  %1962 = vst.msk [vmem:[%s4 + $0x100] sm:$0xff] %vm1929, %v1897
  %1963 = vst.msk [vmem:[%s4 + $0x108] sm:$0xff] %vm1929, %v1898
  %1964 = vst.msk [vmem:[%s4 + $0x110] sm:$0xff] %vm1929, %v1899
  %1965 = vst.msk [vmem:[%s4 + $0x118] sm:$0xff] %vm1929, %v1900
  %1966 = vst.msk [vmem:[%s4 + $0x120] sm:$0xff] %vm1929, %v1901
  %1967 = vst.msk [vmem:[%s4 + $0x128] sm:$0xff] %vm1929, %v1902
  %1968 = vst.msk [vmem:[%s4 + $0x130] sm:$0xff] %vm1929, %v1903
  %1969 = vst.msk [vmem:[%s4 + $0x138] sm:$0xff] %vm1929, %v1904
  %1970 = vst.msk [vmem:[%s4 + $0x140] sm:$0xff] %vm1929, %v1905
  %1971 = vst.msk [vmem:[%s4 + $0x148] sm:$0xff] %vm1929, %v1906
  %1972 = vst.msk [vmem:[%s4 + $0x150] sm:$0xff] %vm1929, %v1907
  %1973 = vst.msk [vmem:[%s4 + $0x158] sm:$0xff] %vm1929, %v1908
  %1974 = vst.msk [vmem:[%s4 + $0x160] sm:$0xff] %vm1929, %v1909
  %1975 = vst.msk [vmem:[%s4 + $0x168] sm:$0xff] %vm1929, %v1910
  %1976 = vst.msk [vmem:[%s4 + $0x170] sm:$0xff] %vm1929, %v1911
  %1977 = vst.msk [vmem:[%s4 + $0x178] sm:$0xff] %vm1929, %v1912
  %1978 = vst.msk [vmem:[%s4 + $0x180] sm:$0xff] %vm1929, %v1913
  %1979 = vst.msk [vmem:[%s4 + $0x188] sm:$0xff] %vm1929, %v1914
  %1980 = vst.msk [vmem:[%s4 + $0x190] sm:$0xff] %vm1929, %v1915
  %1981 = vst.msk [vmem:[%s4 + $0x198] sm:$0xff] %vm1929, %v1916
  %1982 = vst.msk [vmem:[%s4 + $0x1a0] sm:$0xff] %vm1929, %v1917
  %1983 = vst.msk [vmem:[%s4 + $0x1a8] sm:$0xff] %vm1929, %v1918
  %1984 = vst.msk [vmem:[%s4 + $0x1b0] sm:$0xff] %vm1929, %v1919
  %1985 = vst.msk [vmem:[%s4 + $0x1b8] sm:$0xff] %vm1929, %v1920
  %1986 = vst.msk [vmem:[%s4 + $0x1c0] sm:$0xff] %vm1929, %v1921
  %1987 = vst.msk [vmem:[%s4 + $0x1c8] sm:$0xff] %vm1929, %v1922
  %1988 = vst.msk [vmem:[%s4 + $0x1d0] sm:$0xff] %vm1929, %v1923
  %1989 = vst.msk [vmem:[%s4 + $0x1d8] sm:$0xff] %vm1929, %v1924
  %1990 = vst.msk [vmem:[%s4 + $0x1e0] sm:$0xff] %vm1929, %v1925
  %1991 = vst.msk [vmem:[%s4 + $0x1e8] sm:$0xff] %vm1929, %v1926
  %1992 = vst.msk [vmem:[%s4 + $0x1f0] sm:$0xff] %vm1929, %v1927
  %1993 = vst.msk [vmem:[%s4 + $0x1f8] sm:$0xff] %vm1929, %v1928
  // Predicated region
  $region18: #{_lambda_.3} parent=0 // pred_check
    _
  $region19: #{_lambda_.3} parent=0 // pred_check_branch
    %1995 = sbr.rel (0) target = $region21
  $region20: #{_lambda_.3} parent=0 // pred_region
    _
  $region21: #{_lambda_.3} parent=0 // pred_fallthru
    _
  // Predicated region
  $region22: #{_lambda_.3} parent=0 // pred_check
    _
  $region23: #{_lambda_.3} parent=0 // pred_check_branch
    %1997 = sbr.rel (0) target = $region25
  $region24: #{_lambda_.3} parent=0 // pred_region
    _
  $region25: #{_lambda_.3} parent=0 // pred_fallthru
    _

// kernel: _lambda_.5
$region0: #{_lambda_.5}
  #allocation0 [shape = 'u32[]', space=smem, size = 0x4, offset = 0x4, fixed_abs, tag = 'smem constant byte address 0x4 - core index']
  #allocation1 [shape = 'u32[72,128]{1,0:T(1,128)}', space=vmem, size = 0x9000, scoped, tag = 'internal scratch']
  %s0 = inlined_call_operand.vmem [shape: bf16[2,256,16], index: 0, kind: input, shape index: {}]
  %s1 = inlined_call_operand.vmem [shape: bf16[2,1,16], index: 1, kind: input, shape index: {}]
  %s2 = inlined_call_operand.vmem [shape: bf16[16,8], index: 2, kind: input, shape index: {}]
  %s3 = inlined_call_operand.vmem [shape: f32[1,8], index: 3, kind: input, shape index: {}]
  %s4 = inlined_call_operand.vmem [shape: f32[1,8], index: 4, kind: input, shape index: {}]
  %s5 = inlined_call_operand.vmem [shape: f32[2,256,8], index: 5, kind: input, shape index: {}]
  %s6 = inlined_call_operand.vmem [shape: f32[2,256,8], index: 6, kind: output, shape index: {}]
  %s7 = sld [smem:[#allocation0]]
  $region57: #{_lambda_.5} parent=0
    _
  %s9 = ssub.s32 1, %s7
  %s10 = scalar_select 0, %s9, %s7
  loop: start=0, step=1, limit=4
  $region2: #{_lambda_.5} parent=0 // loop_pre_header
    _
  $region3: #{_lambda_.5} parent=0 // loop_header
    %s12 = sphi 0, %s16
    %p13 = scmp.ge.s32.totalorder %s12, 4
    %s19 = sphi 0, %s31
    %s20 = sphi 0, %s27
    %s21 = sphi 0, %s19
    %s22 = sphi 0, %s20
    %s23 = sphi 0, %s21
    %s24 = sphi 0, %s22
    %s36 = sphi 0, %s38
    %s39 = sphi 0, %s36
    %s40 = sphi 0, %s39
    %s56 = sphi 0, %s40
    %s62 = sphi 0, %s64
    %s65 = sphi 0, %s62
    %s66 = sphi 0, %s65
    %s82 = sphi 0, %s66
    %s86 = sphi 0, %s86
    %s88 = sphi 0, %s86
    %s89 = sphi 0, %s88
    %s103 = sphi 0, %s89
    %s107 = sphi 0, %s107
    %s109 = sphi 0, %s107
    %s110 = sphi 0, %s109
    %s124 = sphi 0, %s110
    %s128 = sphi 0, %s128
    %s130 = sphi 0, %s128
    %s131 = sphi 0, %s130
    %s145 = sphi 0, %s131
    %s153 = sphi 0, %s155
    %s156 = sphi 0, %s153
    %s157 = sphi 0, %s156
    %s173 = sphi 0, %s157
    %s181 = sphi 0, %s183
    %s184 = sphi 0, %s181
    %s185 = sphi 0, %s184
    %s201 = sphi 0, %s185
  $region4: #{_lambda_.5} parent=0 // loop_header_branch
    %15 = sbr.rel (%p13) target = $region8
  $region5: #{_lambda_.5} parent=0 // loop_body
    %s17 = ssub.s32 %s12, 1
    %s18 = ssub.s32 %s12, 2
    %s25 = sadd.s32 1, %s20
    %p26 = scmp.ge.s32.totalorder %s25, 1
    %s27 = scalar_select %p26, 0, %s25
    %s28 = sadd.s32 1, %s19
    %s29 = scalar_select %p26, %s28, %s19
    %p30 = scmp.ge.s32.totalorder %s29, 2
    %s31 = scalar_select %p30, 0, %s29
    %s32 = ssub.s32 %s19, %s31
    %s33 = ssub.s32 %s20, %s27
    %s34 = sor.u32 %s32, %s33
    %p35 = scmp.eq.s32.totalorder %s34, 0
    %s37 = sadd.s32 %s36, 1
    %s38 = scalar_select %p35, %s36, %s37
    %p41 = pneg %p35
    %p42 = scmp.eq.s32.totalorder %s12, 1
    %p43 = por %p41, %p42
    %p44 = scmp.ne.s32.totalorder %s36, %s39
    %p45 = scmp.eq.s32.totalorder %s12, 0
    %p46 = por %p44, %p45
    %p47 = scmp.ne.s32.totalorder %s36, %s39
    %p48 = scmp.eq.s32.totalorder %s17, 1
    %p49 = por %p47, %p48
    %p50 = scmp.ne.s32.totalorder %s39, %s40
    %p51 = scmp.eq.s32.totalorder %s17, 0
    %p52 = por %p50, %p51
    %p53 = scmp.ne.s32.totalorder %s39, %s40
    %p54 = scmp.eq.s32.totalorder %s18, 1
    %p55 = por %p53, %p54
    %p57 = scmp.ne.s32.totalorder %s40, %s56
    %p58 = scmp.eq.s32.totalorder %s18, 0
    %p59 = por %p57, %p58
    %s60 = ssub.s32 %s19, %s31
    %p61 = scmp.eq.s32.totalorder %s60, 0
    %s63 = sadd.s32 %s62, 1
    %s64 = scalar_select %p61, %s62, %s63
    %p67 = pneg %p61
    %p68 = scmp.eq.s32.totalorder %s12, 1
    %p69 = por %p67, %p68
    %p70 = scmp.ne.s32.totalorder %s62, %s65
    %p71 = scmp.eq.s32.totalorder %s12, 0
    %p72 = por %p70, %p71
    %p73 = scmp.ne.s32.totalorder %s62, %s65
    %p74 = scmp.eq.s32.totalorder %s17, 1
    %p75 = por %p73, %p74
    %p76 = scmp.ne.s32.totalorder %s65, %s66
    %p77 = scmp.eq.s32.totalorder %s17, 0
    %p78 = por %p76, %p77
    %p79 = scmp.ne.s32.totalorder %s65, %s66
    %p80 = scmp.eq.s32.totalorder %s18, 1
    %p81 = por %p79, %p80
    %p83 = scmp.ne.s32.totalorder %s66, %s82
    %p84 = scmp.eq.s32.totalorder %s18, 0
    %p85 = por %p83, %p84
    %s87 = sadd.s32 %s86, 1
    %p90 = scmp.eq.s32.totalorder %s12, 1
    %p91 = scmp.ne.s32.totalorder %s86, %s88
    %p92 = scmp.eq.s32.totalorder %s12, 0
    %p93 = por %p91, %p92
    %p94 = scmp.ne.s32.totalorder %s86, %s88
    %p95 = scmp.eq.s32.totalorder %s17, 1
    %p96 = por %p94, %p95
    %p97 = scmp.ne.s32.totalorder %s88, %s89
    %p98 = scmp.eq.s32.totalorder %s17, 0
    %p99 = por %p97, %p98
    %p100 = scmp.ne.s32.totalorder %s88, %s89
    %p101 = scmp.eq.s32.totalorder %s18, 1
    %p102 = por %p100, %p101
    %p104 = scmp.ne.s32.totalorder %s89, %s103
    %p105 = scmp.eq.s32.totalorder %s18, 0
    %p106 = por %p104, %p105
    %s108 = sadd.s32 %s107, 1
    %p111 = scmp.eq.s32.totalorder %s12, 1
    %p112 = scmp.ne.s32.totalorder %s107, %s109
    %p113 = scmp.eq.s32.totalorder %s12, 0
    %p114 = por %p112, %p113
    %p115 = scmp.ne.s32.totalorder %s107, %s109
    %p116 = scmp.eq.s32.totalorder %s17, 1
    %p117 = por %p115, %p116
    %p118 = scmp.ne.s32.totalorder %s109, %s110
    %p119 = scmp.eq.s32.totalorder %s17, 0
    %p120 = por %p118, %p119
    %p121 = scmp.ne.s32.totalorder %s109, %s110
    %p122 = scmp.eq.s32.totalorder %s18, 1
    %p123 = por %p121, %p122
    %p125 = scmp.ne.s32.totalorder %s110, %s124
    %p126 = scmp.eq.s32.totalorder %s18, 0
    %p127 = por %p125, %p126
    %s129 = sadd.s32 %s128, 1
    %p132 = scmp.eq.s32.totalorder %s12, 1
    %p133 = scmp.ne.s32.totalorder %s128, %s130
    %p134 = scmp.eq.s32.totalorder %s12, 0
    %p135 = por %p133, %p134
    %p136 = scmp.ne.s32.totalorder %s128, %s130
    %p137 = scmp.eq.s32.totalorder %s17, 1
    %p138 = por %p136, %p137
    %p139 = scmp.ne.s32.totalorder %s130, %s131
    %p140 = scmp.eq.s32.totalorder %s17, 0
    %p141 = por %p139, %p140
    %p142 = scmp.ne.s32.totalorder %s130, %s131
    %p143 = scmp.eq.s32.totalorder %s18, 1
    %p144 = por %p142, %p143
    %p146 = scmp.ne.s32.totalorder %s131, %s145
    %p147 = scmp.eq.s32.totalorder %s18, 0
    %p148 = por %p146, %p147
    %s149 = ssub.s32 %s19, %s31
    %s150 = ssub.s32 %s20, %s27
    %s151 = sor.u32 %s149, %s150
    %p152 = scmp.eq.s32.totalorder %s151, 0
    %s154 = sadd.s32 %s153, 1
    %s155 = scalar_select %p152, %s153, %s154
    %p158 = pneg %p152
    %p159 = scmp.eq.s32.totalorder %s12, 1
    %p160 = por %p158, %p159
    %p161 = scmp.ne.s32.totalorder %s153, %s156
    %p162 = scmp.eq.s32.totalorder %s12, 0
    %p163 = por %p161, %p162
    %p164 = scmp.ne.s32.totalorder %s153, %s156
    %p165 = scmp.eq.s32.totalorder %s17, 1
    %p166 = por %p164, %p165
    %p167 = scmp.ne.s32.totalorder %s156, %s157
    %p168 = scmp.eq.s32.totalorder %s17, 0
    %p169 = por %p167, %p168
    %p170 = scmp.ne.s32.totalorder %s156, %s157
    %p171 = scmp.eq.s32.totalorder %s18, 1
    %p172 = por %p170, %p171
    %p174 = scmp.ne.s32.totalorder %s157, %s173
    %p175 = scmp.eq.s32.totalorder %s18, 0
    %p176 = por %p174, %p175
    %s177 = ssub.s32 %s19, %s31
    %s178 = ssub.s32 %s20, %s27
    %s179 = sor.u32 %s177, %s178
    %p180 = scmp.eq.s32.totalorder %s179, 0
    %s182 = sadd.s32 %s181, 1
    %s183 = scalar_select %p180, %s181, %s182
    %p186 = pneg %p180
    %p187 = scmp.eq.s32.totalorder %s12, 1
    %p188 = por %p186, %p187
    %p189 = scmp.ne.s32.totalorder %s181, %s184
    %p190 = scmp.eq.s32.totalorder %s12, 0
    %p191 = por %p189, %p190
    %p192 = scmp.ne.s32.totalorder %s181, %s184
    %p193 = scmp.eq.s32.totalorder %s17, 1
    %p194 = por %p192, %p193
    %p195 = scmp.ne.s32.totalorder %s184, %s185
    %p196 = scmp.eq.s32.totalorder %s17, 0
    %p197 = por %p195, %p196
    %p198 = scmp.ne.s32.totalorder %s184, %s185
    %p199 = scmp.eq.s32.totalorder %s18, 1
    %p200 = por %p198, %p199
    %p202 = scmp.ne.s32.totalorder %s185, %s201
    %p203 = scmp.eq.s32.totalorder %s18, 0
    %p204 = por %p202, %p203
    %p205 = scmp.le.s32.totalorder 1, %s12
    %p206 = scmp.lt.s32.totalorder %s12, 3
    %p207 = pnand %p205, %p206
    %p208 = pneg %p207
    // Predicated region
    $region9: #{_lambda_.5} parent=5 // pred_check
      _
    $region10: #{_lambda_.5} parent=5 // pred_check_branch
      %210 = sbr.rel (%p207) target = $region12
    $region11: #{_lambda_.5} parent=5 // pred_region
      %s211 = ssub.s32 %s12, 1
      // Predicated region
      $region13: #{_lambda_.5} parent=11 // pred_check
        %p212 = pneg %p99
      $region14: #{_lambda_.5} parent=11 // pred_check_branch
        %214 = sbr.rel (%p212) target = $region16
      $region15: #{_lambda_.5} parent=11 // pred_region
        _
      $region16: #{_lambda_.5} parent=11 // pred_fallthru
        _
      // Predicated region
      $region17: #{_lambda_.5} parent=11 // pred_check
        %p215 = pneg %p120
      $region18: #{_lambda_.5} parent=11 // pred_check_branch
        %217 = sbr.rel (%p215) target = $region20
      $region19: #{_lambda_.5} parent=11 // pred_region
        _
      $region20: #{_lambda_.5} parent=11 // pred_fallthru
        _
      // Predicated region
      $region21: #{_lambda_.5} parent=11 // pred_check
        %p218 = pneg %p141
      $region22: #{_lambda_.5} parent=11 // pred_check_branch
        %220 = sbr.rel (%p218) target = $region24
      $region23: #{_lambda_.5} parent=11 // pred_region
        _
      $region24: #{_lambda_.5} parent=11 // pred_fallthru
        _
    $region12: #{_lambda_.5} parent=5 // pred_fallthru
      _
    %p221 = scmp.lt.s32.totalorder %s12, 2
    // Predicated region
    $region25: #{_lambda_.5} parent=5 // pred_check
      %p222 = pneg %p221
    $region26: #{_lambda_.5} parent=5 // pred_check_branch
      %224 = sbr.rel (%p222) target = $region28
    $region27: #{_lambda_.5} parent=5 // pred_region
      // Predicated region
      $region29: #{_lambda_.5} parent=27 // pred_check
        %p225 = pneg %p46
      $region30: #{_lambda_.5} parent=27 // pred_check_branch
        %227 = sbr.rel (%p225) target = $region32
      $region31: #{_lambda_.5} parent=27 // pred_region
        %s228 = smul.u32 32, %s20
        %p229 = scmp.lt.s32.totalorder %s19, 1
        %s230 = scalar_select %p229, %s19, 1
        %p231 = scmp.lt.s32.totalorder %s228, 31
        %s232 = scalar_select %p231, %s228, 31
        %s233 = smul.addr %s230, 32
        %s234 = sadd.s32 %s232, %s233
        %s235 = smul.addr %s234, 4
        %s236 = scalar_lea.vmem %s0, %s235
        %s237 = smul.u32 32, %s20
      $region32: #{_lambda_.5} parent=27 // pred_fallthru
        _
      // Predicated region
      $region33: #{_lambda_.5} parent=27 // pred_check
        %p238 = pneg %p72
      $region34: #{_lambda_.5} parent=27 // pred_check_branch
        %240 = sbr.rel (%p238) target = $region36
      $region35: #{_lambda_.5} parent=27 // pred_region
        %p241 = scmp.lt.s32.totalorder %s19, 1
        %s242 = scalar_select %p241, %s19, 1
        %s243 = scalar_lea.vmem %s1, %s242
      $region36: #{_lambda_.5} parent=27 // pred_fallthru
        _
      // Predicated region
      $region37: #{_lambda_.5} parent=27 // pred_check
        %p244 = pneg %p163
      $region38: #{_lambda_.5} parent=27 // pred_check_branch
        %246 = sbr.rel (%p244) target = $region40
      $region39: #{_lambda_.5} parent=27 // pred_region
        %s247 = smul.u32 32, %s20
        %p248 = scmp.lt.s32.totalorder %s19, 1
        %s249 = scalar_select %p248, %s19, 1
        %p250 = scmp.lt.s32.totalorder %s247, 31
        %s251 = scalar_select %p250, %s247, 31
        %s252 = smul.addr %s249, 32
        %s253 = sadd.s32 %s251, %s252
        %s254 = smul.addr %s253, 8
        %s255 = scalar_lea.vmem %s5, %s254
        %s256 = smul.u32 32, %s20
      $region40: #{_lambda_.5} parent=27 // pred_fallthru
        _
    $region28: #{_lambda_.5} parent=5 // pred_fallthru
      _
    %p257 = scmp.le.s32.totalorder 1, %s12
    %p258 = scmp.lt.s32.totalorder %s12, 3
    %p259 = pnand %p257, %p258
    %p260 = pneg %p259
    // Predicated region
    $region41: #{_lambda_.5} parent=5 // pred_check
      _
    $region42: #{_lambda_.5} parent=5 // pred_check_branch
      %262 = sbr.rel (%p259) target = $region44
    $region43: #{_lambda_.5} parent=5 // pred_region
      %s263 = ssub.s32 %s12, 1
      %s264 = smul.u32 32, %s22
      %p265 = scmp.lt.s32.totalorder %s21, 1
      %s266 = scalar_select %p265, %s21, 1
      %p267 = scmp.lt.s32.totalorder %s264, 31
      %s268 = scalar_select %p267, %s264, 31
      %s269 = smul.addr %s266, 32
      %s270 = sadd.s32 %s268, %s269
      %s271 = smul.addr %s270, 4
      %s272 = scalar_lea.vmem %s0, %s271
      %p273 = pneg %p52
      %p274 = pneg %p49
      %p275 = scmp.lt.s32.totalorder %s21, 1
      %s276 = scalar_select %p275, %s21, 1
      %s277 = scalar_lea.vmem %s1, %s276
      %p278 = pneg %p78
      %p279 = pneg %p75
      %p280 = pneg %p99
      %p281 = pneg %p96
      %p282 = pneg %p120
      %p283 = pneg %p117
      %p284 = pneg %p141
      %p285 = pneg %p138
      %s286 = smul.u32 32, %s22
      %p287 = scmp.lt.s32.totalorder %s21, 1
      %s288 = scalar_select %p287, %s21, 1
      %p289 = scmp.lt.s32.totalorder %s286, 31
      %s290 = scalar_select %p289, %s286, 31
      %s291 = smul.addr %s288, 32
      %s292 = sadd.s32 %s290, %s291
      %s293 = smul.addr %s292, 8
      %s294 = scalar_lea.vmem %s5, %s293
      %p295 = pneg %p169
      %p296 = pneg %p166
      %p297 = pneg %p197
      %p298 = pneg %p194
      %s299 = smul.u32 32, %s22
      %p300 = scmp.lt.s32.totalorder %s21, 1
      %s301 = scalar_select %p300, %s21, 1
      %p302 = scmp.lt.s32.totalorder %s299, 31
      %s303 = scalar_select %p302, %s299, 31
      %s304 = smul.addr %s301, 32
      %s305 = sadd.s32 %s303, %s304
      %s306 = smul.addr %s305, 8
      %s307 = scalar_lea.vmem %s6, %s306
      %s308 = smul.u32 32, %s22
      %p309 = scmp.lt.s32.totalorder %s21, 1
      %s310 = scalar_select %p309, %s21, 1
      %p311 = scmp.lt.s32.totalorder %s308, 31
      %s312 = scalar_select %p311, %s308, 31
      %s313 = smul.addr %s310, 32
      %s314 = sadd.s32 %s312, %s313
      %s315 = smul.addr %s314, 4
      %s316 = scalar_lea.vmem %s0, %s315
      %s317 = smul.u32 32, %s22
      %p318 = scmp.lt.s32.totalorder %s21, 1
      %s319 = scalar_select %p318, %s21, 1
      %s320 = scalar_lea.vmem %s1, %s319
      %s321 = smul.u32 32, %s22
      %p322 = scmp.lt.s32.totalorder %s21, 1
      %s323 = scalar_select %p322, %s21, 1
      %p324 = scmp.lt.s32.totalorder %s321, 31
      %s325 = scalar_select %p324, %s321, 31
      %s326 = smul.addr %s323, 32
      %s327 = sadd.s32 %s325, %s326
      %s328 = smul.addr %s327, 8
      %s329 = scalar_lea.vmem %s5, %s328
      %s330 = smul.u32 32, %s22
      %s331 = smul.u32 32, %s22
      %p332 = scmp.lt.s32.totalorder %s21, 1
      %s333 = scalar_select %p332, %s21, 1
      %p334 = scmp.lt.s32.totalorder %s331, 31
      %s335 = scalar_select %p334, %s331, 31
      %s336 = smul.addr %s333, 32
      %s337 = sadd.s32 %s335, %s336
      %s338 = smul.addr %s337, 8
      %s339 = scalar_lea.vmem %s6, %s338
      %s340 = smul.u32 32, %s22
      %v342 = vld [vmem:[%s316] sm:$0xf]
      %v343 = vld [vmem:[%s316 + $0x4] sm:$0xf]
      %v344 = vld [vmem:[%s316 + $0x8] sm:$0xf]
      %v345 = vld [vmem:[%s316 + $0xc] sm:$0xf]
      %v346 = vld [vmem:[%s316 + $0x10] sm:$0xf]
      %v347 = vld [vmem:[%s316 + $0x14] sm:$0xf]
      %v348 = vld [vmem:[%s316 + $0x18] sm:$0xf]
      %v349 = vld [vmem:[%s316 + $0x1c] sm:$0xf]
      %v350 = vld [vmem:[%s316 + $0x20] sm:$0xf]
      %v351 = vld [vmem:[%s316 + $0x24] sm:$0xf]
      %v352 = vld [vmem:[%s316 + $0x28] sm:$0xf]
      %v353 = vld [vmem:[%s316 + $0x2c] sm:$0xf]
      %v354 = vld [vmem:[%s316 + $0x30] sm:$0xf]
      %v355 = vld [vmem:[%s316 + $0x34] sm:$0xf]
      %v356 = vld [vmem:[%s316 + $0x38] sm:$0xf]
      %v357 = vld [vmem:[%s316 + $0x3c] sm:$0xf]
      %v358 = vld [vmem:[%s316 + $0x40] sm:$0xf]
      %v359 = vld [vmem:[%s316 + $0x44] sm:$0xf]
      %v360 = vld [vmem:[%s316 + $0x48] sm:$0xf]
      %v361 = vld [vmem:[%s316 + $0x4c] sm:$0xf]
      %v362 = vld [vmem:[%s316 + $0x50] sm:$0xf]
      %v363 = vld [vmem:[%s316 + $0x54] sm:$0xf]
      %v364 = vld [vmem:[%s316 + $0x58] sm:$0xf]
      %v365 = vld [vmem:[%s316 + $0x5c] sm:$0xf]
      %v366 = vld [vmem:[%s316 + $0x60] sm:$0xf]
      %v367 = vld [vmem:[%s316 + $0x64] sm:$0xf]
      %v368 = vld [vmem:[%s316 + $0x68] sm:$0xf]
      %v369 = vld [vmem:[%s316 + $0x6c] sm:$0xf]
      %v370 = vld [vmem:[%s316 + $0x70] sm:$0xf]
      %v371 = vld [vmem:[%s316 + $0x74] sm:$0xf]
      %v372 = vld [vmem:[%s316 + $0x78] sm:$0xf]
      %v373 = vld [vmem:[%s316 + $0x7c] sm:$0xf]
      %v374 = vld [vmem:[%s320] sm:$0x1]
      %v376 = vpack.i.b16 %v374, %v374
      %v378 = vperm.slane %v376, 0
      %v379 = vunpack.c.l.bf16 %v342
      %v380 = vunpack.c.l.bf16 %v343
      %v381 = vunpack.c.l.bf16 %v344
      %v382 = vunpack.c.l.bf16 %v345
      %v383 = vunpack.c.l.bf16 %v346
      %v384 = vunpack.c.l.bf16 %v347
      %v385 = vunpack.c.l.bf16 %v348
      %v386 = vunpack.c.l.bf16 %v349
      %v387 = vunpack.c.l.bf16 %v350
      %v388 = vunpack.c.l.bf16 %v351
      %v389 = vunpack.c.l.bf16 %v352
      %v390 = vunpack.c.l.bf16 %v353
      %v391 = vunpack.c.l.bf16 %v354
      %v392 = vunpack.c.l.bf16 %v355
      %v393 = vunpack.c.l.bf16 %v356
      %v394 = vunpack.c.l.bf16 %v357
      %v395 = vunpack.c.l.bf16 %v358
      %v396 = vunpack.c.l.bf16 %v359
      %v397 = vunpack.c.l.bf16 %v360
      %v398 = vunpack.c.l.bf16 %v361
      %v399 = vunpack.c.l.bf16 %v362
      %v400 = vunpack.c.l.bf16 %v363
      %v401 = vunpack.c.l.bf16 %v364
      %v402 = vunpack.c.l.bf16 %v365
      %v403 = vunpack.c.l.bf16 %v366
      %v404 = vunpack.c.l.bf16 %v367
      %v405 = vunpack.c.l.bf16 %v368
      %v406 = vunpack.c.l.bf16 %v369
      %v407 = vunpack.c.l.bf16 %v370
      %v408 = vunpack.c.l.bf16 %v371
      %v409 = vunpack.c.l.bf16 %v372
      %v410 = vunpack.c.l.bf16 %v373
      %v411 = vunpack.c.l.bf16 %v378
      %v412 = vmul.f32 %v379, %v411
      %v413 = vmul.f32 %v380, %v411
      %v414 = vmul.f32 %v381, %v411
      %v415 = vmul.f32 %v382, %v411
      %v416 = vmul.f32 %v383, %v411
      %v417 = vmul.f32 %v384, %v411
      %v418 = vmul.f32 %v385, %v411
      %v419 = vmul.f32 %v386, %v411
      %v420 = vmul.f32 %v387, %v411
      %v421 = vmul.f32 %v388, %v411
      %v422 = vmul.f32 %v389, %v411
      %v423 = vmul.f32 %v390, %v411
      %v424 = vmul.f32 %v391, %v411
      %v425 = vmul.f32 %v392, %v411
      %v426 = vmul.f32 %v393, %v411
      %v427 = vmul.f32 %v394, %v411
      %v428 = vmul.f32 %v395, %v411
      %v429 = vmul.f32 %v396, %v411
      %v430 = vmul.f32 %v397, %v411
      %v431 = vmul.f32 %v398, %v411
      %v432 = vmul.f32 %v399, %v411
      %v433 = vmul.f32 %v400, %v411
      %v434 = vmul.f32 %v401, %v411
      %v435 = vmul.f32 %v402, %v411
      %v436 = vmul.f32 %v403, %v411
      %v437 = vmul.f32 %v404, %v411
      %v438 = vmul.f32 %v405, %v411
      %v439 = vmul.f32 %v406, %v411
      %v440 = vmul.f32 %v407, %v411
      %v441 = vmul.f32 %v408, %v411
      %v442 = vmul.f32 %v409, %v411
      %v443 = vmul.f32 %v410, %v411
      %v444 = vpack.c.bf16 %v413, %v412
      %v445 = vpack.c.bf16 %v415, %v414
      %v446 = vpack.c.bf16 %v417, %v416
      %v447 = vpack.c.bf16 %v419, %v418
      %v448 = vpack.c.bf16 %v421, %v420
      %v449 = vpack.c.bf16 %v423, %v422
      %v450 = vpack.c.bf16 %v425, %v424
      %v451 = vpack.c.bf16 %v427, %v426
      %v452 = vpack.c.bf16 %v429, %v428
      %v453 = vpack.c.bf16 %v431, %v430
      %v454 = vpack.c.bf16 %v433, %v432
      %v455 = vpack.c.bf16 %v435, %v434
      %v456 = vpack.c.bf16 %v437, %v436
      %v457 = vpack.c.bf16 %v439, %v438
      %v458 = vpack.c.bf16 %v441, %v440
      %v459 = vpack.c.bf16 %v443, %v442
      %v460 = vld [vmem:[%s2] sm:$0xf]
      %v461 = vld [vmem:[%s2 + $0x4] sm:$0xf]
      %v464 = vunpack.c.l.b16 %v460
      %v465 = vunpack.c.l.b16 %v461
      %v466 = vpack.c.b16 %v465, %v464
      %vm468 = vcmask 130048
      %v470 = vsel %vm468, %v444, 0
      %v473 = vsel %vm468, %v445, 0
      %v476 = vsel %vm468, %v446, 0
      %v479 = vsel %vm468, %v447, 0
      %v482 = vsel %vm468, %v448, 0
      %v485 = vsel %vm468, %v449, 0
      %v488 = vsel %vm468, %v450, 0
      %v491 = vsel %vm468, %v451, 0
      %v494 = vsel %vm468, %v452, 0
      %v497 = vsel %vm468, %v453, 0
      %v500 = vsel %vm468, %v454, 0
      %v503 = vsel %vm468, %v455, 0
      %v506 = vsel %vm468, %v456, 0
      %v509 = vsel %vm468, %v457, 0
      %v512 = vsel %vm468, %v458, 0
      %v515 = vsel %vm468, %v459, 0
      %517 = vmatpush.bf16.msra.mxu0 0
      %518 = vmatpush.bf16.msra.mxu0 0
      %519 = vmatpush.bf16.msra.mxu0 0
      %520 = vmatpush.bf16.msra.mxu0 0
      %521 = vmatpush.bf16.msra.mxu0 0
      %522 = vmatpush.bf16.msra.mxu0 0
      %523 = vmatpush.bf16.msra.mxu0 0
      %524 = vmatpush.bf16.msra.mxu0 %v466
      %525 = vmatmul.bf16.gmra.mxu0 %v470
      %v526 = vpop.f32.mrf.mxu0
      %v527 = vadd.f32 0.0, %v526
      %v528 = vpop.f32.mrf.mxu0
      %v529 = vadd.f32 0.0, %v528
      %530 = vmatmul.bf16.gmra.mxu0 %v473
      %v531 = vpop.f32.mrf.mxu0
      %v532 = vadd.f32 0.0, %v531
      %v533 = vpop.f32.mrf.mxu0
      %v534 = vadd.f32 0.0, %v533
      %535 = vmatmul.bf16.gmra.mxu0 %v476
      %v536 = vpop.f32.mrf.mxu0
      %v537 = vadd.f32 0.0, %v536
      %v538 = vpop.f32.mrf.mxu0
      %v539 = vadd.f32 0.0, %v538
      %540 = vmatmul.bf16.gmra.mxu0 %v479
      %v541 = vpop.f32.mrf.mxu0
      %v542 = vadd.f32 0.0, %v541
      %v543 = vpop.f32.mrf.mxu0
      %v544 = vadd.f32 0.0, %v543
      %545 = vmatmul.bf16.gmra.mxu0 %v482
      %v546 = vpop.f32.mrf.mxu0
      %v547 = vadd.f32 0.0, %v546
      %v548 = vpop.f32.mrf.mxu0
      %v549 = vadd.f32 0.0, %v548
      %550 = vmatmul.bf16.gmra.mxu0 %v485
      %v551 = vpop.f32.mrf.mxu0
      %v552 = vadd.f32 0.0, %v551
      %v553 = vpop.f32.mrf.mxu0
      %v554 = vadd.f32 0.0, %v553
      %555 = vmatmul.bf16.gmra.mxu0 %v488
      %v556 = vpop.f32.mrf.mxu0
      %v557 = vadd.f32 0.0, %v556
      %v558 = vpop.f32.mrf.mxu0
      %v559 = vadd.f32 0.0, %v558
      %560 = vmatmul.bf16.gmra.mxu0 %v491
      %v561 = vpop.f32.mrf.mxu0
      %v562 = vadd.f32 0.0, %v561
      %v563 = vpop.f32.mrf.mxu0
      %v564 = vadd.f32 0.0, %v563
      %565 = vmatmul.bf16.gmra.mxu0 %v494
      %v566 = vpop.f32.mrf.mxu0
      %v567 = vadd.f32 0.0, %v566
      %v568 = vpop.f32.mrf.mxu0
      %v569 = vadd.f32 0.0, %v568
      %570 = vmatmul.bf16.gmra.mxu0 %v497
      %v571 = vpop.f32.mrf.mxu0
      %v572 = vadd.f32 0.0, %v571
      %v573 = vpop.f32.mrf.mxu0
      %v574 = vadd.f32 0.0, %v573
      %575 = vmatmul.bf16.gmra.mxu0 %v500
      %v576 = vpop.f32.mrf.mxu0
      %v577 = vadd.f32 0.0, %v576
      %v578 = vpop.f32.mrf.mxu0
      %v579 = vadd.f32 0.0, %v578
      %580 = vmatmul.bf16.gmra.mxu0 %v503
      %v581 = vpop.f32.mrf.mxu0
      %v582 = vadd.f32 0.0, %v581
      %v583 = vpop.f32.mrf.mxu0
      %v584 = vadd.f32 0.0, %v583
      %585 = vmatmul.bf16.gmra.mxu0 %v506
      %v586 = vpop.f32.mrf.mxu0
      %v587 = vadd.f32 0.0, %v586
      %v588 = vpop.f32.mrf.mxu0
      %v589 = vadd.f32 0.0, %v588
      %590 = vmatmul.bf16.gmra.mxu0 %v509
      %v591 = vpop.f32.mrf.mxu0
      %v592 = vadd.f32 0.0, %v591
      %v593 = vpop.f32.mrf.mxu0
      %v594 = vadd.f32 0.0, %v593
      %595 = vmatmul.bf16.gmra.mxu0 %v512
      %v596 = vpop.f32.mrf.mxu0
      %v597 = vadd.f32 0.0, %v596
      %v598 = vpop.f32.mrf.mxu0
      %v599 = vadd.f32 0.0, %v598
      %600 = vmatmul.bf16.gmra.mxu0 %v515
      %v601 = vpop.f32.mrf.mxu0
      %v602 = vadd.f32 0.0, %v601
      %v603 = vpop.f32.mrf.mxu0
      %v604 = vadd.f32 0.0, %v603
      %605 = vdwg.mxu0
      %v606 = vld [vmem:[%s3] sm:$0x1]
      %v608 = vperm.slane %v606, 0
      %v610 = vmul.f32 %v527, %v608
      %v611 = vmul.f32 %v529, %v608
      %v612 = vmul.f32 %v532, %v608
      %v613 = vmul.f32 %v534, %v608
      %v614 = vmul.f32 %v537, %v608
      %v615 = vmul.f32 %v539, %v608
      %v616 = vmul.f32 %v542, %v608
      %v617 = vmul.f32 %v544, %v608
      %v618 = vmul.f32 %v547, %v608
      %v619 = vmul.f32 %v549, %v608
      %v620 = vmul.f32 %v552, %v608
      %v621 = vmul.f32 %v554, %v608
      %v622 = vmul.f32 %v557, %v608
      %v623 = vmul.f32 %v559, %v608
      %v624 = vmul.f32 %v562, %v608
      %v625 = vmul.f32 %v564, %v608
      %v626 = vmul.f32 %v567, %v608
      %v627 = vmul.f32 %v569, %v608
      %v628 = vmul.f32 %v572, %v608
      %v629 = vmul.f32 %v574, %v608
      %v630 = vmul.f32 %v577, %v608
      %v631 = vmul.f32 %v579, %v608
      %v632 = vmul.f32 %v582, %v608
      %v633 = vmul.f32 %v584, %v608
      %v634 = vmul.f32 %v587, %v608
      %v635 = vmul.f32 %v589, %v608
      %v636 = vmul.f32 %v592, %v608
      %v637 = vmul.f32 %v594, %v608
      %v638 = vmul.f32 %v597, %v608
      %v639 = vmul.f32 %v599, %v608
      %v640 = vmul.f32 %v602, %v608
      %v641 = vmul.f32 %v604, %v608
      %v642 = vld [vmem:[%s4] sm:$0x1]
      %v644 = vperm.slane %v642, 0
      %v646 = vadd.f32 %v610, %v644
      %v647 = vadd.f32 %v611, %v644
      %v648 = vadd.f32 %v612, %v644
      %v649 = vadd.f32 %v613, %v644
      %v650 = vadd.f32 %v614, %v644
      %v651 = vadd.f32 %v615, %v644
      %v652 = vadd.f32 %v616, %v644
      %v653 = vadd.f32 %v617, %v644
      %v654 = vadd.f32 %v618, %v644
      %v655 = vadd.f32 %v619, %v644
      %v656 = vadd.f32 %v620, %v644
      %v657 = vadd.f32 %v621, %v644
      %v658 = vadd.f32 %v622, %v644
      %v659 = vadd.f32 %v623, %v644
      %v660 = vadd.f32 %v624, %v644
      %v661 = vadd.f32 %v625, %v644
      %v662 = vadd.f32 %v626, %v644
      %v663 = vadd.f32 %v627, %v644
      %v664 = vadd.f32 %v628, %v644
      %v665 = vadd.f32 %v629, %v644
      %v666 = vadd.f32 %v630, %v644
      %v667 = vadd.f32 %v631, %v644
      %v668 = vadd.f32 %v632, %v644
      %v669 = vadd.f32 %v633, %v644
      %v670 = vadd.f32 %v634, %v644
      %v671 = vadd.f32 %v635, %v644
      %v672 = vadd.f32 %v636, %v644
      %v673 = vadd.f32 %v637, %v644
      %v674 = vadd.f32 %v638, %v644
      %v675 = vadd.f32 %v639, %v644
      %v676 = vadd.f32 %v640, %v644
      %v677 = vadd.f32 %v641, %v644
      %v678 = vld [vmem:[%s329] sm:$0xff]
      %v679 = vld [vmem:[%s329 + $0x8] sm:$0xff]
      %v680 = vld [vmem:[%s329 + $0x10] sm:$0xff]
      %v681 = vld [vmem:[%s329 + $0x18] sm:$0xff]
      %v682 = vld [vmem:[%s329 + $0x20] sm:$0xff]
      %v683 = vld [vmem:[%s329 + $0x28] sm:$0xff]
      %v684 = vld [vmem:[%s329 + $0x30] sm:$0xff]
      %v685 = vld [vmem:[%s329 + $0x38] sm:$0xff]
      %v686 = vld [vmem:[%s329 + $0x40] sm:$0xff]
      %v687 = vld [vmem:[%s329 + $0x48] sm:$0xff]
      %v688 = vld [vmem:[%s329 + $0x50] sm:$0xff]
      %v689 = vld [vmem:[%s329 + $0x58] sm:$0xff]
      %v690 = vld [vmem:[%s329 + $0x60] sm:$0xff]
      %v691 = vld [vmem:[%s329 + $0x68] sm:$0xff]
      %v692 = vld [vmem:[%s329 + $0x70] sm:$0xff]
      %v693 = vld [vmem:[%s329 + $0x78] sm:$0xff]
      %v694 = vld [vmem:[%s329 + $0x80] sm:$0xff]
      %v695 = vld [vmem:[%s329 + $0x88] sm:$0xff]
      %v696 = vld [vmem:[%s329 + $0x90] sm:$0xff]
      %v697 = vld [vmem:[%s329 + $0x98] sm:$0xff]
      %v698 = vld [vmem:[%s329 + $0xa0] sm:$0xff]
      %v699 = vld [vmem:[%s329 + $0xa8] sm:$0xff]
      %v700 = vld [vmem:[%s329 + $0xb0] sm:$0xff]
      %v701 = vld [vmem:[%s329 + $0xb8] sm:$0xff]
      %v702 = vld [vmem:[%s329 + $0xc0] sm:$0xff]
      %v703 = vld [vmem:[%s329 + $0xc8] sm:$0xff]
      %v704 = vld [vmem:[%s329 + $0xd0] sm:$0xff]
      %v705 = vld [vmem:[%s329 + $0xd8] sm:$0xff]
      %v706 = vld [vmem:[%s329 + $0xe0] sm:$0xff]
      %v707 = vld [vmem:[%s329 + $0xe8] sm:$0xff]
      %v708 = vld [vmem:[%s329 + $0xf0] sm:$0xff]
      %v709 = vld [vmem:[%s329 + $0xf8] sm:$0xff]
      %v710 = vadd.f32 %v646, %v678
      %v711 = vadd.f32 %v647, %v679
      %v712 = vadd.f32 %v648, %v680
      %v713 = vadd.f32 %v649, %v681
      %v714 = vadd.f32 %v650, %v682
      %v715 = vadd.f32 %v651, %v683
      %v716 = vadd.f32 %v652, %v684
      %v717 = vadd.f32 %v653, %v685
      %v718 = vadd.f32 %v654, %v686
      %v719 = vadd.f32 %v655, %v687
      %v720 = vadd.f32 %v656, %v688
      %v721 = vadd.f32 %v657, %v689
      %v722 = vadd.f32 %v658, %v690
      %v723 = vadd.f32 %v659, %v691
      %v724 = vadd.f32 %v660, %v692
      %v725 = vadd.f32 %v661, %v693
      %v726 = vadd.f32 %v662, %v694
      %v727 = vadd.f32 %v663, %v695
      %v728 = vadd.f32 %v664, %v696
      %v729 = vadd.f32 %v665, %v697
      %v730 = vadd.f32 %v666, %v698
      %v731 = vadd.f32 %v667, %v699
      %v732 = vadd.f32 %v668, %v700
      %v733 = vadd.f32 %v669, %v701
      %v734 = vadd.f32 %v670, %v702
      %v735 = vadd.f32 %v671, %v703
      %v736 = vadd.f32 %v672, %v704
      %v737 = vadd.f32 %v673, %v705
      %v738 = vadd.f32 %v674, %v706
      %v739 = vadd.f32 %v675, %v707
      %v740 = vadd.f32 %v676, %v708
      %v741 = vadd.f32 %v677, %v709
      %vm742 = vcmask 64512
      %743 = vst.msk [vmem:[%s339] sm:$0xff] %vm742, %v710
      %744 = vst.msk [vmem:[%s339 + $0x8] sm:$0xff] %vm742, %v711
      %745 = vst.msk [vmem:[%s339 + $0x10] sm:$0xff] %vm742, %v712
      %746 = vst.msk [vmem:[%s339 + $0x18] sm:$0xff] %vm742, %v713
      %747 = vst.msk [vmem:[%s339 + $0x20] sm:$0xff] %vm742, %v714
      %748 = vst.msk [vmem:[%s339 + $0x28] sm:$0xff] %vm742, %v715
      %749 = vst.msk [vmem:[%s339 + $0x30] sm:$0xff] %vm742, %v716
      %750 = vst.msk [vmem:[%s339 + $0x38] sm:$0xff] %vm742, %v717
      %751 = vst.msk [vmem:[%s339 + $0x40] sm:$0xff] %vm742, %v718
      %752 = vst.msk [vmem:[%s339 + $0x48] sm:$0xff] %vm742, %v719
      %753 = vst.msk [vmem:[%s339 + $0x50] sm:$0xff] %vm742, %v720
      %754 = vst.msk [vmem:[%s339 + $0x58] sm:$0xff] %vm742, %v721
      %755 = vst.msk [vmem:[%s339 + $0x60] sm:$0xff] %vm742, %v722
      %756 = vst.msk [vmem:[%s339 + $0x68] sm:$0xff] %vm742, %v723
      %757 = vst.msk [vmem:[%s339 + $0x70] sm:$0xff] %vm742, %v724
      %758 = vst.msk [vmem:[%s339 + $0x78] sm:$0xff] %vm742, %v725
      %759 = vst.msk [vmem:[%s339 + $0x80] sm:$0xff] %vm742, %v726
      %760 = vst.msk [vmem:[%s339 + $0x88] sm:$0xff] %vm742, %v727
      %761 = vst.msk [vmem:[%s339 + $0x90] sm:$0xff] %vm742, %v728
      %762 = vst.msk [vmem:[%s339 + $0x98] sm:$0xff] %vm742, %v729
      %763 = vst.msk [vmem:[%s339 + $0xa0] sm:$0xff] %vm742, %v730
      %764 = vst.msk [vmem:[%s339 + $0xa8] sm:$0xff] %vm742, %v731
      %765 = vst.msk [vmem:[%s339 + $0xb0] sm:$0xff] %vm742, %v732
      %766 = vst.msk [vmem:[%s339 + $0xb8] sm:$0xff] %vm742, %v733
      %767 = vst.msk [vmem:[%s339 + $0xc0] sm:$0xff] %vm742, %v734
      %768 = vst.msk [vmem:[%s339 + $0xc8] sm:$0xff] %vm742, %v735
      %769 = vst.msk [vmem:[%s339 + $0xd0] sm:$0xff] %vm742, %v736
      %770 = vst.msk [vmem:[%s339 + $0xd8] sm:$0xff] %vm742, %v737
      %771 = vst.msk [vmem:[%s339 + $0xe0] sm:$0xff] %vm742, %v738
      %772 = vst.msk [vmem:[%s339 + $0xe8] sm:$0xff] %vm742, %v739
      %773 = vst.msk [vmem:[%s339 + $0xf0] sm:$0xff] %vm742, %v740
      %774 = vst.msk [vmem:[%s339 + $0xf8] sm:$0xff] %vm742, %v741
      %s775 = smul.u32 32, %s22
      %p776 = scmp.lt.s32.totalorder %s21, 1
      %s777 = scalar_select %p776, %s21, 1
      %p778 = scmp.lt.s32.totalorder %s775, 31
      %s779 = scalar_select %p778, %s775, 31
      %s780 = smul.addr %s777, 32
      %s781 = sadd.s32 %s779, %s780
      %s782 = smul.addr %s781, 8
      %s783 = scalar_lea.vmem %s6, %s782
      // Predicated region
      $region45: #{_lambda_.5} parent=43 // pred_check
        %p784 = pneg %p194
      $region46: #{_lambda_.5} parent=43 // pred_check_branch
        %786 = sbr.rel (%p784) target = $region48
      $region47: #{_lambda_.5} parent=43 // pred_region
        %s787 = smul.u32 32, %s22
      $region48: #{_lambda_.5} parent=43 // pred_fallthru
        _
    $region44: #{_lambda_.5} parent=5 // pred_fallthru
      _
    %p788 = scmp.le.s32.totalorder 2, %s12
    // Predicated region
    $region49: #{_lambda_.5} parent=5 // pred_check
      %p789 = pneg %p788
    $region50: #{_lambda_.5} parent=5 // pred_check_branch
      %791 = sbr.rel (%p789) target = $region52
    $region51: #{_lambda_.5} parent=5 // pred_region
      %s792 = ssub.s32 %s12, 2
      // Predicated region
      $region53: #{_lambda_.5} parent=51 // pred_check
        %p793 = pneg %p200
      $region54: #{_lambda_.5} parent=51 // pred_check_branch
        %795 = sbr.rel (%p793) target = $region56
      $region55: #{_lambda_.5} parent=51 // pred_region
        %s796 = smul.u32 32, %s24
        %p797 = scmp.lt.s32.totalorder %s23, 1
        %s798 = scalar_select %p797, %s23, 1
        %p799 = scmp.lt.s32.totalorder %s796, 31
        %s800 = scalar_select %p799, %s796, 31
        %s801 = smul.addr %s798, 32
        %s802 = sadd.s32 %s800, %s801
        %s803 = smul.addr %s802, 8
        %s804 = scalar_lea.vmem %s6, %s803
      $region56: #{_lambda_.5} parent=51 // pred_fallthru
        _
    $region52: #{_lambda_.5} parent=5 // pred_fallthru
      _
  $region6: #{_lambda_.5} parent=0 // loop_footer
    %s16 = sadd.s32 1, %s12
  $region7: #{_lambda_.5} parent=0 // loop_footer_branch
    %11 = sbr.rel target = $region3
  $region8: #{_lambda_.5} parent=0 // loop_exit
    _

// kernel: _lambda_.4
$region0: #{_lambda_.4}
  #allocation0 [shape = 'u32[]', space=smem, size = 0x4, offset = 0x4, fixed_abs, tag = 'smem constant byte address 0x4 - core index']
  #allocation1 [shape = 'u32[72,128]{1,0:T(1,128)}', space=vmem, size = 0x9000, scoped, tag = 'internal scratch']
  %s0 = inlined_call_operand.vmem [shape: f32[2,20,20,16], index: 0, kind: input, shape index: {}]
  %s1 = inlined_call_operand.vmem [shape: f32[25,1,16], index: 1, kind: input, shape index: {}]
  %s2 = inlined_call_operand.vmem [shape: f32[1,16], index: 2, kind: input, shape index: {}]
  %s3 = inlined_call_operand.vmem [shape: f32[1,16], index: 3, kind: input, shape index: {}]
  %s4 = inlined_call_operand.vmem [shape: f32[2,16,16,16], index: 4, kind: output, shape index: {0}]
  %s5 = inlined_call_operand.vmem [shape: f32[2,2,1,16], index: 5, kind: output, shape index: {1}]
  %6 = xla_tuple %s4, %s5
  %s7 = sld [smem:[#allocation0]]
  $region57: #{_lambda_.4} parent=0
    _
  %s9 = ssub.s32 1, %s7
  %s10 = scalar_select 0, %s9, %s7
  loop: start=0, step=1, limit=6
  $region2: #{_lambda_.4} parent=0 // loop_pre_header
    _
  $region3: #{_lambda_.4} parent=0 // loop_header
    %s12 = sphi 0, %s16
    %p13 = scmp.ge.s32.totalorder %s12, 6
    %s19 = sphi 0, %s31
    %s20 = sphi 0, %s27
    %s21 = sphi 0, %s19
    %s22 = sphi 0, %s20
    %s23 = sphi 0, %s21
    %s24 = sphi 0, %s22
    %s34 = sphi 0, %s36
    %s37 = sphi 0, %s34
    %s38 = sphi 0, %s37
    %s54 = sphi 0, %s38
    %s58 = sphi 0, %s58
    %s60 = sphi 0, %s58
    %s61 = sphi 0, %s60
    %s75 = sphi 0, %s61
    %s79 = sphi 0, %s79
    %s81 = sphi 0, %s79
    %s82 = sphi 0, %s81
    %s96 = sphi 0, %s82
    %s100 = sphi 0, %s100
    %s102 = sphi 0, %s100
    %s103 = sphi 0, %s102
    %s117 = sphi 0, %s103
    %s125 = sphi 0, %s127
    %s128 = sphi 0, %s125
    %s129 = sphi 0, %s128
    %s145 = sphi 0, %s129
    %s153 = sphi 0, %s155
    %s156 = sphi 0, %s153
    %s157 = sphi 0, %s156
    %s173 = sphi 0, %s157
  $region4: #{_lambda_.4} parent=0 // loop_header_branch
    %15 = sbr.rel (%p13) target = $region8
  $region5: #{_lambda_.4} parent=0 // loop_body
    %s17 = ssub.s32 %s12, 1
    %s18 = ssub.s32 %s12, 2
    %s25 = sadd.s32 1, %s20
    %p26 = scmp.ge.s32.totalorder %s25, 2
    %s27 = scalar_select %p26, 0, %s25
    %s28 = sadd.s32 1, %s19
    %s29 = scalar_select %p26, %s28, %s19
    %p30 = scmp.ge.s32.totalorder %s29, 2
    %s31 = scalar_select %p30, 0, %s29
    %s32 = ssub.s32 %s19, %s31
    %p33 = scmp.eq.s32.totalorder %s32, 0
    %s35 = sadd.s32 %s34, 1
    %s36 = scalar_select %p33, %s34, %s35
    %p39 = pneg %p33
    %p40 = scmp.eq.s32.totalorder %s12, 3
    %p41 = por %p39, %p40
    %p42 = scmp.ne.s32.totalorder %s34, %s37
    %p43 = scmp.eq.s32.totalorder %s12, 0
    %p44 = por %p42, %p43
    %p45 = scmp.ne.s32.totalorder %s34, %s37
    %p46 = scmp.eq.s32.totalorder %s17, 3
    %p47 = por %p45, %p46
    %p48 = scmp.ne.s32.totalorder %s37, %s38
    %p49 = scmp.eq.s32.totalorder %s17, 0
    %p50 = por %p48, %p49
    %p51 = scmp.ne.s32.totalorder %s37, %s38
    %p52 = scmp.eq.s32.totalorder %s18, 3
    %p53 = por %p51, %p52
    %p55 = scmp.ne.s32.totalorder %s38, %s54
    %p56 = scmp.eq.s32.totalorder %s18, 0
    %p57 = por %p55, %p56
    %s59 = sadd.s32 %s58, 1
    %p62 = scmp.eq.s32.totalorder %s12, 3
    %p63 = scmp.ne.s32.totalorder %s58, %s60
    %p64 = scmp.eq.s32.totalorder %s12, 0
    %p65 = por %p63, %p64
    %p66 = scmp.ne.s32.totalorder %s58, %s60
    %p67 = scmp.eq.s32.totalorder %s17, 3
    %p68 = por %p66, %p67
    %p69 = scmp.ne.s32.totalorder %s60, %s61
    %p70 = scmp.eq.s32.totalorder %s17, 0
    %p71 = por %p69, %p70
    %p72 = scmp.ne.s32.totalorder %s60, %s61
    %p73 = scmp.eq.s32.totalorder %s18, 3
    %p74 = por %p72, %p73
    %p76 = scmp.ne.s32.totalorder %s61, %s75
    %p77 = scmp.eq.s32.totalorder %s18, 0
    %p78 = por %p76, %p77
    %s80 = sadd.s32 %s79, 1
    %p83 = scmp.eq.s32.totalorder %s12, 3
    %p84 = scmp.ne.s32.totalorder %s79, %s81
    %p85 = scmp.eq.s32.totalorder %s12, 0
    %p86 = por %p84, %p85
    %p87 = scmp.ne.s32.totalorder %s79, %s81
    %p88 = scmp.eq.s32.totalorder %s17, 3
    %p89 = por %p87, %p88
    %p90 = scmp.ne.s32.totalorder %s81, %s82
    %p91 = scmp.eq.s32.totalorder %s17, 0
    %p92 = por %p90, %p91
    %p93 = scmp.ne.s32.totalorder %s81, %s82
    %p94 = scmp.eq.s32.totalorder %s18, 3
    %p95 = por %p93, %p94
    %p97 = scmp.ne.s32.totalorder %s82, %s96
    %p98 = scmp.eq.s32.totalorder %s18, 0
    %p99 = por %p97, %p98
    %s101 = sadd.s32 %s100, 1
    %p104 = scmp.eq.s32.totalorder %s12, 3
    %p105 = scmp.ne.s32.totalorder %s100, %s102
    %p106 = scmp.eq.s32.totalorder %s12, 0
    %p107 = por %p105, %p106
    %p108 = scmp.ne.s32.totalorder %s100, %s102
    %p109 = scmp.eq.s32.totalorder %s17, 3
    %p110 = por %p108, %p109
    %p111 = scmp.ne.s32.totalorder %s102, %s103
    %p112 = scmp.eq.s32.totalorder %s17, 0
    %p113 = por %p111, %p112
    %p114 = scmp.ne.s32.totalorder %s102, %s103
    %p115 = scmp.eq.s32.totalorder %s18, 3
    %p116 = por %p114, %p115
    %p118 = scmp.ne.s32.totalorder %s103, %s117
    %p119 = scmp.eq.s32.totalorder %s18, 0
    %p120 = por %p118, %p119
    %s121 = ssub.s32 %s19, %s31
    %s122 = ssub.s32 %s20, %s27
    %s123 = sor.u32 %s121, %s122
    %p124 = scmp.eq.s32.totalorder %s123, 0
    %s126 = sadd.s32 %s125, 1
    %s127 = scalar_select %p124, %s125, %s126
    %p130 = pneg %p124
    %p131 = scmp.eq.s32.totalorder %s12, 3
    %p132 = por %p130, %p131
    %p133 = scmp.ne.s32.totalorder %s125, %s128
    %p134 = scmp.eq.s32.totalorder %s12, 0
    %p135 = por %p133, %p134
    %p136 = scmp.ne.s32.totalorder %s125, %s128
    %p137 = scmp.eq.s32.totalorder %s17, 3
    %p138 = por %p136, %p137
    %p139 = scmp.ne.s32.totalorder %s128, %s129
    %p140 = scmp.eq.s32.totalorder %s17, 0
    %p141 = por %p139, %p140
    %p142 = scmp.ne.s32.totalorder %s128, %s129
    %p143 = scmp.eq.s32.totalorder %s18, 3
    %p144 = por %p142, %p143
    %p146 = scmp.ne.s32.totalorder %s129, %s145
    %p147 = scmp.eq.s32.totalorder %s18, 0
    %p148 = por %p146, %p147
    %s149 = ssub.s32 %s19, %s31
    %s150 = ssub.s32 %s20, %s27
    %s151 = sor.u32 %s149, %s150
    %p152 = scmp.eq.s32.totalorder %s151, 0
    %s154 = sadd.s32 %s153, 1
    %s155 = scalar_select %p152, %s153, %s154
    %p158 = pneg %p152
    %p159 = scmp.eq.s32.totalorder %s12, 3
    %p160 = por %p158, %p159
    %p161 = scmp.ne.s32.totalorder %s153, %s156
    %p162 = scmp.eq.s32.totalorder %s12, 0
    %p163 = por %p161, %p162
    %p164 = scmp.ne.s32.totalorder %s153, %s156
    %p165 = scmp.eq.s32.totalorder %s17, 3
    %p166 = por %p164, %p165
    %p167 = scmp.ne.s32.totalorder %s156, %s157
    %p168 = scmp.eq.s32.totalorder %s17, 0
    %p169 = por %p167, %p168
    %p170 = scmp.ne.s32.totalorder %s156, %s157
    %p171 = scmp.eq.s32.totalorder %s18, 3
    %p172 = por %p170, %p171
    %p174 = scmp.ne.s32.totalorder %s157, %s173
    %p175 = scmp.eq.s32.totalorder %s18, 0
    %p176 = por %p174, %p175
    %p177 = scmp.le.s32.totalorder 1, %s12
    %p178 = scmp.lt.s32.totalorder %s12, 5
    %p179 = pnand %p177, %p178
    %p180 = pneg %p179
    // Predicated region
    $region9: #{_lambda_.4} parent=5 // pred_check
      _
    $region10: #{_lambda_.4} parent=5 // pred_check_branch
      %182 = sbr.rel (%p179) target = $region12
    $region11: #{_lambda_.4} parent=5 // pred_region
      %s183 = ssub.s32 %s12, 1
      // Predicated region
      $region13: #{_lambda_.4} parent=11 // pred_check
        %p184 = pneg %p71
      $region14: #{_lambda_.4} parent=11 // pred_check_branch
        %186 = sbr.rel (%p184) target = $region16
      $region15: #{_lambda_.4} parent=11 // pred_region
        _
      $region16: #{_lambda_.4} parent=11 // pred_fallthru
        _
      // Predicated region
      $region17: #{_lambda_.4} parent=11 // pred_check
        %p187 = pneg %p92
      $region18: #{_lambda_.4} parent=11 // pred_check_branch
        %189 = sbr.rel (%p187) target = $region20
      $region19: #{_lambda_.4} parent=11 // pred_region
        _
      $region20: #{_lambda_.4} parent=11 // pred_fallthru
        _
      // Predicated region
      $region21: #{_lambda_.4} parent=11 // pred_check
        %p190 = pneg %p113
      $region22: #{_lambda_.4} parent=11 // pred_check_branch
        %192 = sbr.rel (%p190) target = $region24
      $region23: #{_lambda_.4} parent=11 // pred_region
        _
      $region24: #{_lambda_.4} parent=11 // pred_fallthru
        _
    $region12: #{_lambda_.4} parent=5 // pred_fallthru
      _
    %p193 = scmp.lt.s32.totalorder %s12, 4
    // Predicated region
    $region25: #{_lambda_.4} parent=5 // pred_check
      %p194 = pneg %p193
    $region26: #{_lambda_.4} parent=5 // pred_check_branch
      %196 = sbr.rel (%p194) target = $region28
    $region27: #{_lambda_.4} parent=5 // pred_region
      // Predicated region
      $region29: #{_lambda_.4} parent=27 // pred_check
        %p197 = pneg %p44
      $region30: #{_lambda_.4} parent=27 // pred_check_branch
        %199 = sbr.rel (%p197) target = $region32
      $region31: #{_lambda_.4} parent=27 // pred_region
        %p200 = scmp.lt.s32.totalorder %s19, 1
        %s201 = scalar_select %p200, %s19, 1
        %s202 = smul.addr %s201, 60
        %s203 = smul.addr %s202, 8
        %s204 = scalar_lea.vmem %s0, %s203
      $region32: #{_lambda_.4} parent=27 // pred_fallthru
        _
    $region28: #{_lambda_.4} parent=5 // pred_fallthru
      _
    %p205 = scmp.le.s32.totalorder 1, %s12
    %p206 = scmp.lt.s32.totalorder %s12, 5
    %p207 = pnand %p205, %p206
    %p208 = pneg %p207
    // Predicated region
    $region33: #{_lambda_.4} parent=5 // pred_check
      _
    $region34: #{_lambda_.4} parent=5 // pred_check_branch
      %210 = sbr.rel (%p207) target = $region36
    $region35: #{_lambda_.4} parent=5 // pred_region
      %s211 = ssub.s32 %s12, 1
      %p212 = scmp.lt.s32.totalorder %s21, 1
      %s213 = scalar_select %p212, %s21, 1
      %s214 = smul.addr %s213, 60
      %s215 = smul.addr %s214, 8
      %s216 = scalar_lea.vmem %s0, %s215
      %p217 = pneg %p50
      %p218 = pneg %p47
      %p219 = pneg %p71
      %p220 = pneg %p68
      %p221 = pneg %p92
      %p222 = pneg %p89
      %p223 = pneg %p113
      %p224 = pneg %p110
      %p225 = pneg %p141
      %p226 = pneg %p138
      %s227 = smul.u32 8, %s22
      %p228 = scmp.lt.s32.totalorder %s21, 1
      %s229 = scalar_select %p228, %s21, 1
      %p230 = scmp.lt.s32.totalorder %s227, 15
      %s231 = scalar_select %p230, %s227, 15
      %s232 = smul.addr %s231, 2
      %s233 = smul.addr %s229, 32
      %s234 = sadd.s32 %s232, %s233
      %s235 = smul.addr %s234, 8
      %s236 = scalar_lea.vmem %s4, %s235
      %p237 = pneg %p169
      %p238 = pneg %p166
      %p239 = scmp.lt.s32.totalorder %s21, 1
      %s240 = scalar_select %p239, %s21, 1
      %p241 = scmp.lt.s32.totalorder %s22, 1
      %s242 = scalar_select %p241, %s22, 1
      %s243 = smul.addr %s240, 2
      %s244 = sadd.s32 %s242, %s243
      %s245 = scalar_lea.vmem %s5, %s244
      %p246 = scmp.lt.s32.totalorder %s21, 1
      %s247 = scalar_select %p246, %s21, 1
      %s248 = smul.addr %s247, 60
      %s249 = smul.addr %s248, 8
      %s250 = scalar_lea.vmem %s0, %s249
      %s251 = smul.u32 8, %s22
      %p252 = scmp.lt.s32.totalorder %s21, 1
      %s253 = scalar_select %p252, %s21, 1
      %p254 = scmp.lt.s32.totalorder %s251, 15
      %s255 = scalar_select %p254, %s251, 15
      %s256 = smul.addr %s255, 2
      %s257 = smul.addr %s253, 32
      %s258 = sadd.s32 %s256, %s257
      %s259 = smul.addr %s258, 8
      %s260 = scalar_lea.vmem %s4, %s259
      %s261 = smul.u32 8, %s22
      %p262 = scmp.lt.s32.totalorder %s21, 1
      %s263 = scalar_select %p262, %s21, 1
      %p264 = scmp.lt.s32.totalorder %s22, 1
      %s265 = scalar_select %p264, %s22, 1
      %s266 = smul.addr %s263, 2
      %s267 = sadd.s32 %s265, %s266
      %s268 = scalar_lea.vmem %s5, %s267
      %s269 = smul.u32 %s22, 8
      %s270 = smul.u32 %s269, 24
      %s271 = scalar_lea.vmem %s250, %s270
      %v272 = vld [vmem:[%s271] sm:$0xff]
      %v273 = vld [vmem:[%s271 + $0x8] sm:$0xff]
      %v274 = vld [vmem:[%s271 + $0x18] sm:$0xff]
      %v275 = vld [vmem:[%s271 + $0x20] sm:$0xff]
      %v276 = vld [vmem:[%s271 + $0x30] sm:$0xff]
      %v277 = vld [vmem:[%s271 + $0x38] sm:$0xff]
      %v278 = vld [vmem:[%s271 + $0x48] sm:$0xff]
      %v279 = vld [vmem:[%s271 + $0x50] sm:$0xff]
      %v280 = vld [vmem:[%s271 + $0x60] sm:$0xff]
      %v281 = vld [vmem:[%s271 + $0x68] sm:$0xff]
      %v282 = vld [vmem:[%s271 + $0x78] sm:$0xff]
      %v283 = vld [vmem:[%s271 + $0x80] sm:$0xff]
      %v284 = vld [vmem:[%s271 + $0x90] sm:$0xff]
      %v285 = vld [vmem:[%s271 + $0x98] sm:$0xff]
      %v286 = vld [vmem:[%s271 + $0xa8] sm:$0xff]
      %v287 = vld [vmem:[%s271 + $0xb0] sm:$0xff]
      %v288 = vld [vmem:[%s1] sm:$0x1]
      %v290 = vperm.slane %v288, 0
      %v292 = vmul.f32 %v272, %v290
      %v293 = vmul.f32 %v273, %v290
      %v294 = vmul.f32 %v274, %v290
      %v295 = vmul.f32 %v275, %v290
      %v296 = vmul.f32 %v276, %v290
      %v297 = vmul.f32 %v277, %v290
      %v298 = vmul.f32 %v278, %v290
      %v299 = vmul.f32 %v279, %v290
      %v300 = vmul.f32 %v280, %v290
      %v301 = vmul.f32 %v281, %v290
      %v302 = vmul.f32 %v282, %v290
      %v303 = vmul.f32 %v283, %v290
      %v304 = vmul.f32 %v284, %v290
      %v305 = vmul.f32 %v285, %v290
      %v306 = vmul.f32 %v286, %v290
      %v307 = vmul.f32 %v287, %v290
      %v308 = vadd.f32 %v292, 0.0
      %v309 = vadd.f32 %v293, 0.0
      %v310 = vadd.f32 %v294, 0.0
      %v311 = vadd.f32 %v295, 0.0
      %v312 = vadd.f32 %v296, 0.0
      %v313 = vadd.f32 %v297, 0.0
      %v314 = vadd.f32 %v298, 0.0
      %v315 = vadd.f32 %v299, 0.0
      %v316 = vadd.f32 %v300, 0.0
      %v317 = vadd.f32 %v301, 0.0
      %v318 = vadd.f32 %v302, 0.0
      %v319 = vadd.f32 %v303, 0.0
      %v320 = vadd.f32 %v304, 0.0
      %v321 = vadd.f32 %v305, 0.0
      %v322 = vadd.f32 %v306, 0.0
      %v323 = vadd.f32 %v307, 0.0
      %v324 = vld [vmem:[%s271 + $0x1] sm:$0xff]
      %v325 = vld [vmem:[%s271 + $0x9] sm:$0xff]
      %v326 = vld [vmem:[%s271 + $0x19] sm:$0xff]
      %v327 = vld [vmem:[%s271 + $0x21] sm:$0xff]
      %v328 = vld [vmem:[%s271 + $0x31] sm:$0xff]
      %v329 = vld [vmem:[%s271 + $0x39] sm:$0xff]
      %v330 = vld [vmem:[%s271 + $0x49] sm:$0xff]
      %v331 = vld [vmem:[%s271 + $0x51] sm:$0xff]
      %v332 = vld [vmem:[%s271 + $0x61] sm:$0xff]
      %v333 = vld [vmem:[%s271 + $0x69] sm:$0xff]
      %v334 = vld [vmem:[%s271 + $0x79] sm:$0xff]
      %v335 = vld [vmem:[%s271 + $0x81] sm:$0xff]
      %v336 = vld [vmem:[%s271 + $0x91] sm:$0xff]
      %v337 = vld [vmem:[%s271 + $0x99] sm:$0xff]
      %v338 = vld [vmem:[%s271 + $0xa9] sm:$0xff]
      %v339 = vld [vmem:[%s271 + $0xb1] sm:$0xff]
      %s340 = scalar_lea.vmem %s1, 1
      %v341 = vld [vmem:[%s340] sm:$0x1]
      %v343 = vperm.slane %v341, 0
      %v345 = vmul.f32 %v324, %v343
      %v346 = vmul.f32 %v325, %v343
      %v347 = vmul.f32 %v326, %v343
      %v348 = vmul.f32 %v327, %v343
      %v349 = vmul.f32 %v328, %v343
      %v350 = vmul.f32 %v329, %v343
      %v351 = vmul.f32 %v330, %v343
      %v352 = vmul.f32 %v331, %v343
      %v353 = vmul.f32 %v332, %v343
      %v354 = vmul.f32 %v333, %v343
      %v355 = vmul.f32 %v334, %v343
      %v356 = vmul.f32 %v335, %v343
      %v357 = vmul.f32 %v336, %v343
      %v358 = vmul.f32 %v337, %v343
      %v359 = vmul.f32 %v338, %v343
      %v360 = vmul.f32 %v339, %v343
      %v361 = vadd.f32 %v308, %v345
      %v362 = vadd.f32 %v309, %v346
      %v363 = vadd.f32 %v310, %v347
      %v364 = vadd.f32 %v311, %v348
      %v365 = vadd.f32 %v312, %v349
      %v366 = vadd.f32 %v313, %v350
      %v367 = vadd.f32 %v314, %v351
      %v368 = vadd.f32 %v315, %v352
      %v369 = vadd.f32 %v316, %v353
      %v370 = vadd.f32 %v317, %v354
      %v371 = vadd.f32 %v318, %v355
      %v372 = vadd.f32 %v319, %v356
      %v373 = vadd.f32 %v320, %v357
      %v374 = vadd.f32 %v321, %v358
      %v375 = vadd.f32 %v322, %v359
      %v376 = vadd.f32 %v323, %v360
      %v377 = vld [vmem:[%s271 + $0x2] sm:$0xff]
      %v378 = vld [vmem:[%s271 + $0xa] sm:$0xff]
      %v379 = vld [vmem:[%s271 + $0x1a] sm:$0xff]
      %v380 = vld [vmem:[%s271 + $0x22] sm:$0xff]
      %v381 = vld [vmem:[%s271 + $0x32] sm:$0xff]
      %v382 = vld [vmem:[%s271 + $0x3a] sm:$0xff]
      %v383 = vld [vmem:[%s271 + $0x4a] sm:$0xff]
      %v384 = vld [vmem:[%s271 + $0x52] sm:$0xff]
      %v385 = vld [vmem:[%s271 + $0x62] sm:$0xff]
      %v386 = vld [vmem:[%s271 + $0x6a] sm:$0xff]
      %v387 = vld [vmem:[%s271 + $0x7a] sm:$0xff]
      %v388 = vld [vmem:[%s271 + $0x82] sm:$0xff]
      %v389 = vld [vmem:[%s271 + $0x92] sm:$0xff]
      %v390 = vld [vmem:[%s271 + $0x9a] sm:$0xff]
      %v391 = vld [vmem:[%s271 + $0xaa] sm:$0xff]
      %v392 = vld [vmem:[%s271 + $0xb2] sm:$0xff]
      %s393 = scalar_lea.vmem %s1, 2
      %v394 = vld [vmem:[%s393] sm:$0x1]
      %v396 = vperm.slane %v394, 0
      %v398 = vmul.f32 %v377, %v396
      %v399 = vmul.f32 %v378, %v396
      %v400 = vmul.f32 %v379, %v396
      %v401 = vmul.f32 %v380, %v396
      %v402 = vmul.f32 %v381, %v396
      %v403 = vmul.f32 %v382, %v396
      %v404 = vmul.f32 %v383, %v396
      %v405 = vmul.f32 %v384, %v396
      %v406 = vmul.f32 %v385, %v396
      %v407 = vmul.f32 %v386, %v396
      %v408 = vmul.f32 %v387, %v396
      %v409 = vmul.f32 %v388, %v396
      %v410 = vmul.f32 %v389, %v396
      %v411 = vmul.f32 %v390, %v396
      %v412 = vmul.f32 %v391, %v396
      %v413 = vmul.f32 %v392, %v396
      %v414 = vadd.f32 %v361, %v398
      %v415 = vadd.f32 %v362, %v399
      %v416 = vadd.f32 %v363, %v400
      %v417 = vadd.f32 %v364, %v401
      %v418 = vadd.f32 %v365, %v402
      %v419 = vadd.f32 %v366, %v403
      %v420 = vadd.f32 %v367, %v404
      %v421 = vadd.f32 %v368, %v405
      %v422 = vadd.f32 %v369, %v406
      %v423 = vadd.f32 %v370, %v407
      %v424 = vadd.f32 %v371, %v408
      %v425 = vadd.f32 %v372, %v409
      %v426 = vadd.f32 %v373, %v410
      %v427 = vadd.f32 %v374, %v411
      %v428 = vadd.f32 %v375, %v412
      %v429 = vadd.f32 %v376, %v413
      %v430 = vld [vmem:[%s271 + $0x3] sm:$0xff]
      %v431 = vld [vmem:[%s271 + $0xb] sm:$0xff]
      %v432 = vld [vmem:[%s271 + $0x1b] sm:$0xff]
      %v433 = vld [vmem:[%s271 + $0x23] sm:$0xff]
      %v434 = vld [vmem:[%s271 + $0x33] sm:$0xff]
      %v435 = vld [vmem:[%s271 + $0x3b] sm:$0xff]
      %v436 = vld [vmem:[%s271 + $0x4b] sm:$0xff]
      %v437 = vld [vmem:[%s271 + $0x53] sm:$0xff]
      %v438 = vld [vmem:[%s271 + $0x63] sm:$0xff]
      %v439 = vld [vmem:[%s271 + $0x6b] sm:$0xff]
      %v440 = vld [vmem:[%s271 + $0x7b] sm:$0xff]
      %v441 = vld [vmem:[%s271 + $0x83] sm:$0xff]
      %v442 = vld [vmem:[%s271 + $0x93] sm:$0xff]
      %v443 = vld [vmem:[%s271 + $0x9b] sm:$0xff]
      %v444 = vld [vmem:[%s271 + $0xab] sm:$0xff]
      %v445 = vld [vmem:[%s271 + $0xb3] sm:$0xff]
      %s446 = scalar_lea.vmem %s1, 3
      %v447 = vld [vmem:[%s446] sm:$0x1]
      %v449 = vperm.slane %v447, 0
      %v451 = vmul.f32 %v430, %v449
      %v452 = vmul.f32 %v431, %v449
      %v453 = vmul.f32 %v432, %v449
      %v454 = vmul.f32 %v433, %v449
      %v455 = vmul.f32 %v434, %v449
      %v456 = vmul.f32 %v435, %v449
      %v457 = vmul.f32 %v436, %v449
      %v458 = vmul.f32 %v437, %v449
      %v459 = vmul.f32 %v438, %v449
      %v460 = vmul.f32 %v439, %v449
      %v461 = vmul.f32 %v440, %v449
      %v462 = vmul.f32 %v441, %v449
      %v463 = vmul.f32 %v442, %v449
      %v464 = vmul.f32 %v443, %v449
      %v465 = vmul.f32 %v444, %v449
      %v466 = vmul.f32 %v445, %v449
      %v467 = vadd.f32 %v414, %v451
      %v468 = vadd.f32 %v415, %v452
      %v469 = vadd.f32 %v416, %v453
      %v470 = vadd.f32 %v417, %v454
      %v471 = vadd.f32 %v418, %v455
      %v472 = vadd.f32 %v419, %v456
      %v473 = vadd.f32 %v420, %v457
      %v474 = vadd.f32 %v421, %v458
      %v475 = vadd.f32 %v422, %v459
      %v476 = vadd.f32 %v423, %v460
      %v477 = vadd.f32 %v424, %v461
      %v478 = vadd.f32 %v425, %v462
      %v479 = vadd.f32 %v426, %v463
      %v480 = vadd.f32 %v427, %v464
      %v481 = vadd.f32 %v428, %v465
      %v482 = vadd.f32 %v429, %v466
      %v483 = vld [vmem:[%s271 + $0x4] sm:$0xff]
      %v484 = vld [vmem:[%s271 + $0xc] sm:$0xff]
      %v485 = vld [vmem:[%s271 + $0x1c] sm:$0xff]
      %v486 = vld [vmem:[%s271 + $0x24] sm:$0xff]
      %v487 = vld [vmem:[%s271 + $0x34] sm:$0xff]
      %v488 = vld [vmem:[%s271 + $0x3c] sm:$0xff]
      %v489 = vld [vmem:[%s271 + $0x4c] sm:$0xff]
      %v490 = vld [vmem:[%s271 + $0x54] sm:$0xff]
      %v491 = vld [vmem:[%s271 + $0x64] sm:$0xff]
      %v492 = vld [vmem:[%s271 + $0x6c] sm:$0xff]
      %v493 = vld [vmem:[%s271 + $0x7c] sm:$0xff]
      %v494 = vld [vmem:[%s271 + $0x84] sm:$0xff]
      %v495 = vld [vmem:[%s271 + $0x94] sm:$0xff]
      %v496 = vld [vmem:[%s271 + $0x9c] sm:$0xff]
      %v497 = vld [vmem:[%s271 + $0xac] sm:$0xff]
      %v498 = vld [vmem:[%s271 + $0xb4] sm:$0xff]
      %s499 = scalar_lea.vmem %s1, 4
      %v500 = vld [vmem:[%s499] sm:$0x1]
      %v502 = vperm.slane %v500, 0
      %v504 = vmul.f32 %v483, %v502
      %v505 = vmul.f32 %v484, %v502
      %v506 = vmul.f32 %v485, %v502
      %v507 = vmul.f32 %v486, %v502
      %v508 = vmul.f32 %v487, %v502
      %v509 = vmul.f32 %v488, %v502
      %v510 = vmul.f32 %v489, %v502
      %v511 = vmul.f32 %v490, %v502
      %v512 = vmul.f32 %v491, %v502
      %v513 = vmul.f32 %v492, %v502
      %v514 = vmul.f32 %v493, %v502
      %v515 = vmul.f32 %v494, %v502
      %v516 = vmul.f32 %v495, %v502
      %v517 = vmul.f32 %v496, %v502
      %v518 = vmul.f32 %v497, %v502
      %v519 = vmul.f32 %v498, %v502
      %v520 = vadd.f32 %v467, %v504
      %v521 = vadd.f32 %v468, %v505
      %v522 = vadd.f32 %v469, %v506
      %v523 = vadd.f32 %v470, %v507
      %v524 = vadd.f32 %v471, %v508
      %v525 = vadd.f32 %v472, %v509
      %v526 = vadd.f32 %v473, %v510
      %v527 = vadd.f32 %v474, %v511
      %v528 = vadd.f32 %v475, %v512
      %v529 = vadd.f32 %v476, %v513
      %v530 = vadd.f32 %v477, %v514
      %v531 = vadd.f32 %v478, %v515
      %v532 = vadd.f32 %v479, %v516
      %v533 = vadd.f32 %v480, %v517
      %v534 = vadd.f32 %v481, %v518
      %v535 = vadd.f32 %v482, %v519
      %s536 = sadd.s32 %s269, 1
      %s537 = smul.u32 %s536, 24
      %s538 = scalar_lea.vmem %s250, %s537
      %v539 = vld [vmem:[%s538] sm:$0xff]
      %v540 = vld [vmem:[%s538 + $0x8] sm:$0xff]
      %v541 = vld [vmem:[%s538 + $0x18] sm:$0xff]
      %v542 = vld [vmem:[%s538 + $0x20] sm:$0xff]
      %v543 = vld [vmem:[%s538 + $0x30] sm:$0xff]
      %v544 = vld [vmem:[%s538 + $0x38] sm:$0xff]
      %v545 = vld [vmem:[%s538 + $0x48] sm:$0xff]
      %v546 = vld [vmem:[%s538 + $0x50] sm:$0xff]
      %v547 = vld [vmem:[%s538 + $0x60] sm:$0xff]
      %v548 = vld [vmem:[%s538 + $0x68] sm:$0xff]
      %v549 = vld [vmem:[%s538 + $0x78] sm:$0xff]
      %v550 = vld [vmem:[%s538 + $0x80] sm:$0xff]
      %v551 = vld [vmem:[%s538 + $0x90] sm:$0xff]
      %v552 = vld [vmem:[%s538 + $0x98] sm:$0xff]
      %v553 = vld [vmem:[%s538 + $0xa8] sm:$0xff]
      %v554 = vld [vmem:[%s538 + $0xb0] sm:$0xff]
      %s555 = scalar_lea.vmem %s1, 5
      %v556 = vld [vmem:[%s555] sm:$0x1]
      %v558 = vperm.slane %v556, 0
      %v560 = vmul.f32 %v539, %v558
      %v561 = vmul.f32 %v540, %v558
      %v562 = vmul.f32 %v541, %v558
      %v563 = vmul.f32 %v542, %v558
      %v564 = vmul.f32 %v543, %v558
      %v565 = vmul.f32 %v544, %v558
      %v566 = vmul.f32 %v545, %v558
      %v567 = vmul.f32 %v546, %v558
      %v568 = vmul.f32 %v547, %v558
      %v569 = vmul.f32 %v548, %v558
      %v570 = vmul.f32 %v549, %v558
      %v571 = vmul.f32 %v550, %v558
      %v572 = vmul.f32 %v551, %v558
      %v573 = vmul.f32 %v552, %v558
      %v574 = vmul.f32 %v553, %v558
      %v575 = vmul.f32 %v554, %v558
      %v576 = vadd.f32 %v520, %v560
      %v577 = vadd.f32 %v521, %v561
      %v578 = vadd.f32 %v522, %v562
      %v579 = vadd.f32 %v523, %v563
      %v580 = vadd.f32 %v524, %v564
      %v581 = vadd.f32 %v525, %v565
      %v582 = vadd.f32 %v526, %v566
      %v583 = vadd.f32 %v527, %v567
      %v584 = vadd.f32 %v528, %v568
      %v585 = vadd.f32 %v529, %v569
      %v586 = vadd.f32 %v530, %v570
      %v587 = vadd.f32 %v531, %v571
      %v588 = vadd.f32 %v532, %v572
      %v589 = vadd.f32 %v533, %v573
      %v590 = vadd.f32 %v534, %v574
      %v591 = vadd.f32 %v535, %v575
      %v592 = vld [vmem:[%s538 + $0x1] sm:$0xff]
      %v593 = vld [vmem:[%s538 + $0x9] sm:$0xff]
      %v594 = vld [vmem:[%s538 + $0x19] sm:$0xff]
      %v595 = vld [vmem:[%s538 + $0x21] sm:$0xff]
      %v596 = vld [vmem:[%s538 + $0x31] sm:$0xff]
      %v597 = vld [vmem:[%s538 + $0x39] sm:$0xff]
      %v598 = vld [vmem:[%s538 + $0x49] sm:$0xff]
      %v599 = vld [vmem:[%s538 + $0x51] sm:$0xff]
      %v600 = vld [vmem:[%s538 + $0x61] sm:$0xff]
      %v601 = vld [vmem:[%s538 + $0x69] sm:$0xff]
      %v602 = vld [vmem:[%s538 + $0x79] sm:$0xff]
      %v603 = vld [vmem:[%s538 + $0x81] sm:$0xff]
      %v604 = vld [vmem:[%s538 + $0x91] sm:$0xff]
      %v605 = vld [vmem:[%s538 + $0x99] sm:$0xff]
      %v606 = vld [vmem:[%s538 + $0xa9] sm:$0xff]
      %v607 = vld [vmem:[%s538 + $0xb1] sm:$0xff]
      %s608 = scalar_lea.vmem %s1, 6
      %v609 = vld [vmem:[%s608] sm:$0x1]
      %v611 = vperm.slane %v609, 0
      %v613 = vmul.f32 %v592, %v611
      %v614 = vmul.f32 %v593, %v611
      %v615 = vmul.f32 %v594, %v611
      %v616 = vmul.f32 %v595, %v611
      %v617 = vmul.f32 %v596, %v611
      %v618 = vmul.f32 %v597, %v611
      %v619 = vmul.f32 %v598, %v611
      %v620 = vmul.f32 %v599, %v611
      %v621 = vmul.f32 %v600, %v611
      %v622 = vmul.f32 %v601, %v611
      %v623 = vmul.f32 %v602, %v611
      %v624 = vmul.f32 %v603, %v611
      %v625 = vmul.f32 %v604, %v611
      %v626 = vmul.f32 %v605, %v611
      %v627 = vmul.f32 %v606, %v611
      %v628 = vmul.f32 %v607, %v611
      %v629 = vadd.f32 %v576, %v613
      %v630 = vadd.f32 %v577, %v614
      %v631 = vadd.f32 %v578, %v615
      %v632 = vadd.f32 %v579, %v616
      %v633 = vadd.f32 %v580, %v617
      %v634 = vadd.f32 %v581, %v618
      %v635 = vadd.f32 %v582, %v619
      %v636 = vadd.f32 %v583, %v620
      %v637 = vadd.f32 %v584, %v621
      %v638 = vadd.f32 %v585, %v622
      %v639 = vadd.f32 %v586, %v623
      %v640 = vadd.f32 %v587, %v624
      %v641 = vadd.f32 %v588, %v625
      %v642 = vadd.f32 %v589, %v626
      %v643 = vadd.f32 %v590, %v627
      %v644 = vadd.f32 %v591, %v628
      %v645 = vld [vmem:[%s538 + $0x2] sm:$0xff]
      %v646 = vld [vmem:[%s538 + $0xa] sm:$0xff]
      %v647 = vld [vmem:[%s538 + $0x1a] sm:$0xff]
      %v648 = vld [vmem:[%s538 + $0x22] sm:$0xff]
      %v649 = vld [vmem:[%s538 + $0x32] sm:$0xff]
      %v650 = vld [vmem:[%s538 + $0x3a] sm:$0xff]
      %v651 = vld [vmem:[%s538 + $0x4a] sm:$0xff]
      %v652 = vld [vmem:[%s538 + $0x52] sm:$0xff]
      %v653 = vld [vmem:[%s538 + $0x62] sm:$0xff]
      %v654 = vld [vmem:[%s538 + $0x6a] sm:$0xff]
      %v655 = vld [vmem:[%s538 + $0x7a] sm:$0xff]
      %v656 = vld [vmem:[%s538 + $0x82] sm:$0xff]
      %v657 = vld [vmem:[%s538 + $0x92] sm:$0xff]
      %v658 = vld [vmem:[%s538 + $0x9a] sm:$0xff]
      %v659 = vld [vmem:[%s538 + $0xaa] sm:$0xff]
      %v660 = vld [vmem:[%s538 + $0xb2] sm:$0xff]
      %s661 = scalar_lea.vmem %s1, 7
      %v662 = vld [vmem:[%s661] sm:$0x1]
      %v664 = vperm.slane %v662, 0
      %v666 = vmul.f32 %v645, %v664
      %v667 = vmul.f32 %v646, %v664
      %v668 = vmul.f32 %v647, %v664
      %v669 = vmul.f32 %v648, %v664
      %v670 = vmul.f32 %v649, %v664
      %v671 = vmul.f32 %v650, %v664
      %v672 = vmul.f32 %v651, %v664
      %v673 = vmul.f32 %v652, %v664
      %v674 = vmul.f32 %v653, %v664
      %v675 = vmul.f32 %v654, %v664
      %v676 = vmul.f32 %v655, %v664
      %v677 = vmul.f32 %v656, %v664
      %v678 = vmul.f32 %v657, %v664
      %v679 = vmul.f32 %v658, %v664
      %v680 = vmul.f32 %v659, %v664
      %v681 = vmul.f32 %v660, %v664
      %v682 = vadd.f32 %v629, %v666
      %v683 = vadd.f32 %v630, %v667
      %v684 = vadd.f32 %v631, %v668
      %v685 = vadd.f32 %v632, %v669
      %v686 = vadd.f32 %v633, %v670
      %v687 = vadd.f32 %v634, %v671
      %v688 = vadd.f32 %v635, %v672
      %v689 = vadd.f32 %v636, %v673
      %v690 = vadd.f32 %v637, %v674
      %v691 = vadd.f32 %v638, %v675
      %v692 = vadd.f32 %v639, %v676
      %v693 = vadd.f32 %v640, %v677
      %v694 = vadd.f32 %v641, %v678
      %v695 = vadd.f32 %v642, %v679
      %v696 = vadd.f32 %v643, %v680
      %v697 = vadd.f32 %v644, %v681
      %v698 = vld [vmem:[%s538 + $0x3] sm:$0xff]
      %v699 = vld [vmem:[%s538 + $0xb] sm:$0xff]
      %v700 = vld [vmem:[%s538 + $0x1b] sm:$0xff]
      %v701 = vld [vmem:[%s538 + $0x23] sm:$0xff]
      %v702 = vld [vmem:[%s538 + $0x33] sm:$0xff]
      %v703 = vld [vmem:[%s538 + $0x3b] sm:$0xff]
      %v704 = vld [vmem:[%s538 + $0x4b] sm:$0xff]
      %v705 = vld [vmem:[%s538 + $0x53] sm:$0xff]
      %v706 = vld [vmem:[%s538 + $0x63] sm:$0xff]
      %v707 = vld [vmem:[%s538 + $0x6b] sm:$0xff]
      %v708 = vld [vmem:[%s538 + $0x7b] sm:$0xff]
      %v709 = vld [vmem:[%s538 + $0x83] sm:$0xff]
      %v710 = vld [vmem:[%s538 + $0x93] sm:$0xff]
      %v711 = vld [vmem:[%s538 + $0x9b] sm:$0xff]
      %v712 = vld [vmem:[%s538 + $0xab] sm:$0xff]
      %v713 = vld [vmem:[%s538 + $0xb3] sm:$0xff]
      %s714 = scalar_lea.vmem %s1, 8
      %v715 = vld [vmem:[%s714] sm:$0x1]
      %v717 = vperm.slane %v715, 0
      %v719 = vmul.f32 %v698, %v717
      %v720 = vmul.f32 %v699, %v717
      %v721 = vmul.f32 %v700, %v717
      %v722 = vmul.f32 %v701, %v717
      %v723 = vmul.f32 %v702, %v717
      %v724 = vmul.f32 %v703, %v717
      %v725 = vmul.f32 %v704, %v717
      %v726 = vmul.f32 %v705, %v717
      %v727 = vmul.f32 %v706, %v717
      %v728 = vmul.f32 %v707, %v717
      %v729 = vmul.f32 %v708, %v717
      %v730 = vmul.f32 %v709, %v717
      %v731 = vmul.f32 %v710, %v717
      %v732 = vmul.f32 %v711, %v717
      %v733 = vmul.f32 %v712, %v717
      %v734 = vmul.f32 %v713, %v717
      %v735 = vadd.f32 %v682, %v719
      %v736 = vadd.f32 %v683, %v720
      %v737 = vadd.f32 %v684, %v721
      %v738 = vadd.f32 %v685, %v722
      %v739 = vadd.f32 %v686, %v723
      %v740 = vadd.f32 %v687, %v724
      %v741 = vadd.f32 %v688, %v725
      %v742 = vadd.f32 %v689, %v726
      %v743 = vadd.f32 %v690, %v727
      %v744 = vadd.f32 %v691, %v728
      %v745 = vadd.f32 %v692, %v729
      %v746 = vadd.f32 %v693, %v730
      %v747 = vadd.f32 %v694, %v731
      %v748 = vadd.f32 %v695, %v732
      %v749 = vadd.f32 %v696, %v733
      %v750 = vadd.f32 %v697, %v734
      %v751 = vld [vmem:[%s538 + $0x4] sm:$0xff]
      %v752 = vld [vmem:[%s538 + $0xc] sm:$0xff]
      %v753 = vld [vmem:[%s538 + $0x1c] sm:$0xff]
      %v754 = vld [vmem:[%s538 + $0x24] sm:$0xff]
      %v755 = vld [vmem:[%s538 + $0x34] sm:$0xff]
      %v756 = vld [vmem:[%s538 + $0x3c] sm:$0xff]
      %v757 = vld [vmem:[%s538 + $0x4c] sm:$0xff]
      %v758 = vld [vmem:[%s538 + $0x54] sm:$0xff]
      %v759 = vld [vmem:[%s538 + $0x64] sm:$0xff]
      %v760 = vld [vmem:[%s538 + $0x6c] sm:$0xff]
      %v761 = vld [vmem:[%s538 + $0x7c] sm:$0xff]
      %v762 = vld [vmem:[%s538 + $0x84] sm:$0xff]
      %v763 = vld [vmem:[%s538 + $0x94] sm:$0xff]
      %v764 = vld [vmem:[%s538 + $0x9c] sm:$0xff]
      %v765 = vld [vmem:[%s538 + $0xac] sm:$0xff]
      %v766 = vld [vmem:[%s538 + $0xb4] sm:$0xff]
      %s767 = scalar_lea.vmem %s1, 9
      %v768 = vld [vmem:[%s767] sm:$0x1]
      %v770 = vperm.slane %v768, 0
      %v772 = vmul.f32 %v751, %v770
      %v773 = vmul.f32 %v752, %v770
      %v774 = vmul.f32 %v753, %v770
      %v775 = vmul.f32 %v754, %v770
      %v776 = vmul.f32 %v755, %v770
      %v777 = vmul.f32 %v756, %v770
      %v778 = vmul.f32 %v757, %v770
      %v779 = vmul.f32 %v758, %v770
      %v780 = vmul.f32 %v759, %v770
      %v781 = vmul.f32 %v760, %v770
      %v782 = vmul.f32 %v761, %v770
      %v783 = vmul.f32 %v762, %v770
      %v784 = vmul.f32 %v763, %v770
      %v785 = vmul.f32 %v764, %v770
      %v786 = vmul.f32 %v765, %v770
      %v787 = vmul.f32 %v766, %v770
      %v788 = vadd.f32 %v735, %v772
      %v789 = vadd.f32 %v736, %v773
      %v790 = vadd.f32 %v737, %v774
      %v791 = vadd.f32 %v738, %v775
      %v792 = vadd.f32 %v739, %v776
      %v793 = vadd.f32 %v740, %v777
      %v794 = vadd.f32 %v741, %v778
      %v795 = vadd.f32 %v742, %v779
      %v796 = vadd.f32 %v743, %v780
      %v797 = vadd.f32 %v744, %v781
      %v798 = vadd.f32 %v745, %v782
      %v799 = vadd.f32 %v746, %v783
      %v800 = vadd.f32 %v747, %v784
      %v801 = vadd.f32 %v748, %v785
      %v802 = vadd.f32 %v749, %v786
      %v803 = vadd.f32 %v750, %v787
      %s804 = sadd.s32 %s269, 2
      %s805 = smul.u32 %s804, 24
      %s806 = scalar_lea.vmem %s250, %s805
      %v807 = vld [vmem:[%s806] sm:$0xff]
      %v808 = vld [vmem:[%s806 + $0x8] sm:$0xff]
      %v809 = vld [vmem:[%s806 + $0x18] sm:$0xff]
      %v810 = vld [vmem:[%s806 + $0x20] sm:$0xff]
      %v811 = vld [vmem:[%s806 + $0x30] sm:$0xff]
      %v812 = vld [vmem:[%s806 + $0x38] sm:$0xff]
      %v813 = vld [vmem:[%s806 + $0x48] sm:$0xff]
      %v814 = vld [vmem:[%s806 + $0x50] sm:$0xff]
      %v815 = vld [vmem:[%s806 + $0x60] sm:$0xff]
      %v816 = vld [vmem:[%s806 + $0x68] sm:$0xff]
      %v817 = vld [vmem:[%s806 + $0x78] sm:$0xff]
      %v818 = vld [vmem:[%s806 + $0x80] sm:$0xff]
      %v819 = vld [vmem:[%s806 + $0x90] sm:$0xff]
      %v820 = vld [vmem:[%s806 + $0x98] sm:$0xff]
      %v821 = vld [vmem:[%s806 + $0xa8] sm:$0xff]
      %v822 = vld [vmem:[%s806 + $0xb0] sm:$0xff]
      %s823 = scalar_lea.vmem %s1, 10
      %v824 = vld [vmem:[%s823] sm:$0x1]
      %v826 = vperm.slane %v824, 0
      %v828 = vmul.f32 %v807, %v826
      %v829 = vmul.f32 %v808, %v826
      %v830 = vmul.f32 %v809, %v826
      %v831 = vmul.f32 %v810, %v826
      %v832 = vmul.f32 %v811, %v826
      %v833 = vmul.f32 %v812, %v826
      %v834 = vmul.f32 %v813, %v826
      %v835 = vmul.f32 %v814, %v826
      %v836 = vmul.f32 %v815, %v826
      %v837 = vmul.f32 %v816, %v826
      %v838 = vmul.f32 %v817, %v826
      %v839 = vmul.f32 %v818, %v826
      %v840 = vmul.f32 %v819, %v826
      %v841 = vmul.f32 %v820, %v826
      %v842 = vmul.f32 %v821, %v826
      %v843 = vmul.f32 %v822, %v826
      %v844 = vadd.f32 %v788, %v828
      %v845 = vadd.f32 %v789, %v829
      %v846 = vadd.f32 %v790, %v830
      %v847 = vadd.f32 %v791, %v831
      %v848 = vadd.f32 %v792, %v832
      %v849 = vadd.f32 %v793, %v833
      %v850 = vadd.f32 %v794, %v834
      %v851 = vadd.f32 %v795, %v835
      %v852 = vadd.f32 %v796, %v836
      %v853 = vadd.f32 %v797, %v837
      %v854 = vadd.f32 %v798, %v838
      %v855 = vadd.f32 %v799, %v839
      %v856 = vadd.f32 %v800, %v840
      %v857 = vadd.f32 %v801, %v841
      %v858 = vadd.f32 %v802, %v842
      %v859 = vadd.f32 %v803, %v843
      %v860 = vld [vmem:[%s806 + $0x1] sm:$0xff]
      %v861 = vld [vmem:[%s806 + $0x9] sm:$0xff]
      %v862 = vld [vmem:[%s806 + $0x19] sm:$0xff]
      %v863 = vld [vmem:[%s806 + $0x21] sm:$0xff]
      %v864 = vld [vmem:[%s806 + $0x31] sm:$0xff]
      %v865 = vld [vmem:[%s806 + $0x39] sm:$0xff]
      %v866 = vld [vmem:[%s806 + $0x49] sm:$0xff]
      %v867 = vld [vmem:[%s806 + $0x51] sm:$0xff]
      %v868 = vld [vmem:[%s806 + $0x61] sm:$0xff]
      %v869 = vld [vmem:[%s806 + $0x69] sm:$0xff]
      %v870 = vld [vmem:[%s806 + $0x79] sm:$0xff]
      %v871 = vld [vmem:[%s806 + $0x81] sm:$0xff]
      %v872 = vld [vmem:[%s806 + $0x91] sm:$0xff]
      %v873 = vld [vmem:[%s806 + $0x99] sm:$0xff]
      %v874 = vld [vmem:[%s806 + $0xa9] sm:$0xff]
      %v875 = vld [vmem:[%s806 + $0xb1] sm:$0xff]
      %s876 = scalar_lea.vmem %s1, 11
      %v877 = vld [vmem:[%s876] sm:$0x1]
      %v879 = vperm.slane %v877, 0
      %v881 = vmul.f32 %v860, %v879
      %v882 = vmul.f32 %v861, %v879
      %v883 = vmul.f32 %v862, %v879
      %v884 = vmul.f32 %v863, %v879
      %v885 = vmul.f32 %v864, %v879
      %v886 = vmul.f32 %v865, %v879
      %v887 = vmul.f32 %v866, %v879
      %v888 = vmul.f32 %v867, %v879
      %v889 = vmul.f32 %v868, %v879
      %v890 = vmul.f32 %v869, %v879
      %v891 = vmul.f32 %v870, %v879
      %v892 = vmul.f32 %v871, %v879
      %v893 = vmul.f32 %v872, %v879
      %v894 = vmul.f32 %v873, %v879
      %v895 = vmul.f32 %v874, %v879
      %v896 = vmul.f32 %v875, %v879
      %v897 = vadd.f32 %v844, %v881
      %v898 = vadd.f32 %v845, %v882
      %v899 = vadd.f32 %v846, %v883
      %v900 = vadd.f32 %v847, %v884
      %v901 = vadd.f32 %v848, %v885
      %v902 = vadd.f32 %v849, %v886
      %v903 = vadd.f32 %v850, %v887
      %v904 = vadd.f32 %v851, %v888
      %v905 = vadd.f32 %v852, %v889
      %v906 = vadd.f32 %v853, %v890
      %v907 = vadd.f32 %v854, %v891
      %v908 = vadd.f32 %v855, %v892
      %v909 = vadd.f32 %v856, %v893
      %v910 = vadd.f32 %v857, %v894
      %v911 = vadd.f32 %v858, %v895
      %v912 = vadd.f32 %v859, %v896
      %v913 = vld [vmem:[%s806 + $0x2] sm:$0xff]
      %v914 = vld [vmem:[%s806 + $0xa] sm:$0xff]
      %v915 = vld [vmem:[%s806 + $0x1a] sm:$0xff]
      %v916 = vld [vmem:[%s806 + $0x22] sm:$0xff]
      %v917 = vld [vmem:[%s806 + $0x32] sm:$0xff]
      %v918 = vld [vmem:[%s806 + $0x3a] sm:$0xff]
      %v919 = vld [vmem:[%s806 + $0x4a] sm:$0xff]
      %v920 = vld [vmem:[%s806 + $0x52] sm:$0xff]
      %v921 = vld [vmem:[%s806 + $0x62] sm:$0xff]
      %v922 = vld [vmem:[%s806 + $0x6a] sm:$0xff]
      %v923 = vld [vmem:[%s806 + $0x7a] sm:$0xff]
      %v924 = vld [vmem:[%s806 + $0x82] sm:$0xff]
      %v925 = vld [vmem:[%s806 + $0x92] sm:$0xff]
      %v926 = vld [vmem:[%s806 + $0x9a] sm:$0xff]
      %v927 = vld [vmem:[%s806 + $0xaa] sm:$0xff]
      %v928 = vld [vmem:[%s806 + $0xb2] sm:$0xff]
      %s929 = scalar_lea.vmem %s1, 12
      %v930 = vld [vmem:[%s929] sm:$0x1]
      %v932 = vperm.slane %v930, 0
      %v934 = vmul.f32 %v913, %v932
      %v935 = vmul.f32 %v914, %v932
      %v936 = vmul.f32 %v915, %v932
      %v937 = vmul.f32 %v916, %v932
      %v938 = vmul.f32 %v917, %v932
      %v939 = vmul.f32 %v918, %v932
      %v940 = vmul.f32 %v919, %v932
      %v941 = vmul.f32 %v920, %v932
      %v942 = vmul.f32 %v921, %v932
      %v943 = vmul.f32 %v922, %v932
      %v944 = vmul.f32 %v923, %v932
      %v945 = vmul.f32 %v924, %v932
      %v946 = vmul.f32 %v925, %v932
      %v947 = vmul.f32 %v926, %v932
      %v948 = vmul.f32 %v927, %v932
      %v949 = vmul.f32 %v928, %v932
      %v950 = vadd.f32 %v897, %v934
      %v951 = vadd.f32 %v898, %v935
      %v952 = vadd.f32 %v899, %v936
      %v953 = vadd.f32 %v900, %v937
      %v954 = vadd.f32 %v901, %v938
      %v955 = vadd.f32 %v902, %v939
      %v956 = vadd.f32 %v903, %v940
      %v957 = vadd.f32 %v904, %v941
      %v958 = vadd.f32 %v905, %v942
      %v959 = vadd.f32 %v906, %v943
      %v960 = vadd.f32 %v907, %v944
      %v961 = vadd.f32 %v908, %v945
      %v962 = vadd.f32 %v909, %v946
      %v963 = vadd.f32 %v910, %v947
      %v964 = vadd.f32 %v911, %v948
      %v965 = vadd.f32 %v912, %v949
      %v966 = vld [vmem:[%s806 + $0x3] sm:$0xff]
      %v967 = vld [vmem:[%s806 + $0xb] sm:$0xff]
      %v968 = vld [vmem:[%s806 + $0x1b] sm:$0xff]
      %v969 = vld [vmem:[%s806 + $0x23] sm:$0xff]
      %v970 = vld [vmem:[%s806 + $0x33] sm:$0xff]
      %v971 = vld [vmem:[%s806 + $0x3b] sm:$0xff]
      %v972 = vld [vmem:[%s806 + $0x4b] sm:$0xff]
      %v973 = vld [vmem:[%s806 + $0x53] sm:$0xff]
      %v974 = vld [vmem:[%s806 + $0x63] sm:$0xff]
      %v975 = vld [vmem:[%s806 + $0x6b] sm:$0xff]
      %v976 = vld [vmem:[%s806 + $0x7b] sm:$0xff]
      %v977 = vld [vmem:[%s806 + $0x83] sm:$0xff]
      %v978 = vld [vmem:[%s806 + $0x93] sm:$0xff]
      %v979 = vld [vmem:[%s806 + $0x9b] sm:$0xff]
      %v980 = vld [vmem:[%s806 + $0xab] sm:$0xff]
      %v981 = vld [vmem:[%s806 + $0xb3] sm:$0xff]
      %s982 = scalar_lea.vmem %s1, 13
      %v983 = vld [vmem:[%s982] sm:$0x1]
      %v985 = vperm.slane %v983, 0
      %v987 = vmul.f32 %v966, %v985
      %v988 = vmul.f32 %v967, %v985
      %v989 = vmul.f32 %v968, %v985
      %v990 = vmul.f32 %v969, %v985
      %v991 = vmul.f32 %v970, %v985
      %v992 = vmul.f32 %v971, %v985
      %v993 = vmul.f32 %v972, %v985
      %v994 = vmul.f32 %v973, %v985
      %v995 = vmul.f32 %v974, %v985
      %v996 = vmul.f32 %v975, %v985
      %v997 = vmul.f32 %v976, %v985
      %v998 = vmul.f32 %v977, %v985
      %v999 = vmul.f32 %v978, %v985
      %v1000 = vmul.f32 %v979, %v985
      %v1001 = vmul.f32 %v980, %v985
      %v1002 = vmul.f32 %v981, %v985
      %v1003 = vadd.f32 %v950, %v987
      %v1004 = vadd.f32 %v951, %v988
      %v1005 = vadd.f32 %v952, %v989
      %v1006 = vadd.f32 %v953, %v990
      %v1007 = vadd.f32 %v954, %v991
      %v1008 = vadd.f32 %v955, %v992
      %v1009 = vadd.f32 %v956, %v993
      %v1010 = vadd.f32 %v957, %v994
      %v1011 = vadd.f32 %v958, %v995
      %v1012 = vadd.f32 %v959, %v996
      %v1013 = vadd.f32 %v960, %v997
      %v1014 = vadd.f32 %v961, %v998
      %v1015 = vadd.f32 %v962, %v999
      %v1016 = vadd.f32 %v963, %v1000
      %v1017 = vadd.f32 %v964, %v1001
      %v1018 = vadd.f32 %v965, %v1002
      %v1019 = vld [vmem:[%s806 + $0x4] sm:$0xff]
      %v1020 = vld [vmem:[%s806 + $0xc] sm:$0xff]
      %v1021 = vld [vmem:[%s806 + $0x1c] sm:$0xff]
      %v1022 = vld [vmem:[%s806 + $0x24] sm:$0xff]
      %v1023 = vld [vmem:[%s806 + $0x34] sm:$0xff]
      %v1024 = vld [vmem:[%s806 + $0x3c] sm:$0xff]
      %v1025 = vld [vmem:[%s806 + $0x4c] sm:$0xff]
      %v1026 = vld [vmem:[%s806 + $0x54] sm:$0xff]
      %v1027 = vld [vmem:[%s806 + $0x64] sm:$0xff]
      %v1028 = vld [vmem:[%s806 + $0x6c] sm:$0xff]
      %v1029 = vld [vmem:[%s806 + $0x7c] sm:$0xff]
      %v1030 = vld [vmem:[%s806 + $0x84] sm:$0xff]
      %v1031 = vld [vmem:[%s806 + $0x94] sm:$0xff]
      %v1032 = vld [vmem:[%s806 + $0x9c] sm:$0xff]
      %v1033 = vld [vmem:[%s806 + $0xac] sm:$0xff]
      %v1034 = vld [vmem:[%s806 + $0xb4] sm:$0xff]
      %s1035 = scalar_lea.vmem %s1, 14
      %v1036 = vld [vmem:[%s1035] sm:$0x1]
      %v1038 = vperm.slane %v1036, 0
      %v1040 = vmul.f32 %v1019, %v1038
      %v1041 = vmul.f32 %v1020, %v1038
      %v1042 = vmul.f32 %v1021, %v1038
      %v1043 = vmul.f32 %v1022, %v1038
      %v1044 = vmul.f32 %v1023, %v1038
      %v1045 = vmul.f32 %v1024, %v1038
      %v1046 = vmul.f32 %v1025, %v1038
      %v1047 = vmul.f32 %v1026, %v1038
      %v1048 = vmul.f32 %v1027, %v1038
      %v1049 = vmul.f32 %v1028, %v1038
      %v1050 = vmul.f32 %v1029, %v1038
      %v1051 = vmul.f32 %v1030, %v1038
      %v1052 = vmul.f32 %v1031, %v1038
      %v1053 = vmul.f32 %v1032, %v1038
      %v1054 = vmul.f32 %v1033, %v1038
      %v1055 = vmul.f32 %v1034, %v1038
      %v1056 = vadd.f32 %v1003, %v1040
      %v1057 = vadd.f32 %v1004, %v1041
      %v1058 = vadd.f32 %v1005, %v1042
      %v1059 = vadd.f32 %v1006, %v1043
      %v1060 = vadd.f32 %v1007, %v1044
      %v1061 = vadd.f32 %v1008, %v1045
      %v1062 = vadd.f32 %v1009, %v1046
      %v1063 = vadd.f32 %v1010, %v1047
      %v1064 = vadd.f32 %v1011, %v1048
      %v1065 = vadd.f32 %v1012, %v1049
      %v1066 = vadd.f32 %v1013, %v1050
      %v1067 = vadd.f32 %v1014, %v1051
      %v1068 = vadd.f32 %v1015, %v1052
      %v1069 = vadd.f32 %v1016, %v1053
      %v1070 = vadd.f32 %v1017, %v1054
      %v1071 = vadd.f32 %v1018, %v1055
      %s1072 = sadd.s32 %s269, 3
      %s1073 = smul.u32 %s1072, 24
      %s1074 = scalar_lea.vmem %s250, %s1073
      %v1075 = vld [vmem:[%s1074] sm:$0xff]
      %v1076 = vld [vmem:[%s1074 + $0x8] sm:$0xff]
      %v1077 = vld [vmem:[%s1074 + $0x18] sm:$0xff]
      %v1078 = vld [vmem:[%s1074 + $0x20] sm:$0xff]
      %v1079 = vld [vmem:[%s1074 + $0x30] sm:$0xff]
      %v1080 = vld [vmem:[%s1074 + $0x38] sm:$0xff]
      %v1081 = vld [vmem:[%s1074 + $0x48] sm:$0xff]
      %v1082 = vld [vmem:[%s1074 + $0x50] sm:$0xff]
      %v1083 = vld [vmem:[%s1074 + $0x60] sm:$0xff]
      %v1084 = vld [vmem:[%s1074 + $0x68] sm:$0xff]
      %v1085 = vld [vmem:[%s1074 + $0x78] sm:$0xff]
      %v1086 = vld [vmem:[%s1074 + $0x80] sm:$0xff]
      %v1087 = vld [vmem:[%s1074 + $0x90] sm:$0xff]
      %v1088 = vld [vmem:[%s1074 + $0x98] sm:$0xff]
      %v1089 = vld [vmem:[%s1074 + $0xa8] sm:$0xff]
      %v1090 = vld [vmem:[%s1074 + $0xb0] sm:$0xff]
      %s1091 = scalar_lea.vmem %s1, 15
      %v1092 = vld [vmem:[%s1091] sm:$0x1]
      %v1094 = vperm.slane %v1092, 0
      %v1096 = vmul.f32 %v1075, %v1094
      %v1097 = vmul.f32 %v1076, %v1094
      %v1098 = vmul.f32 %v1077, %v1094
      %v1099 = vmul.f32 %v1078, %v1094
      %v1100 = vmul.f32 %v1079, %v1094
      %v1101 = vmul.f32 %v1080, %v1094
      %v1102 = vmul.f32 %v1081, %v1094
      %v1103 = vmul.f32 %v1082, %v1094
      %v1104 = vmul.f32 %v1083, %v1094
      %v1105 = vmul.f32 %v1084, %v1094
      %v1106 = vmul.f32 %v1085, %v1094
      %v1107 = vmul.f32 %v1086, %v1094
      %v1108 = vmul.f32 %v1087, %v1094
      %v1109 = vmul.f32 %v1088, %v1094
      %v1110 = vmul.f32 %v1089, %v1094
      %v1111 = vmul.f32 %v1090, %v1094
      %v1112 = vadd.f32 %v1056, %v1096
      %v1113 = vadd.f32 %v1057, %v1097
      %v1114 = vadd.f32 %v1058, %v1098
      %v1115 = vadd.f32 %v1059, %v1099
      %v1116 = vadd.f32 %v1060, %v1100
      %v1117 = vadd.f32 %v1061, %v1101
      %v1118 = vadd.f32 %v1062, %v1102
      %v1119 = vadd.f32 %v1063, %v1103
      %v1120 = vadd.f32 %v1064, %v1104
      %v1121 = vadd.f32 %v1065, %v1105
      %v1122 = vadd.f32 %v1066, %v1106
      %v1123 = vadd.f32 %v1067, %v1107
      %v1124 = vadd.f32 %v1068, %v1108
      %v1125 = vadd.f32 %v1069, %v1109
      %v1126 = vadd.f32 %v1070, %v1110
      %v1127 = vadd.f32 %v1071, %v1111
      %v1128 = vld [vmem:[%s1074 + $0x1] sm:$0xff]
      %v1129 = vld [vmem:[%s1074 + $0x9] sm:$0xff]
      %v1130 = vld [vmem:[%s1074 + $0x19] sm:$0xff]
      %v1131 = vld [vmem:[%s1074 + $0x21] sm:$0xff]
      %v1132 = vld [vmem:[%s1074 + $0x31] sm:$0xff]
      %v1133 = vld [vmem:[%s1074 + $0x39] sm:$0xff]
      %v1134 = vld [vmem:[%s1074 + $0x49] sm:$0xff]
      %v1135 = vld [vmem:[%s1074 + $0x51] sm:$0xff]
      %v1136 = vld [vmem:[%s1074 + $0x61] sm:$0xff]
      %v1137 = vld [vmem:[%s1074 + $0x69] sm:$0xff]
      %v1138 = vld [vmem:[%s1074 + $0x79] sm:$0xff]
      %v1139 = vld [vmem:[%s1074 + $0x81] sm:$0xff]
      %v1140 = vld [vmem:[%s1074 + $0x91] sm:$0xff]
      %v1141 = vld [vmem:[%s1074 + $0x99] sm:$0xff]
      %v1142 = vld [vmem:[%s1074 + $0xa9] sm:$0xff]
      %v1143 = vld [vmem:[%s1074 + $0xb1] sm:$0xff]
      %s1144 = scalar_lea.vmem %s1, 16
      %v1145 = vld [vmem:[%s1144] sm:$0x1]
      %v1147 = vperm.slane %v1145, 0
      %v1149 = vmul.f32 %v1128, %v1147
      %v1150 = vmul.f32 %v1129, %v1147
      %v1151 = vmul.f32 %v1130, %v1147
      %v1152 = vmul.f32 %v1131, %v1147
      %v1153 = vmul.f32 %v1132, %v1147
      %v1154 = vmul.f32 %v1133, %v1147
      %v1155 = vmul.f32 %v1134, %v1147
      %v1156 = vmul.f32 %v1135, %v1147
      %v1157 = vmul.f32 %v1136, %v1147
      %v1158 = vmul.f32 %v1137, %v1147
      %v1159 = vmul.f32 %v1138, %v1147
      %v1160 = vmul.f32 %v1139, %v1147
      %v1161 = vmul.f32 %v1140, %v1147
      %v1162 = vmul.f32 %v1141, %v1147
      %v1163 = vmul.f32 %v1142, %v1147
      %v1164 = vmul.f32 %v1143, %v1147
      %v1165 = vadd.f32 %v1112, %v1149
      %v1166 = vadd.f32 %v1113, %v1150
      %v1167 = vadd.f32 %v1114, %v1151
      %v1168 = vadd.f32 %v1115, %v1152
      %v1169 = vadd.f32 %v1116, %v1153
      %v1170 = vadd.f32 %v1117, %v1154
      %v1171 = vadd.f32 %v1118, %v1155
      %v1172 = vadd.f32 %v1119, %v1156
      %v1173 = vadd.f32 %v1120, %v1157
      %v1174 = vadd.f32 %v1121, %v1158
      %v1175 = vadd.f32 %v1122, %v1159
      %v1176 = vadd.f32 %v1123, %v1160
      %v1177 = vadd.f32 %v1124, %v1161
      %v1178 = vadd.f32 %v1125, %v1162
      %v1179 = vadd.f32 %v1126, %v1163
      %v1180 = vadd.f32 %v1127, %v1164
      %v1181 = vld [vmem:[%s1074 + $0x2] sm:$0xff]
      %v1182 = vld [vmem:[%s1074 + $0xa] sm:$0xff]
      %v1183 = vld [vmem:[%s1074 + $0x1a] sm:$0xff]
      %v1184 = vld [vmem:[%s1074 + $0x22] sm:$0xff]
      %v1185 = vld [vmem:[%s1074 + $0x32] sm:$0xff]
      %v1186 = vld [vmem:[%s1074 + $0x3a] sm:$0xff]
      %v1187 = vld [vmem:[%s1074 + $0x4a] sm:$0xff]
      %v1188 = vld [vmem:[%s1074 + $0x52] sm:$0xff]
      %v1189 = vld [vmem:[%s1074 + $0x62] sm:$0xff]
      %v1190 = vld [vmem:[%s1074 + $0x6a] sm:$0xff]
      %v1191 = vld [vmem:[%s1074 + $0x7a] sm:$0xff]
      %v1192 = vld [vmem:[%s1074 + $0x82] sm:$0xff]
      %v1193 = vld [vmem:[%s1074 + $0x92] sm:$0xff]
      %v1194 = vld [vmem:[%s1074 + $0x9a] sm:$0xff]
      %v1195 = vld [vmem:[%s1074 + $0xaa] sm:$0xff]
      %v1196 = vld [vmem:[%s1074 + $0xb2] sm:$0xff]
      %s1197 = scalar_lea.vmem %s1, 17
      %v1198 = vld [vmem:[%s1197] sm:$0x1]
      %v1200 = vperm.slane %v1198, 0
      %v1202 = vmul.f32 %v1181, %v1200
      %v1203 = vmul.f32 %v1182, %v1200
      %v1204 = vmul.f32 %v1183, %v1200
      %v1205 = vmul.f32 %v1184, %v1200
      %v1206 = vmul.f32 %v1185, %v1200
      %v1207 = vmul.f32 %v1186, %v1200
      %v1208 = vmul.f32 %v1187, %v1200
      %v1209 = vmul.f32 %v1188, %v1200
      %v1210 = vmul.f32 %v1189, %v1200
      %v1211 = vmul.f32 %v1190, %v1200
      %v1212 = vmul.f32 %v1191, %v1200
      %v1213 = vmul.f32 %v1192, %v1200
      %v1214 = vmul.f32 %v1193, %v1200
      %v1215 = vmul.f32 %v1194, %v1200
      %v1216 = vmul.f32 %v1195, %v1200
      %v1217 = vmul.f32 %v1196, %v1200
      %v1218 = vadd.f32 %v1165, %v1202
      %v1219 = vadd.f32 %v1166, %v1203
      %v1220 = vadd.f32 %v1167, %v1204
      %v1221 = vadd.f32 %v1168, %v1205
      %v1222 = vadd.f32 %v1169, %v1206
      %v1223 = vadd.f32 %v1170, %v1207
      %v1224 = vadd.f32 %v1171, %v1208
      %v1225 = vadd.f32 %v1172, %v1209
      %v1226 = vadd.f32 %v1173, %v1210
      %v1227 = vadd.f32 %v1174, %v1211
      %v1228 = vadd.f32 %v1175, %v1212
      %v1229 = vadd.f32 %v1176, %v1213
      %v1230 = vadd.f32 %v1177, %v1214
      %v1231 = vadd.f32 %v1178, %v1215
      %v1232 = vadd.f32 %v1179, %v1216
      %v1233 = vadd.f32 %v1180, %v1217
      %v1234 = vld [vmem:[%s1074 + $0x3] sm:$0xff]
      %v1235 = vld [vmem:[%s1074 + $0xb] sm:$0xff]
      %v1236 = vld [vmem:[%s1074 + $0x1b] sm:$0xff]
      %v1237 = vld [vmem:[%s1074 + $0x23] sm:$0xff]
      %v1238 = vld [vmem:[%s1074 + $0x33] sm:$0xff]
      %v1239 = vld [vmem:[%s1074 + $0x3b] sm:$0xff]
      %v1240 = vld [vmem:[%s1074 + $0x4b] sm:$0xff]
      %v1241 = vld [vmem:[%s1074 + $0x53] sm:$0xff]
      %v1242 = vld [vmem:[%s1074 + $0x63] sm:$0xff]
      %v1243 = vld [vmem:[%s1074 + $0x6b] sm:$0xff]
      %v1244 = vld [vmem:[%s1074 + $0x7b] sm:$0xff]
      %v1245 = vld [vmem:[%s1074 + $0x83] sm:$0xff]
      %v1246 = vld [vmem:[%s1074 + $0x93] sm:$0xff]
      %v1247 = vld [vmem:[%s1074 + $0x9b] sm:$0xff]
      %v1248 = vld [vmem:[%s1074 + $0xab] sm:$0xff]
      %v1249 = vld [vmem:[%s1074 + $0xb3] sm:$0xff]
      %s1250 = scalar_lea.vmem %s1, 18
      %v1251 = vld [vmem:[%s1250] sm:$0x1]
      %v1253 = vperm.slane %v1251, 0
      %v1255 = vmul.f32 %v1234, %v1253
      %v1256 = vmul.f32 %v1235, %v1253
      %v1257 = vmul.f32 %v1236, %v1253
      %v1258 = vmul.f32 %v1237, %v1253
      %v1259 = vmul.f32 %v1238, %v1253
      %v1260 = vmul.f32 %v1239, %v1253
      %v1261 = vmul.f32 %v1240, %v1253
      %v1262 = vmul.f32 %v1241, %v1253
      %v1263 = vmul.f32 %v1242, %v1253
      %v1264 = vmul.f32 %v1243, %v1253
      %v1265 = vmul.f32 %v1244, %v1253
      %v1266 = vmul.f32 %v1245, %v1253
      %v1267 = vmul.f32 %v1246, %v1253
      %v1268 = vmul.f32 %v1247, %v1253
      %v1269 = vmul.f32 %v1248, %v1253
      %v1270 = vmul.f32 %v1249, %v1253
      %v1271 = vadd.f32 %v1218, %v1255
      %v1272 = vadd.f32 %v1219, %v1256
      %v1273 = vadd.f32 %v1220, %v1257
      %v1274 = vadd.f32 %v1221, %v1258
      %v1275 = vadd.f32 %v1222, %v1259
      %v1276 = vadd.f32 %v1223, %v1260
      %v1277 = vadd.f32 %v1224, %v1261
      %v1278 = vadd.f32 %v1225, %v1262
      %v1279 = vadd.f32 %v1226, %v1263
      %v1280 = vadd.f32 %v1227, %v1264
      %v1281 = vadd.f32 %v1228, %v1265
      %v1282 = vadd.f32 %v1229, %v1266
      %v1283 = vadd.f32 %v1230, %v1267
      %v1284 = vadd.f32 %v1231, %v1268
      %v1285 = vadd.f32 %v1232, %v1269
      %v1286 = vadd.f32 %v1233, %v1270
      %v1287 = vld [vmem:[%s1074 + $0x4] sm:$0xff]
      %v1288 = vld [vmem:[%s1074 + $0xc] sm:$0xff]
      %v1289 = vld [vmem:[%s1074 + $0x1c] sm:$0xff]
      %v1290 = vld [vmem:[%s1074 + $0x24] sm:$0xff]
      %v1291 = vld [vmem:[%s1074 + $0x34] sm:$0xff]
      %v1292 = vld [vmem:[%s1074 + $0x3c] sm:$0xff]
      %v1293 = vld [vmem:[%s1074 + $0x4c] sm:$0xff]
      %v1294 = vld [vmem:[%s1074 + $0x54] sm:$0xff]
      %v1295 = vld [vmem:[%s1074 + $0x64] sm:$0xff]
      %v1296 = vld [vmem:[%s1074 + $0x6c] sm:$0xff]
      %v1297 = vld [vmem:[%s1074 + $0x7c] sm:$0xff]
      %v1298 = vld [vmem:[%s1074 + $0x84] sm:$0xff]
      %v1299 = vld [vmem:[%s1074 + $0x94] sm:$0xff]
      %v1300 = vld [vmem:[%s1074 + $0x9c] sm:$0xff]
      %v1301 = vld [vmem:[%s1074 + $0xac] sm:$0xff]
      %v1302 = vld [vmem:[%s1074 + $0xb4] sm:$0xff]
      %s1303 = scalar_lea.vmem %s1, 19
      %v1304 = vld [vmem:[%s1303] sm:$0x1]
      %v1306 = vperm.slane %v1304, 0
      %v1308 = vmul.f32 %v1287, %v1306
      %v1309 = vmul.f32 %v1288, %v1306
      %v1310 = vmul.f32 %v1289, %v1306
      %v1311 = vmul.f32 %v1290, %v1306
      %v1312 = vmul.f32 %v1291, %v1306
      %v1313 = vmul.f32 %v1292, %v1306
      %v1314 = vmul.f32 %v1293, %v1306
      %v1315 = vmul.f32 %v1294, %v1306
      %v1316 = vmul.f32 %v1295, %v1306
      %v1317 = vmul.f32 %v1296, %v1306
      %v1318 = vmul.f32 %v1297, %v1306
      %v1319 = vmul.f32 %v1298, %v1306
      %v1320 = vmul.f32 %v1299, %v1306
      %v1321 = vmul.f32 %v1300, %v1306
      %v1322 = vmul.f32 %v1301, %v1306
      %v1323 = vmul.f32 %v1302, %v1306
      %v1324 = vadd.f32 %v1271, %v1308
      %v1325 = vadd.f32 %v1272, %v1309
      %v1326 = vadd.f32 %v1273, %v1310
      %v1327 = vadd.f32 %v1274, %v1311
      %v1328 = vadd.f32 %v1275, %v1312
      %v1329 = vadd.f32 %v1276, %v1313
      %v1330 = vadd.f32 %v1277, %v1314
      %v1331 = vadd.f32 %v1278, %v1315
      %v1332 = vadd.f32 %v1279, %v1316
      %v1333 = vadd.f32 %v1280, %v1317
      %v1334 = vadd.f32 %v1281, %v1318
      %v1335 = vadd.f32 %v1282, %v1319
      %v1336 = vadd.f32 %v1283, %v1320
      %v1337 = vadd.f32 %v1284, %v1321
      %v1338 = vadd.f32 %v1285, %v1322
      %v1339 = vadd.f32 %v1286, %v1323
      %s1340 = sadd.s32 %s269, 4
      %s1341 = smul.u32 %s1340, 24
      %s1342 = scalar_lea.vmem %s250, %s1341
      %v1343 = vld [vmem:[%s1342] sm:$0xff]
      %v1344 = vld [vmem:[%s1342 + $0x8] sm:$0xff]
      %v1345 = vld [vmem:[%s1342 + $0x18] sm:$0xff]
      %v1346 = vld [vmem:[%s1342 + $0x20] sm:$0xff]
      %v1347 = vld [vmem:[%s1342 + $0x30] sm:$0xff]
      %v1348 = vld [vmem:[%s1342 + $0x38] sm:$0xff]
      %v1349 = vld [vmem:[%s1342 + $0x48] sm:$0xff]
      %v1350 = vld [vmem:[%s1342 + $0x50] sm:$0xff]
      %v1351 = vld [vmem:[%s1342 + $0x60] sm:$0xff]
      %v1352 = vld [vmem:[%s1342 + $0x68] sm:$0xff]
      %v1353 = vld [vmem:[%s1342 + $0x78] sm:$0xff]
      %v1354 = vld [vmem:[%s1342 + $0x80] sm:$0xff]
      %v1355 = vld [vmem:[%s1342 + $0x90] sm:$0xff]
      %v1356 = vld [vmem:[%s1342 + $0x98] sm:$0xff]
      %v1357 = vld [vmem:[%s1342 + $0xa8] sm:$0xff]
      %v1358 = vld [vmem:[%s1342 + $0xb0] sm:$0xff]
      %s1359 = scalar_lea.vmem %s1, 20
      %v1360 = vld [vmem:[%s1359] sm:$0x1]
      %v1362 = vperm.slane %v1360, 0
      %v1364 = vmul.f32 %v1343, %v1362
      %v1365 = vmul.f32 %v1344, %v1362
      %v1366 = vmul.f32 %v1345, %v1362
      %v1367 = vmul.f32 %v1346, %v1362
      %v1368 = vmul.f32 %v1347, %v1362
      %v1369 = vmul.f32 %v1348, %v1362
      %v1370 = vmul.f32 %v1349, %v1362
      %v1371 = vmul.f32 %v1350, %v1362
      %v1372 = vmul.f32 %v1351, %v1362
      %v1373 = vmul.f32 %v1352, %v1362
      %v1374 = vmul.f32 %v1353, %v1362
      %v1375 = vmul.f32 %v1354, %v1362
      %v1376 = vmul.f32 %v1355, %v1362
      %v1377 = vmul.f32 %v1356, %v1362
      %v1378 = vmul.f32 %v1357, %v1362
      %v1379 = vmul.f32 %v1358, %v1362
      %v1380 = vadd.f32 %v1324, %v1364
      %v1381 = vadd.f32 %v1325, %v1365
      %v1382 = vadd.f32 %v1326, %v1366
      %v1383 = vadd.f32 %v1327, %v1367
      %v1384 = vadd.f32 %v1328, %v1368
      %v1385 = vadd.f32 %v1329, %v1369
      %v1386 = vadd.f32 %v1330, %v1370
      %v1387 = vadd.f32 %v1331, %v1371
      %v1388 = vadd.f32 %v1332, %v1372
      %v1389 = vadd.f32 %v1333, %v1373
      %v1390 = vadd.f32 %v1334, %v1374
      %v1391 = vadd.f32 %v1335, %v1375
      %v1392 = vadd.f32 %v1336, %v1376
      %v1393 = vadd.f32 %v1337, %v1377
      %v1394 = vadd.f32 %v1338, %v1378
      %v1395 = vadd.f32 %v1339, %v1379
      %v1396 = vld [vmem:[%s1342 + $0x1] sm:$0xff]
      %v1397 = vld [vmem:[%s1342 + $0x9] sm:$0xff]
      %v1398 = vld [vmem:[%s1342 + $0x19] sm:$0xff]
      %v1399 = vld [vmem:[%s1342 + $0x21] sm:$0xff]
      %v1400 = vld [vmem:[%s1342 + $0x31] sm:$0xff]
      %v1401 = vld [vmem:[%s1342 + $0x39] sm:$0xff]
      %v1402 = vld [vmem:[%s1342 + $0x49] sm:$0xff]
      %v1403 = vld [vmem:[%s1342 + $0x51] sm:$0xff]
      %v1404 = vld [vmem:[%s1342 + $0x61] sm:$0xff]
      %v1405 = vld [vmem:[%s1342 + $0x69] sm:$0xff]
      %v1406 = vld [vmem:[%s1342 + $0x79] sm:$0xff]
      %v1407 = vld [vmem:[%s1342 + $0x81] sm:$0xff]
      %v1408 = vld [vmem:[%s1342 + $0x91] sm:$0xff]
      %v1409 = vld [vmem:[%s1342 + $0x99] sm:$0xff]
      %v1410 = vld [vmem:[%s1342 + $0xa9] sm:$0xff]
      %v1411 = vld [vmem:[%s1342 + $0xb1] sm:$0xff]
      %s1412 = scalar_lea.vmem %s1, 21
      %v1413 = vld [vmem:[%s1412] sm:$0x1]
      %v1415 = vperm.slane %v1413, 0
      %v1417 = vmul.f32 %v1396, %v1415
      %v1418 = vmul.f32 %v1397, %v1415
      %v1419 = vmul.f32 %v1398, %v1415
      %v1420 = vmul.f32 %v1399, %v1415
      %v1421 = vmul.f32 %v1400, %v1415
      %v1422 = vmul.f32 %v1401, %v1415
      %v1423 = vmul.f32 %v1402, %v1415
      %v1424 = vmul.f32 %v1403, %v1415
      %v1425 = vmul.f32 %v1404, %v1415
      %v1426 = vmul.f32 %v1405, %v1415
      %v1427 = vmul.f32 %v1406, %v1415
      %v1428 = vmul.f32 %v1407, %v1415
      %v1429 = vmul.f32 %v1408, %v1415
      %v1430 = vmul.f32 %v1409, %v1415
      %v1431 = vmul.f32 %v1410, %v1415
      %v1432 = vmul.f32 %v1411, %v1415
      %v1433 = vadd.f32 %v1380, %v1417
      %v1434 = vadd.f32 %v1381, %v1418
      %v1435 = vadd.f32 %v1382, %v1419
      %v1436 = vadd.f32 %v1383, %v1420
      %v1437 = vadd.f32 %v1384, %v1421
      %v1438 = vadd.f32 %v1385, %v1422
      %v1439 = vadd.f32 %v1386, %v1423
      %v1440 = vadd.f32 %v1387, %v1424
      %v1441 = vadd.f32 %v1388, %v1425
      %v1442 = vadd.f32 %v1389, %v1426
      %v1443 = vadd.f32 %v1390, %v1427
      %v1444 = vadd.f32 %v1391, %v1428
      %v1445 = vadd.f32 %v1392, %v1429
      %v1446 = vadd.f32 %v1393, %v1430
      %v1447 = vadd.f32 %v1394, %v1431
      %v1448 = vadd.f32 %v1395, %v1432
      %v1449 = vld [vmem:[%s1342 + $0x2] sm:$0xff]
      %v1450 = vld [vmem:[%s1342 + $0xa] sm:$0xff]
      %v1451 = vld [vmem:[%s1342 + $0x1a] sm:$0xff]
      %v1452 = vld [vmem:[%s1342 + $0x22] sm:$0xff]
      %v1453 = vld [vmem:[%s1342 + $0x32] sm:$0xff]
      %v1454 = vld [vmem:[%s1342 + $0x3a] sm:$0xff]
      %v1455 = vld [vmem:[%s1342 + $0x4a] sm:$0xff]
      %v1456 = vld [vmem:[%s1342 + $0x52] sm:$0xff]
      %v1457 = vld [vmem:[%s1342 + $0x62] sm:$0xff]
      %v1458 = vld [vmem:[%s1342 + $0x6a] sm:$0xff]
      %v1459 = vld [vmem:[%s1342 + $0x7a] sm:$0xff]
      %v1460 = vld [vmem:[%s1342 + $0x82] sm:$0xff]
      %v1461 = vld [vmem:[%s1342 + $0x92] sm:$0xff]
      %v1462 = vld [vmem:[%s1342 + $0x9a] sm:$0xff]
      %v1463 = vld [vmem:[%s1342 + $0xaa] sm:$0xff]
      %v1464 = vld [vmem:[%s1342 + $0xb2] sm:$0xff]
      %s1465 = scalar_lea.vmem %s1, 22
      %v1466 = vld [vmem:[%s1465] sm:$0x1]
      %v1468 = vperm.slane %v1466, 0
      %v1470 = vmul.f32 %v1449, %v1468
      %v1471 = vmul.f32 %v1450, %v1468
      %v1472 = vmul.f32 %v1451, %v1468
      %v1473 = vmul.f32 %v1452, %v1468
      %v1474 = vmul.f32 %v1453, %v1468
      %v1475 = vmul.f32 %v1454, %v1468
      %v1476 = vmul.f32 %v1455, %v1468
      %v1477 = vmul.f32 %v1456, %v1468
      %v1478 = vmul.f32 %v1457, %v1468
      %v1479 = vmul.f32 %v1458, %v1468
      %v1480 = vmul.f32 %v1459, %v1468
      %v1481 = vmul.f32 %v1460, %v1468
      %v1482 = vmul.f32 %v1461, %v1468
      %v1483 = vmul.f32 %v1462, %v1468
      %v1484 = vmul.f32 %v1463, %v1468
      %v1485 = vmul.f32 %v1464, %v1468
      %v1486 = vadd.f32 %v1433, %v1470
      %v1487 = vadd.f32 %v1434, %v1471
      %v1488 = vadd.f32 %v1435, %v1472
      %v1489 = vadd.f32 %v1436, %v1473
      %v1490 = vadd.f32 %v1437, %v1474
      %v1491 = vadd.f32 %v1438, %v1475
      %v1492 = vadd.f32 %v1439, %v1476
      %v1493 = vadd.f32 %v1440, %v1477
      %v1494 = vadd.f32 %v1441, %v1478
      %v1495 = vadd.f32 %v1442, %v1479
      %v1496 = vadd.f32 %v1443, %v1480
      %v1497 = vadd.f32 %v1444, %v1481
      %v1498 = vadd.f32 %v1445, %v1482
      %v1499 = vadd.f32 %v1446, %v1483
      %v1500 = vadd.f32 %v1447, %v1484
      %v1501 = vadd.f32 %v1448, %v1485
      %v1502 = vld [vmem:[%s1342 + $0x3] sm:$0xff]
      %v1503 = vld [vmem:[%s1342 + $0xb] sm:$0xff]
      %v1504 = vld [vmem:[%s1342 + $0x1b] sm:$0xff]
      %v1505 = vld [vmem:[%s1342 + $0x23] sm:$0xff]
      %v1506 = vld [vmem:[%s1342 + $0x33] sm:$0xff]
      %v1507 = vld [vmem:[%s1342 + $0x3b] sm:$0xff]
      %v1508 = vld [vmem:[%s1342 + $0x4b] sm:$0xff]
      %v1509 = vld [vmem:[%s1342 + $0x53] sm:$0xff]
      %v1510 = vld [vmem:[%s1342 + $0x63] sm:$0xff]
      %v1511 = vld [vmem:[%s1342 + $0x6b] sm:$0xff]
      %v1512 = vld [vmem:[%s1342 + $0x7b] sm:$0xff]
      %v1513 = vld [vmem:[%s1342 + $0x83] sm:$0xff]
      %v1514 = vld [vmem:[%s1342 + $0x93] sm:$0xff]
      %v1515 = vld [vmem:[%s1342 + $0x9b] sm:$0xff]
      %v1516 = vld [vmem:[%s1342 + $0xab] sm:$0xff]
      %v1517 = vld [vmem:[%s1342 + $0xb3] sm:$0xff]
      %s1518 = scalar_lea.vmem %s1, 23
      %v1519 = vld [vmem:[%s1518] sm:$0x1]
      %v1521 = vperm.slane %v1519, 0
      %v1523 = vmul.f32 %v1502, %v1521
      %v1524 = vmul.f32 %v1503, %v1521
      %v1525 = vmul.f32 %v1504, %v1521
      %v1526 = vmul.f32 %v1505, %v1521
      %v1527 = vmul.f32 %v1506, %v1521
      %v1528 = vmul.f32 %v1507, %v1521
      %v1529 = vmul.f32 %v1508, %v1521
      %v1530 = vmul.f32 %v1509, %v1521
      %v1531 = vmul.f32 %v1510, %v1521
      %v1532 = vmul.f32 %v1511, %v1521
      %v1533 = vmul.f32 %v1512, %v1521
      %v1534 = vmul.f32 %v1513, %v1521
      %v1535 = vmul.f32 %v1514, %v1521
      %v1536 = vmul.f32 %v1515, %v1521
      %v1537 = vmul.f32 %v1516, %v1521
      %v1538 = vmul.f32 %v1517, %v1521
      %v1539 = vadd.f32 %v1486, %v1523
      %v1540 = vadd.f32 %v1487, %v1524
      %v1541 = vadd.f32 %v1488, %v1525
      %v1542 = vadd.f32 %v1489, %v1526
      %v1543 = vadd.f32 %v1490, %v1527
      %v1544 = vadd.f32 %v1491, %v1528
      %v1545 = vadd.f32 %v1492, %v1529
      %v1546 = vadd.f32 %v1493, %v1530
      %v1547 = vadd.f32 %v1494, %v1531
      %v1548 = vadd.f32 %v1495, %v1532
      %v1549 = vadd.f32 %v1496, %v1533
      %v1550 = vadd.f32 %v1497, %v1534
      %v1551 = vadd.f32 %v1498, %v1535
      %v1552 = vadd.f32 %v1499, %v1536
      %v1553 = vadd.f32 %v1500, %v1537
      %v1554 = vadd.f32 %v1501, %v1538
      %v1555 = vld [vmem:[%s1342 + $0x4] sm:$0xff]
      %v1556 = vld [vmem:[%s1342 + $0xc] sm:$0xff]
      %v1557 = vld [vmem:[%s1342 + $0x1c] sm:$0xff]
      %v1558 = vld [vmem:[%s1342 + $0x24] sm:$0xff]
      %v1559 = vld [vmem:[%s1342 + $0x34] sm:$0xff]
      %v1560 = vld [vmem:[%s1342 + $0x3c] sm:$0xff]
      %v1561 = vld [vmem:[%s1342 + $0x4c] sm:$0xff]
      %v1562 = vld [vmem:[%s1342 + $0x54] sm:$0xff]
      %v1563 = vld [vmem:[%s1342 + $0x64] sm:$0xff]
      %v1564 = vld [vmem:[%s1342 + $0x6c] sm:$0xff]
      %v1565 = vld [vmem:[%s1342 + $0x7c] sm:$0xff]
      %v1566 = vld [vmem:[%s1342 + $0x84] sm:$0xff]
      %v1567 = vld [vmem:[%s1342 + $0x94] sm:$0xff]
      %v1568 = vld [vmem:[%s1342 + $0x9c] sm:$0xff]
      %v1569 = vld [vmem:[%s1342 + $0xac] sm:$0xff]
      %v1570 = vld [vmem:[%s1342 + $0xb4] sm:$0xff]
      %s1571 = scalar_lea.vmem %s1, 24
      %v1572 = vld [vmem:[%s1571] sm:$0x1]
      %v1574 = vperm.slane %v1572, 0
      %v1576 = vmul.f32 %v1555, %v1574
      %v1577 = vmul.f32 %v1556, %v1574
      %v1578 = vmul.f32 %v1557, %v1574
      %v1579 = vmul.f32 %v1558, %v1574
      %v1580 = vmul.f32 %v1559, %v1574
      %v1581 = vmul.f32 %v1560, %v1574
      %v1582 = vmul.f32 %v1561, %v1574
      %v1583 = vmul.f32 %v1562, %v1574
      %v1584 = vmul.f32 %v1563, %v1574
      %v1585 = vmul.f32 %v1564, %v1574
      %v1586 = vmul.f32 %v1565, %v1574
      %v1587 = vmul.f32 %v1566, %v1574
      %v1588 = vmul.f32 %v1567, %v1574
      %v1589 = vmul.f32 %v1568, %v1574
      %v1590 = vmul.f32 %v1569, %v1574
      %v1591 = vmul.f32 %v1570, %v1574
      %v1592 = vadd.f32 %v1539, %v1576
      %v1593 = vadd.f32 %v1540, %v1577
      %v1594 = vadd.f32 %v1541, %v1578
      %v1595 = vadd.f32 %v1542, %v1579
      %v1596 = vadd.f32 %v1543, %v1580
      %v1597 = vadd.f32 %v1544, %v1581
      %v1598 = vadd.f32 %v1545, %v1582
      %v1599 = vadd.f32 %v1546, %v1583
      %v1600 = vadd.f32 %v1547, %v1584
      %v1601 = vadd.f32 %v1548, %v1585
      %v1602 = vadd.f32 %v1549, %v1586
      %v1603 = vadd.f32 %v1550, %v1587
      %v1604 = vadd.f32 %v1551, %v1588
      %v1605 = vadd.f32 %v1552, %v1589
      %v1606 = vadd.f32 %v1553, %v1590
      %v1607 = vadd.f32 %v1554, %v1591
      %v1608 = vld [vmem:[%s2] sm:$0x1]
      %v1610 = vperm.slane %v1608, 0
      %v1612 = vmul.f32 %v1592, %v1610
      %v1613 = vmul.f32 %v1593, %v1610
      %v1614 = vmul.f32 %v1594, %v1610
      %v1615 = vmul.f32 %v1595, %v1610
      %v1616 = vmul.f32 %v1596, %v1610
      %v1617 = vmul.f32 %v1597, %v1610
      %v1618 = vmul.f32 %v1598, %v1610
      %v1619 = vmul.f32 %v1599, %v1610
      %v1620 = vmul.f32 %v1600, %v1610
      %v1621 = vmul.f32 %v1601, %v1610
      %v1622 = vmul.f32 %v1602, %v1610
      %v1623 = vmul.f32 %v1603, %v1610
      %v1624 = vmul.f32 %v1604, %v1610
      %v1625 = vmul.f32 %v1605, %v1610
      %v1626 = vmul.f32 %v1606, %v1610
      %v1627 = vmul.f32 %v1607, %v1610
      %v1628 = vld [vmem:[%s3] sm:$0x1]
      %v1630 = vperm.slane %v1628, 0
      %v1632 = vadd.f32 %v1612, %v1630
      %v1633 = vadd.f32 %v1613, %v1630
      %v1634 = vadd.f32 %v1614, %v1630
      %v1635 = vadd.f32 %v1615, %v1630
      %v1636 = vadd.f32 %v1616, %v1630
      %v1637 = vadd.f32 %v1617, %v1630
      %v1638 = vadd.f32 %v1618, %v1630
      %v1639 = vadd.f32 %v1619, %v1630
      %v1640 = vadd.f32 %v1620, %v1630
      %v1641 = vadd.f32 %v1621, %v1630
      %v1642 = vadd.f32 %v1622, %v1630
      %v1643 = vadd.f32 %v1623, %v1630
      %v1644 = vadd.f32 %v1624, %v1630
      %v1645 = vadd.f32 %v1625, %v1630
      %v1646 = vadd.f32 %v1626, %v1630
      %v1647 = vadd.f32 %v1627, %v1630
      %v1648 = vxor.u32 %v1632, 2147483648
      %v1649 = vxor.u32 %v1633, 2147483648
      %v1650 = vxor.u32 %v1634, 2147483648
      %v1651 = vxor.u32 %v1635, 2147483648
      %v1652 = vxor.u32 %v1636, 2147483648
      %v1653 = vxor.u32 %v1637, 2147483648
      %v1654 = vxor.u32 %v1638, 2147483648
      %v1655 = vxor.u32 %v1639, 2147483648
      %v1656 = vxor.u32 %v1640, 2147483648
      %v1657 = vxor.u32 %v1641, 2147483648
      %v1658 = vxor.u32 %v1642, 2147483648
      %v1659 = vxor.u32 %v1643, 2147483648
      %v1660 = vxor.u32 %v1644, 2147483648
      %v1661 = vxor.u32 %v1645, 2147483648
      %v1662 = vxor.u32 %v1646, 2147483648
      %v1663 = vxor.u32 %v1647, 2147483648
      %v1664 = vmul.f32 %v1648, 1.442695
      %v1665 = vpow.pop %v1664
      %v1666 = vmul.f32 %v1649, 1.442695
      %v1667 = vpow.pop %v1666
      %v1668 = vmul.f32 %v1650, 1.442695
      %v1669 = vpow.pop %v1668
      %v1670 = vmul.f32 %v1651, 1.442695
      %v1671 = vpow.pop %v1670
      %v1672 = vmul.f32 %v1652, 1.442695
      %v1673 = vpow.pop %v1672
      %v1674 = vmul.f32 %v1653, 1.442695
      %v1675 = vpow.pop %v1674
      %v1676 = vmul.f32 %v1654, 1.442695
      %v1677 = vpow.pop %v1676
      %v1678 = vmul.f32 %v1655, 1.442695
      %v1679 = vpow.pop %v1678
      %v1680 = vmul.f32 %v1656, 1.442695
      %v1681 = vpow.pop %v1680
      %v1682 = vmul.f32 %v1657, 1.442695
      %v1683 = vpow.pop %v1682
      %v1684 = vmul.f32 %v1658, 1.442695
      %v1685 = vpow.pop %v1684
      %v1686 = vmul.f32 %v1659, 1.442695
      %v1687 = vpow.pop %v1686
      %v1688 = vmul.f32 %v1660, 1.442695
      %v1689 = vpow.pop %v1688
      %v1690 = vmul.f32 %v1661, 1.442695
      %v1691 = vpow.pop %v1690
      %v1692 = vmul.f32 %v1662, 1.442695
      %v1693 = vpow.pop %v1692
      %v1694 = vmul.f32 %v1663, 1.442695
      %v1695 = vpow.pop %v1694
      %v1696 = vadd.f32 %v1665, 1.0
      %v1697 = vadd.f32 %v1667, 1.0
      %v1698 = vadd.f32 %v1669, 1.0
      %v1699 = vadd.f32 %v1671, 1.0
      %v1700 = vadd.f32 %v1673, 1.0
      %v1701 = vadd.f32 %v1675, 1.0
      %v1702 = vadd.f32 %v1677, 1.0
      %v1703 = vadd.f32 %v1679, 1.0
      %v1704 = vadd.f32 %v1681, 1.0
      %v1705 = vadd.f32 %v1683, 1.0
      %v1706 = vadd.f32 %v1685, 1.0
      %v1707 = vadd.f32 %v1687, 1.0
      %v1708 = vadd.f32 %v1689, 1.0
      %v1709 = vadd.f32 %v1691, 1.0
      %v1710 = vadd.f32 %v1693, 1.0
      %v1711 = vadd.f32 %v1695, 1.0
      %v1712 = vrcp.pop %v1696
      %v1713 = vmul.f32 %v1696, %v1712
      %v1714 = vsub.f32 1.0, %v1713
      %v1715 = vmul.f32 %v1712, %v1714
      %v1716 = vadd.f32 %v1712, %v1715
      %vm1717 = vweird.f32 %v1696
      %vm1718 = vweird.f32 %v1712
      %vm1719 = vmor %vm1717, %vm1718
      %v1720 = vsel %vm1719, %v1712, %v1716
      %v1721 = vand.u32 2147483647, %v1696
      %vm1722 = vcmp.eq.f32.partialorder %v1721, 8.507059e+37
      %v1723 = vand.u32 %v1696, 2147483648
      %v1724 = vor.u32 1.1754944e-38, %v1723
      %v1725 = vsel %vm1722, %v1724, %v1720
      %v1726 = vmul.f32 1.0, %v1725
      %v1727 = vrcp.pop %v1697
      %v1728 = vmul.f32 %v1697, %v1727
      %v1729 = vsub.f32 1.0, %v1728
      %v1730 = vmul.f32 %v1727, %v1729
      %v1731 = vadd.f32 %v1727, %v1730
      %vm1732 = vweird.f32 %v1697
      %vm1733 = vweird.f32 %v1727
      %vm1734 = vmor %vm1732, %vm1733
      %v1735 = vsel %vm1734, %v1727, %v1731
      %v1736 = vand.u32 2147483647, %v1697
      %vm1737 = vcmp.eq.f32.partialorder %v1736, 8.507059e+37
      %v1738 = vand.u32 %v1697, 2147483648
      %v1739 = vor.u32 1.1754944e-38, %v1738
      %v1740 = vsel %vm1737, %v1739, %v1735
      %v1741 = vmul.f32 1.0, %v1740
      %v1742 = vrcp.pop %v1698
      %v1743 = vmul.f32 %v1698, %v1742
      %v1744 = vsub.f32 1.0, %v1743
      %v1745 = vmul.f32 %v1742, %v1744
      %v1746 = vadd.f32 %v1742, %v1745
      %vm1747 = vweird.f32 %v1698
      %vm1748 = vweird.f32 %v1742
      %vm1749 = vmor %vm1747, %vm1748
      %v1750 = vsel %vm1749, %v1742, %v1746
      %v1751 = vand.u32 2147483647, %v1698
      %vm1752 = vcmp.eq.f32.partialorder %v1751, 8.507059e+37
      %v1753 = vand.u32 %v1698, 2147483648
      %v1754 = vor.u32 1.1754944e-38, %v1753
      %v1755 = vsel %vm1752, %v1754, %v1750
      %v1756 = vmul.f32 1.0, %v1755
      %v1757 = vrcp.pop %v1699
      %v1758 = vmul.f32 %v1699, %v1757
      %v1759 = vsub.f32 1.0, %v1758
      %v1760 = vmul.f32 %v1757, %v1759
      %v1761 = vadd.f32 %v1757, %v1760
      %vm1762 = vweird.f32 %v1699
      %vm1763 = vweird.f32 %v1757
      %vm1764 = vmor %vm1762, %vm1763
      %v1765 = vsel %vm1764, %v1757, %v1761
      %v1766 = vand.u32 2147483647, %v1699
      %vm1767 = vcmp.eq.f32.partialorder %v1766, 8.507059e+37
      %v1768 = vand.u32 %v1699, 2147483648
      %v1769 = vor.u32 1.1754944e-38, %v1768
      %v1770 = vsel %vm1767, %v1769, %v1765
      %v1771 = vmul.f32 1.0, %v1770
      %v1772 = vrcp.pop %v1700
      %v1773 = vmul.f32 %v1700, %v1772
      %v1774 = vsub.f32 1.0, %v1773
      %v1775 = vmul.f32 %v1772, %v1774
      %v1776 = vadd.f32 %v1772, %v1775
      %vm1777 = vweird.f32 %v1700
      %vm1778 = vweird.f32 %v1772
      %vm1779 = vmor %vm1777, %vm1778
      %v1780 = vsel %vm1779, %v1772, %v1776
      %v1781 = vand.u32 2147483647, %v1700
      %vm1782 = vcmp.eq.f32.partialorder %v1781, 8.507059e+37
      %v1783 = vand.u32 %v1700, 2147483648
      %v1784 = vor.u32 1.1754944e-38, %v1783
      %v1785 = vsel %vm1782, %v1784, %v1780
      %v1786 = vmul.f32 1.0, %v1785
      %v1787 = vrcp.pop %v1701
      %v1788 = vmul.f32 %v1701, %v1787
      %v1789 = vsub.f32 1.0, %v1788
      %v1790 = vmul.f32 %v1787, %v1789
      %v1791 = vadd.f32 %v1787, %v1790
      %vm1792 = vweird.f32 %v1701
      %vm1793 = vweird.f32 %v1787
      %vm1794 = vmor %vm1792, %vm1793
      %v1795 = vsel %vm1794, %v1787, %v1791
      %v1796 = vand.u32 2147483647, %v1701
      %vm1797 = vcmp.eq.f32.partialorder %v1796, 8.507059e+37
      %v1798 = vand.u32 %v1701, 2147483648
      %v1799 = vor.u32 1.1754944e-38, %v1798
      %v1800 = vsel %vm1797, %v1799, %v1795
      %v1801 = vmul.f32 1.0, %v1800
      %v1802 = vrcp.pop %v1702
      %v1803 = vmul.f32 %v1702, %v1802
      %v1804 = vsub.f32 1.0, %v1803
      %v1805 = vmul.f32 %v1802, %v1804
      %v1806 = vadd.f32 %v1802, %v1805
      %vm1807 = vweird.f32 %v1702
      %vm1808 = vweird.f32 %v1802
      %vm1809 = vmor %vm1807, %vm1808
      %v1810 = vsel %vm1809, %v1802, %v1806
      %v1811 = vand.u32 2147483647, %v1702
      %vm1812 = vcmp.eq.f32.partialorder %v1811, 8.507059e+37
      %v1813 = vand.u32 %v1702, 2147483648
      %v1814 = vor.u32 1.1754944e-38, %v1813
      %v1815 = vsel %vm1812, %v1814, %v1810
      %v1816 = vmul.f32 1.0, %v1815
      %v1817 = vrcp.pop %v1703
      %v1818 = vmul.f32 %v1703, %v1817
      %v1819 = vsub.f32 1.0, %v1818
      %v1820 = vmul.f32 %v1817, %v1819
      %v1821 = vadd.f32 %v1817, %v1820
      %vm1822 = vweird.f32 %v1703
      %vm1823 = vweird.f32 %v1817
      %vm1824 = vmor %vm1822, %vm1823
      %v1825 = vsel %vm1824, %v1817, %v1821
      %v1826 = vand.u32 2147483647, %v1703
      %vm1827 = vcmp.eq.f32.partialorder %v1826, 8.507059e+37
      %v1828 = vand.u32 %v1703, 2147483648
      %v1829 = vor.u32 1.1754944e-38, %v1828
      %v1830 = vsel %vm1827, %v1829, %v1825
      %v1831 = vmul.f32 1.0, %v1830
      %v1832 = vrcp.pop %v1704
      %v1833 = vmul.f32 %v1704, %v1832
      %v1834 = vsub.f32 1.0, %v1833
      %v1835 = vmul.f32 %v1832, %v1834
      %v1836 = vadd.f32 %v1832, %v1835
      %vm1837 = vweird.f32 %v1704
      %vm1838 = vweird.f32 %v1832
      %vm1839 = vmor %vm1837, %vm1838
      %v1840 = vsel %vm1839, %v1832, %v1836
      %v1841 = vand.u32 2147483647, %v1704
      %vm1842 = vcmp.eq.f32.partialorder %v1841, 8.507059e+37
      %v1843 = vand.u32 %v1704, 2147483648
      %v1844 = vor.u32 1.1754944e-38, %v1843
      %v1845 = vsel %vm1842, %v1844, %v1840
      %v1846 = vmul.f32 1.0, %v1845
      %v1847 = vrcp.pop %v1705
      %v1848 = vmul.f32 %v1705, %v1847
      %v1849 = vsub.f32 1.0, %v1848
      %v1850 = vmul.f32 %v1847, %v1849
      %v1851 = vadd.f32 %v1847, %v1850
      %vm1852 = vweird.f32 %v1705
      %vm1853 = vweird.f32 %v1847
      %vm1854 = vmor %vm1852, %vm1853
      %v1855 = vsel %vm1854, %v1847, %v1851
      %v1856 = vand.u32 2147483647, %v1705
      %vm1857 = vcmp.eq.f32.partialorder %v1856, 8.507059e+37
      %v1858 = vand.u32 %v1705, 2147483648
      %v1859 = vor.u32 1.1754944e-38, %v1858
      %v1860 = vsel %vm1857, %v1859, %v1855
      %v1861 = vmul.f32 1.0, %v1860
      %v1862 = vrcp.pop %v1706
      %v1863 = vmul.f32 %v1706, %v1862
      %v1864 = vsub.f32 1.0, %v1863
      %v1865 = vmul.f32 %v1862, %v1864
      %v1866 = vadd.f32 %v1862, %v1865
      %vm1867 = vweird.f32 %v1706
      %vm1868 = vweird.f32 %v1862
      %vm1869 = vmor %vm1867, %vm1868
      %v1870 = vsel %vm1869, %v1862, %v1866
      %v1871 = vand.u32 2147483647, %v1706
      %vm1872 = vcmp.eq.f32.partialorder %v1871, 8.507059e+37
      %v1873 = vand.u32 %v1706, 2147483648
      %v1874 = vor.u32 1.1754944e-38, %v1873
      %v1875 = vsel %vm1872, %v1874, %v1870
      %v1876 = vmul.f32 1.0, %v1875
      %v1877 = vrcp.pop %v1707
      %v1878 = vmul.f32 %v1707, %v1877
      %v1879 = vsub.f32 1.0, %v1878
      %v1880 = vmul.f32 %v1877, %v1879
      %v1881 = vadd.f32 %v1877, %v1880
      %vm1882 = vweird.f32 %v1707
      %vm1883 = vweird.f32 %v1877
      %vm1884 = vmor %vm1882, %vm1883
      %v1885 = vsel %vm1884, %v1877, %v1881
      %v1886 = vand.u32 2147483647, %v1707
      %vm1887 = vcmp.eq.f32.partialorder %v1886, 8.507059e+37
      %v1888 = vand.u32 %v1707, 2147483648
      %v1889 = vor.u32 1.1754944e-38, %v1888
      %v1890 = vsel %vm1887, %v1889, %v1885
      %v1891 = vmul.f32 1.0, %v1890
      %v1892 = vrcp.pop %v1708
      %v1893 = vmul.f32 %v1708, %v1892
      %v1894 = vsub.f32 1.0, %v1893
      %v1895 = vmul.f32 %v1892, %v1894
      %v1896 = vadd.f32 %v1892, %v1895
      %vm1897 = vweird.f32 %v1708
      %vm1898 = vweird.f32 %v1892
      %vm1899 = vmor %vm1897, %vm1898
      %v1900 = vsel %vm1899, %v1892, %v1896
      %v1901 = vand.u32 2147483647, %v1708
      %vm1902 = vcmp.eq.f32.partialorder %v1901, 8.507059e+37
      %v1903 = vand.u32 %v1708, 2147483648
      %v1904 = vor.u32 1.1754944e-38, %v1903
      %v1905 = vsel %vm1902, %v1904, %v1900
      %v1906 = vmul.f32 1.0, %v1905
      %v1907 = vrcp.pop %v1709
      %v1908 = vmul.f32 %v1709, %v1907
      %v1909 = vsub.f32 1.0, %v1908
      %v1910 = vmul.f32 %v1907, %v1909
      %v1911 = vadd.f32 %v1907, %v1910
      %vm1912 = vweird.f32 %v1709
      %vm1913 = vweird.f32 %v1907
      %vm1914 = vmor %vm1912, %vm1913
      %v1915 = vsel %vm1914, %v1907, %v1911
      %v1916 = vand.u32 2147483647, %v1709
      %vm1917 = vcmp.eq.f32.partialorder %v1916, 8.507059e+37
      %v1918 = vand.u32 %v1709, 2147483648
      %v1919 = vor.u32 1.1754944e-38, %v1918
      %v1920 = vsel %vm1917, %v1919, %v1915
      %v1921 = vmul.f32 1.0, %v1920
      %v1922 = vrcp.pop %v1710
      %v1923 = vmul.f32 %v1710, %v1922
      %v1924 = vsub.f32 1.0, %v1923
      %v1925 = vmul.f32 %v1922, %v1924
      %v1926 = vadd.f32 %v1922, %v1925
      %vm1927 = vweird.f32 %v1710
      %vm1928 = vweird.f32 %v1922
      %vm1929 = vmor %vm1927, %vm1928
      %v1930 = vsel %vm1929, %v1922, %v1926
      %v1931 = vand.u32 2147483647, %v1710
      %vm1932 = vcmp.eq.f32.partialorder %v1931, 8.507059e+37
      %v1933 = vand.u32 %v1710, 2147483648
      %v1934 = vor.u32 1.1754944e-38, %v1933
      %v1935 = vsel %vm1932, %v1934, %v1930
      %v1936 = vmul.f32 1.0, %v1935
      %v1937 = vrcp.pop %v1711
      %v1938 = vmul.f32 %v1711, %v1937
      %v1939 = vsub.f32 1.0, %v1938
      %v1940 = vmul.f32 %v1937, %v1939
      %v1941 = vadd.f32 %v1937, %v1940
      %vm1942 = vweird.f32 %v1711
      %vm1943 = vweird.f32 %v1937
      %vm1944 = vmor %vm1942, %vm1943
      %v1945 = vsel %vm1944, %v1937, %v1941
      %v1946 = vand.u32 2147483647, %v1711
      %vm1947 = vcmp.eq.f32.partialorder %v1946, 8.507059e+37
      %v1948 = vand.u32 %v1711, 2147483648
      %v1949 = vor.u32 1.1754944e-38, %v1948
      %v1950 = vsel %vm1947, %v1949, %v1945
      %v1951 = vmul.f32 1.0, %v1950
      %v1952 = vmul.f32 %v1632, %v1726
      %v1953 = vmul.f32 %v1633, %v1741
      %v1954 = vmul.f32 %v1634, %v1756
      %v1955 = vmul.f32 %v1635, %v1771
      %v1956 = vmul.f32 %v1636, %v1786
      %v1957 = vmul.f32 %v1637, %v1801
      %v1958 = vmul.f32 %v1638, %v1816
      %v1959 = vmul.f32 %v1639, %v1831
      %v1960 = vmul.f32 %v1640, %v1846
      %v1961 = vmul.f32 %v1641, %v1861
      %v1962 = vmul.f32 %v1642, %v1876
      %v1963 = vmul.f32 %v1643, %v1891
      %v1964 = vmul.f32 %v1644, %v1906
      %v1965 = vmul.f32 %v1645, %v1921
      %v1966 = vmul.f32 %v1646, %v1936
      %v1967 = vmul.f32 %v1647, %v1951
      %vm1968 = vcmask 130048
      %1969 = vst.msk [vmem:[%s260] sm:$0xff] %vm1968, %v1952
      %1970 = vst.msk [vmem:[%s260 + $0x8] sm:$0xff] %vm1968, %v1953
      %1971 = vst.msk [vmem:[%s260 + $0x10] sm:$0xff] %vm1968, %v1954
      %1972 = vst.msk [vmem:[%s260 + $0x18] sm:$0xff] %vm1968, %v1955
      %1973 = vst.msk [vmem:[%s260 + $0x20] sm:$0xff] %vm1968, %v1956
      %1974 = vst.msk [vmem:[%s260 + $0x28] sm:$0xff] %vm1968, %v1957
      %1975 = vst.msk [vmem:[%s260 + $0x30] sm:$0xff] %vm1968, %v1958
      %1976 = vst.msk [vmem:[%s260 + $0x38] sm:$0xff] %vm1968, %v1959
      %1977 = vst.msk [vmem:[%s260 + $0x40] sm:$0xff] %vm1968, %v1960
      %1978 = vst.msk [vmem:[%s260 + $0x48] sm:$0xff] %vm1968, %v1961
      %1979 = vst.msk [vmem:[%s260 + $0x50] sm:$0xff] %vm1968, %v1962
      %1980 = vst.msk [vmem:[%s260 + $0x58] sm:$0xff] %vm1968, %v1963
      %1981 = vst.msk [vmem:[%s260 + $0x60] sm:$0xff] %vm1968, %v1964
      %1982 = vst.msk [vmem:[%s260 + $0x68] sm:$0xff] %vm1968, %v1965
      %1983 = vst.msk [vmem:[%s260 + $0x70] sm:$0xff] %vm1968, %v1966
      %1984 = vst.msk [vmem:[%s260 + $0x78] sm:$0xff] %vm1968, %v1967
      %v1985 = vsel %vm1968, %v1952, 0.0
      %v1986 = vsel %vm1968, %v1953, 0.0
      %v1987 = vadd.f32 %v1985, %v1986
      %v1988 = vsel %vm1968, %v1954, 0.0
      %v1989 = vadd.f32 %v1987, %v1988
      %v1990 = vsel %vm1968, %v1955, 0.0
      %v1991 = vadd.f32 %v1989, %v1990
      %v1992 = vsel %vm1968, %v1956, 0.0
      %v1993 = vadd.f32 %v1991, %v1992
      %v1994 = vsel %vm1968, %v1957, 0.0
      %v1995 = vadd.f32 %v1993, %v1994
      %v1996 = vsel %vm1968, %v1958, 0.0
      %v1997 = vadd.f32 %v1995, %v1996
      %v1998 = vsel %vm1968, %v1959, 0.0
      %v1999 = vadd.f32 %v1997, %v1998
      %v2000 = vsel %vm1968, %v1960, 0.0
      %v2001 = vadd.f32 %v1999, %v2000
      %v2002 = vsel %vm1968, %v1961, 0.0
      %v2003 = vadd.f32 %v2001, %v2002
      %v2004 = vsel %vm1968, %v1962, 0.0
      %v2005 = vadd.f32 %v2003, %v2004
      %v2006 = vsel %vm1968, %v1963, 0.0
      %v2007 = vadd.f32 %v2005, %v2006
      %v2008 = vsel %vm1968, %v1964, 0.0
      %v2009 = vadd.f32 %v2007, %v2008
      %v2010 = vsel %vm1968, %v1965, 0.0
      %v2011 = vadd.f32 %v2009, %v2010
      %v2012 = vsel %vm1968, %v1966, 0.0
      %v2013 = vadd.f32 %v2011, %v2012
      %v2014 = vsel %vm1968, %v1967, 0.0
      %v2015 = vadd.f32 %v2013, %v2014
      %v2016 = vrot.slane %v2015, 4
      %v2017 = vadd.f32 %v2015, %v2016
      %v2018 = vrot.slane %v2017, 2
      %v2019 = vadd.f32 %v2017, %v2018
      %v2020 = vrot.slane %v2019, 1
      %v2021 = vadd.f32 %v2019, %v2020
      %vm2022 = vcmask 122880
      %2023 = vst.msk [vmem:[%s268] sm:$0x1] %vm2022, %v2021
      %s2024 = smul.u32 8, %s22
      %p2025 = scmp.lt.s32.totalorder %s21, 1
      %s2026 = scalar_select %p2025, %s21, 1
      %p2027 = scmp.lt.s32.totalorder %s2024, 15
      %s2028 = scalar_select %p2027, %s2024, 15
      %s2029 = smul.addr %s2028, 2
      %s2030 = smul.addr %s2026, 32
      %s2031 = sadd.s32 %s2029, %s2030
      %s2032 = smul.addr %s2031, 8
      %s2033 = scalar_lea.vmem %s4, %s2032
      %p2034 = scmp.lt.s32.totalorder %s21, 1
      %s2035 = scalar_select %p2034, %s21, 1
      %p2036 = scmp.lt.s32.totalorder %s22, 1
      %s2037 = scalar_select %p2036, %s22, 1
      %s2038 = smul.addr %s2035, 2
      %s2039 = sadd.s32 %s2037, %s2038
      %s2040 = scalar_lea.vmem %s5, %s2039
      // Predicated region
      $region37: #{_lambda_.4} parent=35 // pred_check
        %p2041 = pneg %p138
      $region38: #{_lambda_.4} parent=35 // pred_check_branch
        %2043 = sbr.rel (%p2041) target = $region40
      $region39: #{_lambda_.4} parent=35 // pred_region
        %s2044 = smul.u32 8, %s22
      $region40: #{_lambda_.4} parent=35 // pred_fallthru
        _
      // Predicated region
      $region41: #{_lambda_.4} parent=35 // pred_check
        %p2045 = pneg %p166
      $region42: #{_lambda_.4} parent=35 // pred_check_branch
        %2047 = sbr.rel (%p2045) target = $region44
      $region43: #{_lambda_.4} parent=35 // pred_region
        _
      $region44: #{_lambda_.4} parent=35 // pred_fallthru
        _
    $region36: #{_lambda_.4} parent=5 // pred_fallthru
      _
    %p2048 = scmp.le.s32.totalorder 2, %s12
    // Predicated region
    $region45: #{_lambda_.4} parent=5 // pred_check
      %p2049 = pneg %p2048
    $region46: #{_lambda_.4} parent=5 // pred_check_branch
      %2051 = sbr.rel (%p2049) target = $region48
    $region47: #{_lambda_.4} parent=5 // pred_region
      %s2052 = ssub.s32 %s12, 2
      // Predicated region
      $region49: #{_lambda_.4} parent=47 // pred_check
        %p2053 = pneg %p144
      $region50: #{_lambda_.4} parent=47 // pred_check_branch
        %2055 = sbr.rel (%p2053) target = $region52
      $region51: #{_lambda_.4} parent=47 // pred_region
        %s2056 = smul.u32 8, %s24
        %p2057 = scmp.lt.s32.totalorder %s23, 1
        %s2058 = scalar_select %p2057, %s23, 1
        %p2059 = scmp.lt.s32.totalorder %s2056, 15
        %s2060 = scalar_select %p2059, %s2056, 15
        %s2061 = smul.addr %s2060, 2
        %s2062 = smul.addr %s2058, 32
        %s2063 = sadd.s32 %s2061, %s2062
        %s2064 = smul.addr %s2063, 8
        %s2065 = scalar_lea.vmem %s4, %s2064
      $region52: #{_lambda_.4} parent=47 // pred_fallthru
        _
      // Predicated region
      $region53: #{_lambda_.4} parent=47 // pred_check
        %p2066 = pneg %p172
      $region54: #{_lambda_.4} parent=47 // pred_check_branch
        %2068 = sbr.rel (%p2066) target = $region56
      $region55: #{_lambda_.4} parent=47 // pred_region
        %p2069 = scmp.lt.s32.totalorder %s23, 1
        %s2070 = scalar_select %p2069, %s23, 1
        %p2071 = scmp.lt.s32.totalorder %s24, 1
        %s2072 = scalar_select %p2071, %s24, 1
        %s2073 = smul.addr %s2070, 2
        %s2074 = sadd.s32 %s2072, %s2073
        %s2075 = scalar_lea.vmem %s5, %s2074
      $region56: #{_lambda_.4} parent=47 // pred_fallthru
        _
    $region48: #{_lambda_.4} parent=5 // pred_fallthru
      _
  $region6: #{_lambda_.4} parent=0 // loop_footer
    %s16 = sadd.s32 1, %s12
  $region7: #{_lambda_.4} parent=0 // loop_footer_branch
    %11 = sbr.rel target = $region3
  $region8: #{_lambda_.4} parent=0 // loop_exit
    _

</llo_original>
